<compile_context>
chip_gen: v7x
topology: tpu7x:2x2x1
jax: 0.10.0
libtpu: 0.0.40
codegen_flags: <defaults>
</compile_context>

<pallas_src>
import math
from functools import partial

import numpy as np
import jax
import jax.numpy as jnp
from jax.experimental import pallas as pl
from jax.experimental.pallas import tpu as pltpu


# ----------------------------- linear kernels -----------------------------

def _linear_bias_kernel(x_ref, w_ref, b_ref, o_ref):
    acc = jnp.dot(x_ref[...], w_ref[...], preferred_element_type=jnp.float32)
    o_ref[...] = (acc + b_ref[...].astype(jnp.float32)).astype(o_ref.dtype)


def _linear_nobias_kernel(x_ref, w_ref, o_ref):
    o_ref[...] = jnp.dot(x_ref[...], w_ref[...],
                         preferred_element_type=jnp.float32).astype(o_ref.dtype)


def pallas_linear(x, w, b=None, block_rows=512):
    """x: (..., Cin), w: (Cin, Cout), b: (Cout,) or None -> (..., Cout)."""
    lead = x.shape[:-1]
    cin = x.shape[-1]
    cout = w.shape[1]
    x2 = x.reshape(-1, cin)
    r = x2.shape[0]
    br = r if r <= block_rows else block_rows
    grid = (pl.cdiv(r, br),)

    x_spec = pl.BlockSpec((br, cin), lambda i: (i, 0))
    w_spec = pl.BlockSpec((cin, cout), lambda i: (0, 0))
    o_spec = pl.BlockSpec((br, cout), lambda i: (i, 0))
    cost = pl.CostEstimate(flops=int(2 * r * cin * cout), transcendentals=0,
                           bytes_accessed=int(4 * (r * cin + cin * cout + r * cout)))
    cp = pltpu.CompilerParams(dimension_semantics=("parallel",))

    if b is None:
        out = pl.pallas_call(
            _linear_nobias_kernel,
            out_shape=jax.ShapeDtypeStruct((r, cout), x.dtype),
            grid=grid, in_specs=[x_spec, w_spec], out_specs=o_spec,
            compiler_params=cp, cost_estimate=cost,
        )(x2, w)
    else:
        b_spec = pl.BlockSpec((1, cout), lambda i: (0, 0))
        out = pl.pallas_call(
            _linear_bias_kernel,
            out_shape=jax.ShapeDtypeStruct((r, cout), x.dtype),
            grid=grid, in_specs=[x_spec, w_spec, b_spec], out_specs=o_spec,
            compiler_params=cp, cost_estimate=cost,
        )(x2, w, b.reshape(1, cout).astype(x.dtype))
    return out.reshape(*lead, cout)


# ----------------------- Performer (FastAttention) kernel -----------------------

def _performer_attention_kernel(*refs, m_valid, kernel_eps, k_proj, v_proj):
    # refs: q, k, v, proj_t, [wk, bk], [wv, bv], out
    q_ref, k_ref, v_ref, pt_ref = refs[0], refs[1], refs[2], refs[3]
    i = 4
    if k_proj:
        wk_ref, bk_ref = refs[i], refs[i + 1]; i += 2
    if v_proj:
        wv_ref, bv_ref = refs[i], refs[i + 1]; i += 2
    o_ref = refs[i]

    q = q_ref[...].reshape(q_ref.shape[-2], q_ref.shape[-1]).astype(jnp.float32)  # (Nq, D)
    k = k_ref[...].reshape(k_ref.shape[-2], k_ref.shape[-1]).astype(jnp.float32)  # (Nk, D)
    v = v_ref[...].reshape(v_ref.shape[-2], v_ref.shape[-1]).astype(jnp.float32)  # (Nk, D)
    proj_t = pt_ref[...].astype(jnp.float32)                                      # (D, Mpad)

    # optional in-kernel linear projections (mem_lin_k / mem_lin_v / self.out)
    if k_proj:
        k = jnp.dot(k, wk_ref[...].astype(jnp.float32),
                    preferred_element_type=jnp.float32) + bk_ref[...].astype(jnp.float32)
    if v_proj:
        v = jnp.dot(v, wv_ref[...].astype(jnp.float32),
                    preferred_element_type=jnp.float32) + bv_ref[...].astype(jnp.float32)

    d = q.shape[-1]
    mpad = proj_t.shape[-1]
    dn = d ** (-0.25)                 # data_normalizer
    ratio = m_valid ** (-0.5)         # uses the REAL number of random features

    col = jax.lax.broadcasted_iota(jnp.int32, (1, mpad), 1)
    valid = col < m_valid             # mask padded feature columns
    neg_inf = jnp.float32(-jnp.inf)

    # softmax_kernel for queries: per-row max over valid features
    q_dash = jnp.dot(dn * q, proj_t, preferred_element_type=jnp.float32)   # (Nq, Mpad)
    q_diag = jnp.sum(q * q, axis=-1, keepdims=True) * (0.5 * dn * dn)
    q_max = jnp.max(jnp.where(valid, q_dash, neg_inf), axis=-1, keepdims=True)
    q_prime = jnp.where(valid, ratio * (jnp.exp(q_dash - q_diag - q_max) + kernel_eps), 0.0)

    # softmax_kernel for keys: block-global max (see module-level note re eps-level diff)
    k_dash = jnp.dot(dn * k, proj_t, preferred_element_type=jnp.float32)   # (Nk, Mpad)
    k_diag = jnp.sum(k * k, axis=-1, keepdims=True) * (0.5 * dn * dn)
    k_max = jnp.max(jnp.where(valid, k_dash, neg_inf))
    k_prime = jnp.where(valid, ratio * (jnp.exp(k_dash - k_diag - k_max) + kernel_eps), 0.0)

    # linear_attention
    k_sum = jnp.sum(k_prime, axis=0, keepdims=True)                         # (1, Mpad)
    denom = jnp.sum(q_prime * k_sum, axis=-1, keepdims=True)                # (Nq, 1)
    d_inv = pl.reciprocal(denom, approx=True)
    context = jax.lax.dot_general(k_prime, v, (((0,), (0,)), ((), ())),
                                  preferred_element_type=jnp.float32)       # (Mpad, D)
    out = jnp.dot(q_prime, context, preferred_element_type=jnp.float32)     # (Nq, D)
    o_ref[...] = (out * d_inv).reshape(o_ref.shape).astype(o_ref.dtype)


def performer_attention(q, k, v, proj, *, b, h,
                        wk=None, bk=None, wv=None, bv=None, kernel_eps=1e-4):
    """FastAttention (non-causal).

    q/k/v: (b, h, n, dh) or (h, n, dh) (the latter is broadcast across batch).
    proj : (M, dh) random-feature projection.  Optional wk/bk (resp. wv/bv) apply a
    dim_head->dim_head Linear to k (resp. v) inside the kernel.
    Returns (b, h, nq, dh).
    """
    dh = q.shape[-1]
    nq = q.shape[-2]
    nk = k.shape[-2]
    m = proj.shape[0]
    mpad = ((m + 127) // 128) * 128
    proj_t = jnp.pad(proj, ((0, mpad - m), (0, 0))).T        # (dh, Mpad), lane-dense

    def spec_for(t):
        if t.ndim == 4:
            return pl.BlockSpec((1, 1, t.shape[-2], dh), lambda bi, hi: (bi, hi, 0, 0))
        return pl.BlockSpec((1, t.shape[-2], dh), lambda bi, hi: (hi, 0, 0))

    in_specs = [spec_for(q), spec_for(k), spec_for(v),
                pl.BlockSpec((dh, mpad), lambda bi, hi: (0, 0))]
    inputs = [q, k, v, proj_t]
    k_proj = wk is not None
    v_proj = wv is not None
    if k_proj:
        in_specs += [pl.BlockSpec((dh, dh), lambda bi, hi: (0, 0)),
                     pl.BlockSpec((1, dh), lambda bi, hi: (0, 0))]
        inputs += [wk, bk.reshape(1, dh)]
    if v_proj:
        in_specs += [pl.BlockSpec((dh, dh), lambda bi, hi: (0, 0)),
                     pl.BlockSpec((1, dh), lambda bi, hi: (0, 0))]
        inputs += [wv, bv.reshape(1, dh)]

    flops = int(2 * b * h * mpad * dh * (2 * nq + 2 * nk)
                + 2 * b * h * nk * dh * dh * (int(k_proj) + int(v_proj)))
    trans = int(b * h * (nq + nk) * mpad)
    bytes_acc = int(4 * (q.size + k.size + v.size + proj_t.size + b * h * nq * dh))

    return pl.pallas_call(
        partial(_performer_attention_kernel, m_valid=m, kernel_eps=kernel_eps,
                k_proj=k_proj, v_proj=v_proj),
        out_shape=jax.ShapeDtypeStruct((b, h, nq, dh), q.dtype),
        grid=(b, h),
        in_specs=in_specs,
        out_specs=pl.BlockSpec((1, 1, nq, dh), lambda bi, hi: (bi, hi, 0, 0)),
        compiler_params=pltpu.CompilerParams(
            dimension_semantics=("parallel", "parallel")),
        cost_estimate=pl.CostEstimate(flops=flops, transcendentals=trans,
                                      bytes_accessed=bytes_acc),
    )(*inputs)


# --------------- fused out_2 linear + mix + ScaleNorm kernel ---------------

def _out2_mix_scalenorm_kernel(x_ref, y_ref, w2_ref, b2_ref, z1_ref, z0_ref, g_ref, o_ref,
                               *, scale, eps):
    x = x_ref[...].astype(jnp.float32)                       # out   (R, dh)
    y = y_ref[...].astype(jnp.float32)                       # out_  (R, dh)
    y2 = jnp.dot(y, w2_ref[...].astype(jnp.float32),
                 preferred_element_type=jnp.float32) + b2_ref[...].astype(jnp.float32)
    mixed = x * z1_ref[...].astype(jnp.float32) + y2 * z0_ref[...].astype(jnp.float32)
    nrm = jnp.sqrt(jnp.sum(mixed * mixed, axis=-1, keepdims=True)) * scale
    inv = pl.reciprocal(jnp.maximum(nrm, eps), approx=True)
    o_ref[...] = (mixed * inv * g_ref[...].astype(jnp.float32)).astype(o_ref.dtype)


def out2_mix_scalenorm(out, out_, w2, b2, z1, z0, g, *, scale, eps):
    shp = out.shape
    dh = shp[-1]
    x2 = out.reshape(-1, dh)
    y2 = out_.reshape(-1, dh)
    r = x2.shape[0]
    res = pl.pallas_call(
        partial(_out2_mix_scalenorm_kernel, scale=scale, eps=eps),
        out_shape=jax.ShapeDtypeStruct((r, dh), out.dtype),
        grid=(1,),
        in_specs=[pl.BlockSpec((r, dh), lambda i: (0, 0)),
                  pl.BlockSpec((r, dh), lambda i: (0, 0)),
                  pl.BlockSpec((dh, dh), lambda i: (0, 0)),
                  pl.BlockSpec((1, dh), lambda i: (0, 0)),
                  pl.BlockSpec((1, dh), lambda i: (0, 0)),
                  pl.BlockSpec((1, dh), lambda i: (0, 0)),
                  pl.BlockSpec((1, 1), lambda i: (0, 0))],
        out_specs=pl.BlockSpec((r, dh), lambda i: (0, 0)),
        compiler_params=pltpu.CompilerParams(dimension_semantics=("arbitrary",)),
    )(x2, y2, w2, b2.reshape(1, dh), z1.reshape(1, dh), z0.reshape(1, dh),
      jnp.asarray(g, jnp.float32).reshape(1, 1))
    return res.reshape(shp)


# --------------------------- parameter initialization ---------------------------

def gaussian_orthogonal_random_matrix(key, nb_rows, nb_cols):
    """Deterministic init of the Performer random-feature projection (scaling=0)."""
    nb_full_blocks = nb_rows // nb_cols
    rem = nb_rows - nb_full_blocks * nb_cols
    n_block_keys = nb_full_blocks + (1 if rem > 0 else 0)
    keys = jax.random.split(key, n_block_keys + 1)
    blocks, idx = [], 0
    for _ in range(nb_full_blocks):
        u = np.asarray(jax.random.normal(keys[idx], (nb_cols, nb_cols))); idx += 1
        qm, _ = np.linalg.qr(u)
        blocks.append(qm.T)
    if rem > 0:
        u = np.asarray(jax.random.normal(keys[idx], (nb_cols, nb_cols))); idx += 1
        qm, _ = np.linalg.qr(u)
        blocks.append(qm.T[:rem])
    final = np.concatenate(blocks, axis=0)
    multiplier = np.linalg.norm(
        np.asarray(jax.random.normal(keys[-1], (nb_rows, nb_cols))), axis=1)
    return jnp.asarray(multiplier[:, None] * final, dtype=jnp.float32)


def init_attention_params(key, dim, heads, dim_head, num_mem_kv, nb_features=None):
    inner_dim = heads * dim_head
    nb_features = nb_features or int(dim_head * math.log(dim_head))
    ks = jax.random.split(key, 20)

    def lin_w(k, cin, cout):
        return jax.random.normal(k, (cin, cout), jnp.float32) / math.sqrt(cin)

    def lin_b(k, cout):
        return jax.random.normal(k, (cout,), jnp.float32) * 0.01

    Wq = lin_w(ks[0], dim, inner_dim)
    Wk = lin_w(ks[1], dim, inner_dim)
    Wv = lin_w(ks[2], dim, inner_dim)
    return dict(
        Wqkv=jnp.concatenate([Wq, Wk, Wv], axis=1),             # fused to_q|to_k|to_v (bias=False)
        Wo=lin_w(ks[3], inner_dim, dim), bo=lin_b(ks[4], dim),  # to_out (bias=True)
        proj_fast=gaussian_orthogonal_random_matrix(ks[5], nb_features, dim_head),
        proj_mem=gaussian_orthogonal_random_matrix(ks[6], nb_features, dim_head),
        proj_prev=gaussian_orthogonal_random_matrix(ks[7], nb_features, dim_head),
        mem_k=jax.random.normal(ks[8], (heads, num_mem_kv, dim_head), jnp.float32),
        mem_v=jax.random.normal(ks[9], (heads, num_mem_kv, dim_head), jnp.float32),
        prev_state=jnp.zeros((heads, num_mem_kv, dim_head), jnp.float32),   # buffer
        W_mem_k=lin_w(ks[10], dim_head, dim_head), b_mem_k=lin_b(ks[11], dim_head),
        W_mem_v=lin_w(ks[12], dim_head, dim_head), b_mem_v=lin_b(ks[13], dim_head),
        W_out_small=lin_w(ks[14], dim_head, dim_head), b_out_small=lin_b(ks[15], dim_head),
        W_out2=lin_w(ks[16], dim_head, dim_head), b_out2=lin_b(ks[17], dim_head),
        zero_0=jnp.ones((dim_head,), jnp.float32),
        zero_1=jnp.zeros((dim_head,), jnp.float32),
        norm_g=1.0,                                             # ScaleNorm g (init = 1)
    )


# --------------------------------- forward ---------------------------------

def attention_forward(params, x, heads, dim_head):
    """Attention.forward with defaults: no context / mask / pos_emb, local_heads=0, hop_attn=None."""
    b, n, _ = x.shape
    h, dh = heads, dim_head
    inner = h * dh

    # fused q, k, v projections (one matmul)
    qkv = pallas_linear(x, params['Wqkv'])                      # (b, n, 3*inner)
    q, k, v = jnp.split(qkv, 3, axis=-1)

    def split_heads(t):                                         # 'b n (h d) -> b h n d'
        return t.reshape(b, n, h, dh).transpose(0, 2, 1, 3)
    q4, k4, v4 = map(split_heads, (q, k, v))

    # global Performer attention (self.fast_attention)
    out = performer_attention(q4, k4, v4, params['proj_fast'], b=b, h=h)   # (b, h, n, dh)

    # memory key/value path: mem_lin_k / mem_lin_v are fused into the attention kernel.
    # (mem_k|prev_state and mem_v|prev_state are batch-independent -> pass per-head only.)
    mem_k_in = jnp.concatenate([params['mem_k'], params['prev_state']], axis=1)   # (h, nm+nps, dh)
    mem_v_in = jnp.concatenate([params['mem_v'], params['prev_state']], axis=1)
    out_ = performer_attention(out, mem_k_in, mem_v_in, params['proj_mem'], b=b, h=h,
                               wk=params['W_mem_k'], bk=params['b_mem_k'],
                               wv=params['W_mem_v'], bv=params['b_mem_v'])        # (b, h, n, dh)

    # fused: out_2 linear + (out*zero_1 + out_*zero_0) + ScaleNorm
    out = out2_mix_scalenorm(out, out_, params['W_out2'], params['b_out2'],
                             params['zero_1'], params['zero_0'], params['norm_g'],
                             scale=dh ** (-0.5), eps=1e-4)

    # prev_state buffer update (PyTorch side effect; does not feed the returned output).
    # v = self.out(out) is fused into the kernel as the in-kernel v projection.
    new_prev = performer_attention(params['prev_state'], out, out, params['proj_prev'],
                                   b=b, h=h,
                                   wv=params['W_out_small'], bv=params['b_out_small'])
    new_prev_state = jnp.sum(new_prev, axis=0)                  # (h, num_mem_kv, dh)

    # merge heads + output projection
    out = out.transpose(0, 2, 1, 3).reshape(b, n, inner)        # 'b h n d -> b n (h d)'
    out = pallas_linear(out, params['Wo'], params['bo'])        # (b, n, dim)
    # TODO(synk): nn.Dropout(0.25) is treated as identity (inference semantics); training dropout is RNG-driven.
    return out, new_prev_state


if __name__ == "__main__":
    B, N, DIM, HEADS, DIM_HEAD, NUM_MEM_KV = 2, 16, 64, 4, 16, 32
    key = jax.random.PRNGKey(0)
    k_params, k_x = jax.random.split(key)

    params = init_attention_params(k_params, DIM, HEADS, DIM_HEAD, NUM_MEM_KV)
    x = jax.random.normal(k_x, (B, N, DIM), jnp.float32)        # layout: [batch, seq, dim]

    fwd = jax.jit(partial(attention_forward, heads=HEADS, dim_head=DIM_HEAD))
    out, new_prev_state = fwd(params, x)
    out = jax.block_until_ready(out)
    new_prev_state = jax.block_until_ready(new_prev_state)

    assert out.shape == (B, N, DIM)
    assert new_prev_state.shape == (HEADS, NUM_MEM_KV, DIM_HEAD)
    assert bool(jnp.all(jnp.isfinite(out)))
    assert bool(jnp.all(jnp.isfinite(new_prev_state)))
    print("KERNEL_OK")
</pallas_src>

<mosaic_0001>
module attributes {stable_mosaic.version = 11 : i64} {
  func.func @_linear_nobias_kernel(%arg0: i32, %arg1: memref<32x64xf32, #tpu.memory_space<vmem>>, %arg2: memref<64x192xf32, #tpu.memory_space<vmem>>, %arg3: memref<32x192xf32, #tpu.memory_space<vmem>>) attributes {dimension_semantics = [#tpu.dimension_semantics<parallel>], iteration_bounds = array<i64: 1>, scalar_prefetch = 0 : i64, scratch_operands = 0 : i64, tpu.core_type = #tpu.core_type<tc>, window_params = [{transform_indices = @transform_0, window_bounds = array<i64: 32, 64>}, {pipeline_mode = #tpu.pipeline_mode<synchronous>, transform_indices = @transform_1, window_bounds = array<i64: 64, 192>}, {transform_indices = @transform_2, window_bounds = array<i64: 32, 192>}]} {
    %c0 = arith.constant 0 : index
    %c0_0 = arith.constant 0 : index
    %0 = vector.load %arg1[%c0, %c0_0] : memref<32x64xf32, #tpu.memory_space<vmem>>, vector<32x64xf32>
    %c0_1 = arith.constant 0 : index
    %c0_2 = arith.constant 0 : index
    %1 = vector.load %arg2[%c0_1, %c0_2] : memref<64x192xf32, #tpu.memory_space<vmem>>, vector<64x192xf32>
    %cst = arith.constant dense<0.000000e+00> : vector<32x192xf32>
    %2 = tpu.matmul %0, %1, %cst {dimension_numbers = #tpu.dot_dimension_numbers<[1], [0], [0], [1], [0, 0, 1, 1], [], []>} : vector<32x64xf32>, vector<64x192xf32>, vector<32x192xf32> -> vector<32x192xf32>
    %c0_3 = arith.constant 0 : index
    %c0_4 = arith.constant 0 : index
    %3 = vector.load %arg3[%c0_3, %c0_4] : memref<32x192xf32, #tpu.memory_space<vmem>>, vector<32x192xf32>
    tpu.vector_store %arg3[%c0_3, %c0_4], %2 {strides = array<i32>} : memref<32x192xf32, #tpu.memory_space<vmem>>, vector<32x192xf32>,
    return
  }
  func.func @transform_0(%arg0: i32) -> (i32, i32) {
    %c0_i32 = arith.constant 0 : i32
    %c0_i32_0 = arith.constant 0 : i32
    return %arg0, %c0_i32 : i32, i32
  }
  func.func @transform_1(%arg0: i32) -> (i32, i32) {
    %c0_i32 = arith.constant 0 : i32
    %c0_i32_0 = arith.constant 0 : i32
    %c0_i32_1 = arith.constant 0 : i32
    return %c0_i32, %c0_i32_0 : i32, i32
  }
  func.func @transform_2(%arg0: i32) -> (i32, i32) {
    %c0_i32 = arith.constant 0 : i32
    %c0_i32_0 = arith.constant 0 : i32
    return %arg0, %c0_i32 : i32, i32
  }
}

module attributes {stable_mosaic.version = 11 : i64} {
  func.func @_performer_attention_kernel(%arg0: i32, %arg1: i32, %arg2: memref<1x1x16x16xf32, #tpu.memory_space<vmem>>, %arg3: memref<1x64x16xf32, #tpu.memory_space<vmem>>, %arg4: memref<1x64x16xf32, #tpu.memory_space<vmem>>, %arg5: memref<16x128xf32, #tpu.memory_space<vmem>>, %arg6: memref<16x16xf32, #tpu.memory_space<vmem>>, %arg7: memref<1x16xf32, #tpu.memory_space<vmem>>, %arg8: memref<16x16xf32, #tpu.memory_space<vmem>>, %arg9: memref<1x16xf32, #tpu.memory_space<vmem>>, %arg10: memref<1x1x16x16xf32, #tpu.memory_space<vmem>>) attributes {dimension_semantics = [#tpu.dimension_semantics<parallel>, #tpu.dimension_semantics<parallel>], iteration_bounds = array<i64: 2, 4>, scalar_prefetch = 0 : i64, scratch_operands = 0 : i64, tpu.core_type = #tpu.core_type<tc>, window_params = [{transform_indices = @transform_0, window_bounds = array<i64: 1, 1, 16, 16>}, {transform_indices = @transform_1, window_bounds = array<i64: 1, 64, 16>}, {transform_indices = @transform_2, window_bounds = array<i64: 1, 64, 16>}, {pipeline_mode = #tpu.pipeline_mode<synchronous>, transform_indices = @transform_3, window_bounds = array<i64: 16, 128>}, {pipeline_mode = #tpu.pipeline_mode<synchronous>, transform_indices = @transform_4, window_bounds = array<i64: 16, 16>}, {pipeline_mode = #tpu.pipeline_mode<synchronous>, transform_indices = @transform_5, window_bounds = array<i64: 1, 16>}, {pipeline_mode = #tpu.pipeline_mode<synchronous>, transform_indices = @transform_6, window_bounds = array<i64: 16, 16>}, {pipeline_mode = #tpu.pipeline_mode<synchronous>, transform_indices = @transform_7, window_bounds = array<i64: 1, 16>}, {transform_indices = @transform_8, window_bounds = array<i64: 1, 1, 16, 16>}]} {
    %c0 = arith.constant 0 : index
    %c0_0 = arith.constant 0 : index
    %c0_1 = arith.constant 0 : index
    %c0_2 = arith.constant 0 : index
    %0 = vector.load %arg2[%c0, %c0_0, %c0_1, %c0_2] : memref<1x1x16x16xf32, #tpu.memory_space<vmem>>, vector<1x1x16x16xf32>
    %1 = vector.shape_cast %0 : vector<1x1x16x16xf32> to vector<16x16xf32>
    %c0_3 = arith.constant 0 : index
    %c0_4 = arith.constant 0 : index
    %c0_5 = arith.constant 0 : index
    %2 = vector.load %arg3[%c0_3, %c0_4, %c0_5] : memref<1x64x16xf32, #tpu.memory_space<vmem>>, vector<1x64x16xf32>
    %3 = vector.shape_cast %2 : vector<1x64x16xf32> to vector<64x16xf32>
    %c0_6 = arith.constant 0 : index
    %c0_7 = arith.constant 0 : index
    %c0_8 = arith.constant 0 : index
    %4 = vector.load %arg4[%c0_6, %c0_7, %c0_8] : memref<1x64x16xf32, #tpu.memory_space<vmem>>, vector<1x64x16xf32>
    %5 = vector.shape_cast %4 : vector<1x64x16xf32> to vector<64x16xf32>
    %c0_9 = arith.constant 0 : index
    %c0_10 = arith.constant 0 : index
    %6 = vector.load %arg5[%c0_9, %c0_10] : memref<16x128xf32, #tpu.memory_space<vmem>>, vector<16x128xf32>
    %c0_11 = arith.constant 0 : index
    %c0_12 = arith.constant 0 : index
    %7 = vector.load %arg6[%c0_11, %c0_12] : memref<16x16xf32, #tpu.memory_space<vmem>>, vector<16x16xf32>
    %cst = arith.constant dense<0.000000e+00> : vector<64x16xf32>
    %8 = tpu.matmul %3, %7, %cst {dimension_numbers = #tpu.dot_dimension_numbers<[1], [0], [0], [1], [0, 0, 1, 1], [], []>} : vector<64x16xf32>, vector<16x16xf32>, vector<64x16xf32> -> vector<64x16xf32>
    %c0_13 = arith.constant 0 : index
    %c0_14 = arith.constant 0 : index
    %9 = vector.load %arg7[%c0_13, %c0_14] : memref<1x16xf32, #tpu.memory_space<vmem>>, vector<1x16xf32>
    %10 = vector.broadcast %9 : vector<1x16xf32> to vector<64x16xf32>
    %11 = arith.addf %8, %10 : vector<64x16xf32>
    %c0_15 = arith.constant 0 : index
    %c0_16 = arith.constant 0 : index
    %12 = vector.load %arg8[%c0_15, %c0_16] : memref<16x16xf32, #tpu.memory_space<vmem>>, vector<16x16xf32>
    %cst_17 = arith.constant dense<0.000000e+00> : vector<64x16xf32>
    %13 = tpu.matmul %5, %12, %cst_17 {dimension_numbers = #tpu.dot_dimension_numbers<[1], [0], [0], [1], [0, 0, 1, 1], [], []>} : vector<64x16xf32>, vector<16x16xf32>, vector<64x16xf32> -> vector<64x16xf32>
    %c0_18 = arith.constant 0 : index
    %c0_19 = arith.constant 0 : index
    %14 = vector.load %arg9[%c0_18, %c0_19] : memref<1x16xf32, #tpu.memory_space<vmem>>, vector<1x16xf32>
    %15 = vector.broadcast %14 : vector<1x16xf32> to vector<64x16xf32>
    %16 = arith.addf %13, %15 : vector<64x16xf32>
    %17 = tpu.iota {dimensions = array<i32: 1>} : vector<1x128xi32>
    %c44_i32 = arith.constant 44 : i32
    %18 = vector.broadcast %c44_i32 : i32 to vector<1x128xi32>
    %19 = arith.cmpi slt, %17, %18 : vector<1x128xi32>
    %cst_20 = arith.constant 5.000000e-01 : f32
    %20 = vector.broadcast %cst_20 : f32 to vector<16x16xf32>
    %21 = arith.mulf %20, %1 : vector<16x16xf32>
    %cst_21 = arith.constant dense<0.000000e+00> : vector<16x128xf32>
    %22 = tpu.matmul %21, %6, %cst_21 {dimension_numbers = #tpu.dot_dimension_numbers<[1], [0], [0], [1], [0, 0, 1, 1], [], []>} : vector<16x16xf32>, vector<16x128xf32>, vector<16x128xf32> -> vector<16x128xf32>
    %23 = arith.mulf %1, %1 : vector<16x16xf32>
    %cst_22 = arith.constant dense<0.000000e+00> : vector<16xf32>
    %24 = vector.multi_reduction <add>, %23, %cst_22 [1] : vector<16x16xf32> to vector<16xf32>
    %25 = vector.shape_cast %24 : vector<16xf32> to vector<16x1xf32>
    %cst_23 = arith.constant 1.250000e-01 : f32
    %26 = vector.broadcast %cst_23 : f32 to vector<16x1xf32>
    %27 = arith.mulf %25, %26 : vector<16x1xf32>
    %cst_24 = arith.constant 0xFF800000 : f32
    %28 = vector.shape_cast %19 : vector<1x128xi1> to vector<1x128xi1>
    %29 = vector.broadcast %28 : vector<1x128xi1> to vector<16x128xi1>
    %30 = vector.broadcast %cst_24 : f32 to vector<16x128xf32>
    %31 = arith.select %29, %22, %30 : vector<16x128xi1>, vector<16x128xf32>
    %cst_25 = arith.constant dense<0xFF800000> : vector<16xf32>
    %32 = vector.multi_reduction <maximumf>, %31, %cst_25 [1] : vector<16x128xf32> to vector<16xf32>
    %33 = vector.shape_cast %32 : vector<16xf32> to vector<16x1xf32>
    %34 = vector.broadcast %27 : vector<16x1xf32> to vector<16x128xf32>
    %35 = arith.subf %22, %34 : vector<16x128xf32>
    %36 = vector.broadcast %33 : vector<16x1xf32> to vector<16x128xf32>
    %37 = arith.subf %35, %36 : vector<16x128xf32>
    %38 = math.exp %37 : vector<16x128xf32>
    %cst_26 = arith.constant 9.99999974E-5 : f32
    %39 = vector.broadcast %cst_26 : f32 to vector<16x128xf32>
    %40 = arith.addf %38, %39 : vector<16x128xf32>
    %cst_27 = arith.constant 0.150755674 : f32
    %41 = vector.broadcast %cst_27 : f32 to vector<16x128xf32>
    %42 = arith.mulf %41, %40 : vector<16x128xf32>
    %cst_28 = arith.constant 0.000000e+00 : f32
    %43 = vector.shape_cast %19 : vector<1x128xi1> to vector<1x128xi1>
    %44 = vector.broadcast %43 : vector<1x128xi1> to vector<16x128xi1>
    %45 = vector.broadcast %cst_28 : f32 to vector<16x128xf32>
    %46 = arith.select %44, %42, %45 : vector<16x128xi1>, vector<16x128xf32>
    %cst_29 = arith.constant 5.000000e-01 : f32
    %47 = vector.broadcast %cst_29 : f32 to vector<64x16xf32>
    %48 = arith.mulf %47, %11 : vector<64x16xf32>
    %cst_30 = arith.constant dense<0.000000e+00> : vector<64x128xf32>
    %49 = tpu.matmul %48, %6, %cst_30 {dimension_numbers = #tpu.dot_dimension_numbers<[1], [0], [0], [1], [0, 0, 1, 1], [], []>} : vector<64x16xf32>, vector<16x128xf32>, vector<64x128xf32> -> vector<64x128xf32>
    %50 = arith.mulf %11, %11 : vector<64x16xf32>
    %cst_31 = arith.constant dense<0.000000e+00> : vector<64xf32>
    %51 = vector.multi_reduction <add>, %50, %cst_31 [1] : vector<64x16xf32> to vector<64xf32>
    %52 = vector.shape_cast %51 : vector<64xf32> to vector<64x1xf32>
    %cst_32 = arith.constant 1.250000e-01 : f32
    %53 = vector.broadcast %cst_32 : f32 to vector<64x1xf32>
    %54 = arith.mulf %52, %53 : vector<64x1xf32>
    %cst_33 = arith.constant 0xFF800000 : f32
    %55 = vector.shape_cast %19 : vector<1x128xi1> to vector<1x128xi1>
    %56 = vector.broadcast %55 : vector<1x128xi1> to vector<64x128xi1>
    %57 = vector.broadcast %cst_33 : f32 to vector<64x128xf32>
    %58 = arith.select %56, %49, %57 : vector<64x128xi1>, vector<64x128xf32>
    %59 = vector.shape_cast %58 : vector<64x128xf32> to vector<1x64x128xf32>
    %cst_34 = arith.constant dense<0xFF800000> : vector<1xf32>
    %60 = vector.multi_reduction <maximumf>, %59, %cst_34 [1, 2] : vector<1x64x128xf32> to vector<1xf32>
    %61 = vector.shape_cast %60 : vector<1xf32> to vector<1x1x1xf32>
    %62 = vector.extract %61[0, 0, 0] : f32 from vector<1x1x1xf32>
    %63 = vector.broadcast %54 : vector<64x1xf32> to vector<64x128xf32>
    %64 = arith.subf %49, %63 : vector<64x128xf32>
    %65 = vector.broadcast %62 : f32 to vector<64x128xf32>
    %66 = arith.subf %64, %65 : vector<64x128xf32>
    %67 = math.exp %66 : vector<64x128xf32>
    %cst_35 = arith.constant 9.99999974E-5 : f32
    %68 = vector.broadcast %cst_35 : f32 to vector<64x128xf32>
    %69 = arith.addf %67, %68 : vector<64x128xf32>
    %cst_36 = arith.constant 0.150755674 : f32
    %70 = vector.broadcast %cst_36 : f32 to vector<64x128xf32>
    %71 = arith.mulf %70, %69 : vector<64x128xf32>
    %cst_37 = arith.constant 0.000000e+00 : f32
    %72 = vector.shape_cast %19 : vector<1x128xi1> to vector<1x128xi1>
    %73 = vector.broadcast %72 : vector<1x128xi1> to vector<64x128xi1>
    %74 = vector.broadcast %cst_37 : f32 to vector<64x128xf32>
    %75 = arith.select %73, %71, %74 : vector<64x128xi1>, vector<64x128xf32>
    %cst_38 = arith.constant dense<0.000000e+00> : vector<128xf32>
    %76 = vector.multi_reduction <add>, %75, %cst_38 [0] : vector<64x128xf32> to vector<128xf32>
    %77 = vector.shape_cast %76 : vector<128xf32> to vector<1x128xf32>
    %78 = vector.broadcast %77 : vector<1x128xf32> to vector<16x128xf32>
    %79 = arith.mulf %46, %78 : vector<16x128xf32>
    %cst_39 = arith.constant dense<0.000000e+00> : vector<16xf32>
    %80 = vector.multi_reduction <add>, %79, %cst_39 [1] : vector<16x128xf32> to vector<16xf32>
    %81 = vector.shape_cast %80 : vector<16xf32> to vector<16x1xf32>
    %82 = tpu.reciprocal %81 {approx = true} : vector<16x1xf32> -> vector<16x1xf32>
    %cst_40 = arith.constant dense<0.000000e+00> : vector<128x16xf32>
    %83 = tpu.matmul %75, %16, %cst_40 {dimension_numbers = #tpu.dot_dimension_numbers<[0], [0], [1], [1], [0, 1, 1, 1], [], []>} : vector<64x128xf32>, vector<64x16xf32>, vector<128x16xf32> -> vector<128x16xf32>
    %cst_41 = arith.constant dense<0.000000e+00> : vector<16x16xf32>
    %84 = tpu.matmul %46, %83, %cst_41 {dimension_numbers = #tpu.dot_dimension_numbers<[1], [0], [0], [1], [0, 0, 1, 1], [], []>} : vector<16x128xf32>, vector<128x16xf32>, vector<16x16xf32> -> vector<16x16xf32>
    %85 = vector.broadcast %82 : vector<16x1xf32> to vector<16x16xf32>
    %86 = arith.mulf %84, %85 : vector<16x16xf32>
    %87 = vector.shape_cast %86 : vector<16x16xf32> to vector<1x1x16x16xf32>
    %c0_42 = arith.constant 0 : index
    %c0_43 = arith.constant 0 : index
    %c0_44 = arith.constant 0 : index
    %c0_45 = arith.constant 0 : index
    %88 = vector.load %arg10[%c0_42, %c0_43, %c0_44, %c0_45] : memref<1x1x16x16xf32, #tpu.memory_space<vmem>>, vector<1x1x16x16xf32>
    tpu.vector_store %arg10[%c0_42, %c0_43, %c0_44, %c0_45], %87 {strides = array<i32>} : memref<1x1x16x16xf32, #tpu.memory_space<vmem>>, vector<1x1x16x16xf32>,
    return
  }
  func.func @transform_0(%arg0: i32, %arg1: i32) -> (i32, i32, i32, i32) {
    %c0_i32 = arith.constant 0 : i32
    %c0_i32_0 = arith.constant 0 : i32
    %c0_i32_1 = arith.constant 0 : i32
    return %arg0, %arg1, %c0_i32, %c0_i32_0 : i32, i32, i32, i32
  }
  func.func @transform_1(%arg0: i32, %arg1: i32) -> (i32, i32, i32) {
    %c0_i32 = arith.constant 0 : i32
    %c0_i32_0 = arith.constant 0 : i32
    %c0_i32_1 = arith.constant 0 : i32
    return %arg1, %c0_i32, %c0_i32_0 : i32, i32, i32
  }
  func.func @transform_2(%arg0: i32, %arg1: i32) -> (i32, i32, i32) {
    %c0_i32 = arith.constant 0 : i32
    %c0_i32_0 = arith.constant 0 : i32
    %c0_i32_1 = arith.constant 0 : i32
    return %arg1, %c0_i32, %c0_i32_0 : i32, i32, i32
  }
  func.func @transform_3(%arg0: i32, %arg1: i32) -> (i32, i32) {
    %c0_i32 = arith.constant 0 : i32
    %c0_i32_0 = arith.constant 0 : i32
    %c0_i32_1 = arith.constant 0 : i32
    return %c0_i32, %c0_i32_0 : i32, i32
  }
  func.func @transform_4(%arg0: i32, %arg1: i32) -> (i32, i32) {
    %c0_i32 = arith.constant 0 : i32
    %c0_i32_0 = arith.constant 0 : i32
    %c0_i32_1 = arith.constant 0 : i32
    return %c0_i32, %c0_i32_0 : i32, i32
  }
  func.func @transform_5(%arg0: i32, %arg1: i32) -> (i32, i32) {
    %c0_i32 = arith.constant 0 : i32
    %c0_i32_0 = arith.constant 0 : i32
    %c0_i32_1 = arith.constant 0 : i32
    return %c0_i32, %c0_i32_0 : i32, i32
  }
  func.func @transform_6(%arg0: i32, %arg1: i32) -> (i32, i32) {
    %c0_i32 = arith.constant 0 : i32
    %c0_i32_0 = arith.constant 0 : i32
    %c0_i32_1 = arith.constant 0 : i32
    return %c0_i32, %c0_i32_0 : i32, i32
  }
  func.func @transform_7(%arg0: i32, %arg1: i32) -> (i32, i32) {
    %c0_i32 = arith.constant 0 : i32
    %c0_i32_0 = arith.constant 0 : i32
    %c0_i32_1 = arith.constant 0 : i32
    return %c0_i32, %c0_i32_0 : i32, i32
  }
  func.func @transform_8(%arg0: i32, %arg1: i32) -> (i32, i32, i32, i32) {
    %c0_i32 = arith.constant 0 : i32
    %c0_i32_0 = arith.constant 0 : i32
    %c0_i32_1 = arith.constant 0 : i32
    return %arg0, %arg1, %c0_i32, %c0_i32_0 : i32, i32, i32, i32
  }
}

module attributes {stable_mosaic.version = 11 : i64} {
  func.func @_performer_attention_kernel(%arg0: i32, %arg1: i32, %arg2: memref<1x1x16x16xf32, #tpu.memory_space<vmem>>, %arg3: memref<1x1x16x16xf32, #tpu.memory_space<vmem>>, %arg4: memref<1x1x16x16xf32, #tpu.memory_space<vmem>>, %arg5: memref<16x128xf32, #tpu.memory_space<vmem>>, %arg6: memref<1x1x16x16xf32, #tpu.memory_space<vmem>>) attributes {dimension_semantics = [#tpu.dimension_semantics<parallel>, #tpu.dimension_semantics<parallel>], iteration_bounds = array<i64: 2, 4>, scalar_prefetch = 0 : i64, scratch_operands = 0 : i64, tpu.core_type = #tpu.core_type<tc>, window_params = [{transform_indices = @transform_0, window_bounds = array<i64: 1, 1, 16, 16>}, {transform_indices = @transform_1, window_bounds = array<i64: 1, 1, 16, 16>}, {transform_indices = @transform_2, window_bounds = array<i64: 1, 1, 16, 16>}, {pipeline_mode = #tpu.pipeline_mode<synchronous>, transform_indices = @transform_3, window_bounds = array<i64: 16, 128>}, {transform_indices = @transform_4, window_bounds = array<i64: 1, 1, 16, 16>}]} {
    %c0 = arith.constant 0 : index
    %c0_0 = arith.constant 0 : index
    %c0_1 = arith.constant 0 : index
    %c0_2 = arith.constant 0 : index
    %0 = vector.load %arg2[%c0, %c0_0, %c0_1, %c0_2] : memref<1x1x16x16xf32, #tpu.memory_space<vmem>>, vector<1x1x16x16xf32>
    %1 = vector.shape_cast %0 : vector<1x1x16x16xf32> to vector<16x16xf32>
    %c0_3 = arith.constant 0 : index
    %c0_4 = arith.constant 0 : index
    %c0_5 = arith.constant 0 : index
    %c0_6 = arith.constant 0 : index
    %2 = vector.load %arg3[%c0_3, %c0_4, %c0_5, %c0_6] : memref<1x1x16x16xf32, #tpu.memory_space<vmem>>, vector<1x1x16x16xf32>
    %3 = vector.shape_cast %2 : vector<1x1x16x16xf32> to vector<16x16xf32>
    %c0_7 = arith.constant 0 : index
    %c0_8 = arith.constant 0 : index
    %c0_9 = arith.constant 0 : index
    %c0_10 = arith.constant 0 : index
    %4 = vector.load %arg4[%c0_7, %c0_8, %c0_9, %c0_10] : memref<1x1x16x16xf32, #tpu.memory_space<vmem>>, vector<1x1x16x16xf32>
    %5 = vector.shape_cast %4 : vector<1x1x16x16xf32> to vector<16x16xf32>
    %c0_11 = arith.constant 0 : index
    %c0_12 = arith.constant 0 : index
    %6 = vector.load %arg5[%c0_11, %c0_12] : memref<16x128xf32, #tpu.memory_space<vmem>>, vector<16x128xf32>
    %7 = tpu.iota {dimensions = array<i32: 1>} : vector<1x128xi32>
    %c44_i32 = arith.constant 44 : i32
    %8 = vector.broadcast %c44_i32 : i32 to vector<1x128xi32>
    %9 = arith.cmpi slt, %7, %8 : vector<1x128xi32>
    %cst = arith.constant 5.000000e-01 : f32
    %10 = vector.broadcast %cst : f32 to vector<16x16xf32>
    %11 = arith.mulf %10, %1 : vector<16x16xf32>
    %cst_13 = arith.constant dense<0.000000e+00> : vector<16x128xf32>
    %12 = tpu.matmul %11, %6, %cst_13 {dimension_numbers = #tpu.dot_dimension_numbers<[1], [0], [0], [1], [0, 0, 1, 1], [], []>} : vector<16x16xf32>, vector<16x128xf32>, vector<16x128xf32> -> vector<16x128xf32>
    %13 = arith.mulf %1, %1 : vector<16x16xf32>
    %cst_14 = arith.constant dense<0.000000e+00> : vector<16xf32>
    %14 = vector.multi_reduction <add>, %13, %cst_14 [1] : vector<16x16xf32> to vector<16xf32>
    %15 = vector.shape_cast %14 : vector<16xf32> to vector<16x1xf32>
    %cst_15 = arith.constant 1.250000e-01 : f32
    %16 = vector.broadcast %cst_15 : f32 to vector<16x1xf32>
    %17 = arith.mulf %15, %16 : vector<16x1xf32>
    %cst_16 = arith.constant 0xFF800000 : f32
    %18 = vector.shape_cast %9 : vector<1x128xi1> to vector<1x128xi1>
    %19 = vector.broadcast %18 : vector<1x128xi1> to vector<16x128xi1>
    %20 = vector.broadcast %cst_16 : f32 to vector<16x128xf32>
    %21 = arith.select %19, %12, %20 : vector<16x128xi1>, vector<16x128xf32>
    %cst_17 = arith.constant dense<0xFF800000> : vector<16xf32>
    %22 = vector.multi_reduction <maximumf>, %21, %cst_17 [1] : vector<16x128xf32> to vector<16xf32>
    %23 = vector.shape_cast %22 : vector<16xf32> to vector<16x1xf32>
    %24 = vector.broadcast %17 : vector<16x1xf32> to vector<16x128xf32>
    %25 = arith.subf %12, %24 : vector<16x128xf32>
    %26 = vector.broadcast %23 : vector<16x1xf32> to vector<16x128xf32>
    %27 = arith.subf %25, %26 : vector<16x128xf32>
    %28 = math.exp %27 : vector<16x128xf32>
    %cst_18 = arith.constant 9.99999974E-5 : f32
    %29 = vector.broadcast %cst_18 : f32 to vector<16x128xf32>
    %30 = arith.addf %28, %29 : vector<16x128xf32>
    %cst_19 = arith.constant 0.150755674 : f32
    %31 = vector.broadcast %cst_19 : f32 to vector<16x128xf32>
    %32 = arith.mulf %31, %30 : vector<16x128xf32>
    %cst_20 = arith.constant 0.000000e+00 : f32
    %33 = vector.shape_cast %9 : vector<1x128xi1> to vector<1x128xi1>
    %34 = vector.broadcast %33 : vector<1x128xi1> to vector<16x128xi1>
    %35 = vector.broadcast %cst_20 : f32 to vector<16x128xf32>
    %36 = arith.select %34, %32, %35 : vector<16x128xi1>, vector<16x128xf32>
    %cst_21 = arith.constant 5.000000e-01 : f32
    %37 = vector.broadcast %cst_21 : f32 to vector<16x16xf32>
    %38 = arith.mulf %37, %3 : vector<16x16xf32>
    %cst_22 = arith.constant dense<0.000000e+00> : vector<16x128xf32>
    %39 = tpu.matmul %38, %6, %cst_22 {dimension_numbers = #tpu.dot_dimension_numbers<[1], [0], [0], [1], [0, 0, 1, 1], [], []>} : vector<16x16xf32>, vector<16x128xf32>, vector<16x128xf32> -> vector<16x128xf32>
    %40 = arith.mulf %3, %3 : vector<16x16xf32>
    %cst_23 = arith.constant dense<0.000000e+00> : vector<16xf32>
    %41 = vector.multi_reduction <add>, %40, %cst_23 [1] : vector<16x16xf32> to vector<16xf32>
    %42 = vector.shape_cast %41 : vector<16xf32> to vector<16x1xf32>
    %cst_24 = arith.constant 1.250000e-01 : f32
    %43 = vector.broadcast %cst_24 : f32 to vector<16x1xf32>
    %44 = arith.mulf %42, %43 : vector<16x1xf32>
    %cst_25 = arith.constant 0xFF800000 : f32
    %45 = vector.shape_cast %9 : vector<1x128xi1> to vector<1x128xi1>
    %46 = vector.broadcast %45 : vector<1x128xi1> to vector<16x128xi1>
    %47 = vector.broadcast %cst_25 : f32 to vector<16x128xf32>
    %48 = arith.select %46, %39, %47 : vector<16x128xi1>, vector<16x128xf32>
    %49 = vector.shape_cast %48 : vector<16x128xf32> to vector<1x16x128xf32>
    %cst_26 = arith.constant dense<0xFF800000> : vector<1xf32>
    %50 = vector.multi_reduction <maximumf>, %49, %cst_26 [1, 2] : vector<1x16x128xf32> to vector<1xf32>
    %51 = vector.shape_cast %50 : vector<1xf32> to vector<1x1x1xf32>
    %52 = vector.extract %51[0, 0, 0] : f32 from vector<1x1x1xf32>
    %53 = vector.broadcast %44 : vector<16x1xf32> to vector<16x128xf32>
    %54 = arith.subf %39, %53 : vector<16x128xf32>
    %55 = vector.broadcast %52 : f32 to vector<16x128xf32>
    %56 = arith.subf %54, %55 : vector<16x128xf32>
    %57 = math.exp %56 : vector<16x128xf32>
    %cst_27 = arith.constant 9.99999974E-5 : f32
    %58 = vector.broadcast %cst_27 : f32 to vector<16x128xf32>
    %59 = arith.addf %57, %58 : vector<16x128xf32>
    %cst_28 = arith.constant 0.150755674 : f32
    %60 = vector.broadcast %cst_28 : f32 to vector<16x128xf32>
    %61 = arith.mulf %60, %59 : vector<16x128xf32>
    %cst_29 = arith.constant 0.000000e+00 : f32
    %62 = vector.shape_cast %9 : vector<1x128xi1> to vector<1x128xi1>
    %63 = vector.broadcast %62 : vector<1x128xi1> to vector<16x128xi1>
    %64 = vector.broadcast %cst_29 : f32 to vector<16x128xf32>
    %65 = arith.select %63, %61, %64 : vector<16x128xi1>, vector<16x128xf32>
    %cst_30 = arith.constant dense<0.000000e+00> : vector<128xf32>
    %66 = vector.multi_reduction <add>, %65, %cst_30 [0] : vector<16x128xf32> to vector<128xf32>
    %67 = vector.shape_cast %66 : vector<128xf32> to vector<1x128xf32>
    %68 = vector.broadcast %67 : vector<1x128xf32> to vector<16x128xf32>
    %69 = arith.mulf %36, %68 : vector<16x128xf32>
    %cst_31 = arith.constant dense<0.000000e+00> : vector<16xf32>
    %70 = vector.multi_reduction <add>, %69, %cst_31 [1] : vector<16x128xf32> to vector<16xf32>
    %71 = vector.shape_cast %70 : vector<16xf32> to vector<16x1xf32>
    %72 = tpu.reciprocal %71 {approx = true} : vector<16x1xf32> -> vector<16x1xf32>
    %cst_32 = arith.constant dense<0.000000e+00> : vector<128x16xf32>
    %73 = tpu.matmul %65, %5, %cst_32 {dimension_numbers = #tpu.dot_dimension_numbers<[0], [0], [1], [1], [0, 1, 1, 1], [], []>} : vector<16x128xf32>, vector<16x16xf32>, vector<128x16xf32> -> vector<128x16xf32>
    %cst_33 = arith.constant dense<0.000000e+00> : vector<16x16xf32>
    %74 = tpu.matmul %36, %73, %cst_33 {dimension_numbers = #tpu.dot_dimension_numbers<[1], [0], [0], [1], [0, 0, 1, 1], [], []>} : vector<16x128xf32>, vector<128x16xf32>, vector<16x16xf32> -> vector<16x16xf32>
    %75 = vector.broadcast %72 : vector<16x1xf32> to vector<16x16xf32>
    %76 = arith.mulf %74, %75 : vector<16x16xf32>
    %77 = vector.shape_cast %76 : vector<16x16xf32> to vector<1x1x16x16xf32>
    %c0_34 = arith.constant 0 : index
    %c0_35 = arith.constant 0 : index
    %c0_36 = arith.constant 0 : index
    %c0_37 = arith.constant 0 : index
    %78 = vector.load %arg6[%c0_34, %c0_35, %c0_36, %c0_37] : memref<1x1x16x16xf32, #tpu.memory_space<vmem>>, vector<1x1x16x16xf32>
    tpu.vector_store %arg6[%c0_34, %c0_35, %c0_36, %c0_37], %77 {strides = array<i32>} : memref<1x1x16x16xf32, #tpu.memory_space<vmem>>, vector<1x1x16x16xf32>,
    return
  }
  func.func @transform_0(%arg0: i32, %arg1: i32) -> (i32, i32, i32, i32) {
    %c0_i32 = arith.constant 0 : i32
    %c0_i32_0 = arith.constant 0 : i32
    %c0_i32_1 = arith.constant 0 : i32
    return %arg0, %arg1, %c0_i32, %c0_i32_0 : i32, i32, i32, i32
  }
  func.func @transform_1(%arg0: i32, %arg1: i32) -> (i32, i32, i32, i32) {
    %c0_i32 = arith.constant 0 : i32
    %c0_i32_0 = arith.constant 0 : i32
    %c0_i32_1 = arith.constant 0 : i32
    return %arg0, %arg1, %c0_i32, %c0_i32_0 : i32, i32, i32, i32
  }
  func.func @transform_2(%arg0: i32, %arg1: i32) -> (i32, i32, i32, i32) {
    %c0_i32 = arith.constant 0 : i32
    %c0_i32_0 = arith.constant 0 : i32
    %c0_i32_1 = arith.constant 0 : i32
    return %arg0, %arg1, %c0_i32, %c0_i32_0 : i32, i32, i32, i32
  }
  func.func @transform_3(%arg0: i32, %arg1: i32) -> (i32, i32) {
    %c0_i32 = arith.constant 0 : i32
    %c0_i32_0 = arith.constant 0 : i32
    %c0_i32_1 = arith.constant 0 : i32
    return %c0_i32, %c0_i32_0 : i32, i32
  }
  func.func @transform_4(%arg0: i32, %arg1: i32) -> (i32, i32, i32, i32) {
    %c0_i32 = arith.constant 0 : i32
    %c0_i32_0 = arith.constant 0 : i32
    %c0_i32_1 = arith.constant 0 : i32
    return %arg0, %arg1, %c0_i32, %c0_i32_0 : i32, i32, i32, i32
  }
}

module attributes {stable_mosaic.version = 11 : i64} {
  func.func @_out2_mix_scalenorm_kernel(%arg0: i32, %arg1: memref<128x16xf32, #tpu.memory_space<vmem>>, %arg2: memref<128x16xf32, #tpu.memory_space<vmem>>, %arg3: memref<16x16xf32, #tpu.memory_space<vmem>>, %arg4: memref<1x16xf32, #tpu.memory_space<vmem>>, %arg5: memref<1x16xf32, #tpu.memory_space<vmem>>, %arg6: memref<1x16xf32, #tpu.memory_space<vmem>>, %arg7: memref<1x1xf32, #tpu.memory_space<vmem>>, %arg8: memref<128x16xf32, #tpu.memory_space<vmem>>) attributes {dimension_semantics = [#tpu.dimension_semantics<arbitrary>], iteration_bounds = array<i64: 1>, scalar_prefetch = 0 : i64, scratch_operands = 0 : i64, tpu.core_type = #tpu.core_type<tc>, window_params = [{pipeline_mode = #tpu.pipeline_mode<synchronous>, transform_indices = @transform_0, window_bounds = array<i64: 128, 16>}, {pipeline_mode = #tpu.pipeline_mode<synchronous>, transform_indices = @transform_1, window_bounds = array<i64: 128, 16>}, {pipeline_mode = #tpu.pipeline_mode<synchronous>, transform_indices = @transform_2, window_bounds = array<i64: 16, 16>}, {pipeline_mode = #tpu.pipeline_mode<synchronous>, transform_indices = @transform_3, window_bounds = array<i64: 1, 16>}, {pipeline_mode = #tpu.pipeline_mode<synchronous>, transform_indices = @transform_4, window_bounds = array<i64: 1, 16>}, {pipeline_mode = #tpu.pipeline_mode<synchronous>, transform_indices = @transform_5, window_bounds = array<i64: 1, 16>}, {pipeline_mode = #tpu.pipeline_mode<synchronous>, transform_indices = @transform_6, window_bounds = array<i64: 1, 1>}, {pipeline_mode = #tpu.pipeline_mode<synchronous>, transform_indices = @transform_7, window_bounds = array<i64: 128, 16>}]} {
    %c0 = arith.constant 0 : index
    %c0_0 = arith.constant 0 : index
    %0 = vector.load %arg1[%c0, %c0_0] : memref<128x16xf32, #tpu.memory_space<vmem>>, vector<128x16xf32>
    %c0_1 = arith.constant 0 : index
    %c0_2 = arith.constant 0 : index
    %1 = vector.load %arg2[%c0_1, %c0_2] : memref<128x16xf32, #tpu.memory_space<vmem>>, vector<128x16xf32>
    %c0_3 = arith.constant 0 : index
    %c0_4 = arith.constant 0 : index
    %2 = vector.load %arg3[%c0_3, %c0_4] : memref<16x16xf32, #tpu.memory_space<vmem>>, vector<16x16xf32>
    %cst = arith.constant dense<0.000000e+00> : vector<128x16xf32>
    %3 = tpu.matmul %1, %2, %cst {dimension_numbers = #tpu.dot_dimension_numbers<[1], [0], [0], [1], [0, 0, 1, 1], [], []>} : vector<128x16xf32>, vector<16x16xf32>, vector<128x16xf32> -> vector<128x16xf32>
    %c0_5 = arith.constant 0 : index
    %c0_6 = arith.constant 0 : index
    %4 = vector.load %arg4[%c0_5, %c0_6] : memref<1x16xf32, #tpu.memory_space<vmem>>, vector<1x16xf32>
    %5 = vector.broadcast %4 : vector<1x16xf32> to vector<128x16xf32>
    %6 = arith.addf %3, %5 : vector<128x16xf32>
    %c0_7 = arith.constant 0 : index
    %c0_8 = arith.constant 0 : index
    %7 = vector.load %arg5[%c0_7, %c0_8] : memref<1x16xf32, #tpu.memory_space<vmem>>, vector<1x16xf32>
    %8 = vector.broadcast %7 : vector<1x16xf32> to vector<128x16xf32>
    %9 = arith.mulf %0, %8 : vector<128x16xf32>
    %c0_9 = arith.constant 0 : index
    %c0_10 = arith.constant 0 : index
    %10 = vector.load %arg6[%c0_9, %c0_10] : memref<1x16xf32, #tpu.memory_space<vmem>>, vector<1x16xf32>
    %11 = vector.broadcast %10 : vector<1x16xf32> to vector<128x16xf32>
    %12 = arith.mulf %6, %11 : vector<128x16xf32>
    %13 = arith.addf %9, %12 : vector<128x16xf32>
    %14 = arith.mulf %13, %13 : vector<128x16xf32>
    %cst_11 = arith.constant dense<0.000000e+00> : vector<128xf32>
    %15 = vector.multi_reduction <add>, %14, %cst_11 [1] : vector<128x16xf32> to vector<128xf32>
    %16 = vector.shape_cast %15 : vector<128xf32> to vector<128x1xf32>
    %17 = math.sqrt %16 : vector<128x1xf32>
    %cst_12 = arith.constant 2.500000e-01 : f32
    %18 = vector.broadcast %cst_12 : f32 to vector<128x1xf32>
    %19 = arith.mulf %17, %18 : vector<128x1xf32>
    %cst_13 = arith.constant 9.99999974E-5 : f32
    %20 = vector.broadcast %cst_13 : f32 to vector<128x1xf32>
    %21 = arith.maximumf %19, %20 : vector<128x1xf32>
    %22 = tpu.reciprocal %21 {approx = true} : vector<128x1xf32> -> vector<128x1xf32>
    %23 = vector.broadcast %22 : vector<128x1xf32> to vector<128x16xf32>
    %24 = arith.mulf %13, %23 : vector<128x16xf32>
    %c0_14 = arith.constant 0 : index
    %c0_15 = arith.constant 0 : index
    %25 = vector.load %arg7[%c0_14, %c0_15] : memref<1x1xf32, #tpu.memory_space<vmem>>, vector<1x1xf32>
    %26 = vector.broadcast %25 : vector<1x1xf32> to vector<128x16xf32>
    %27 = arith.mulf %24, %26 : vector<128x16xf32>
    %c0_16 = arith.constant 0 : index
    %c0_17 = arith.constant 0 : index
    %28 = vector.load %arg8[%c0_16, %c0_17] : memref<128x16xf32, #tpu.memory_space<vmem>>, vector<128x16xf32>
    tpu.vector_store %arg8[%c0_16, %c0_17], %27 {strides = array<i32>} : memref<128x16xf32, #tpu.memory_space<vmem>>, vector<128x16xf32>,
    return
  }
  func.func @transform_0(%arg0: i32) -> (i32, i32) {
    %c0_i32 = arith.constant 0 : i32
    %c0_i32_0 = arith.constant 0 : i32
    %c0_i32_1 = arith.constant 0 : i32
    return %c0_i32, %c0_i32_0 : i32, i32
  }
  func.func @transform_1(%arg0: i32) -> (i32, i32) {
    %c0_i32 = arith.constant 0 : i32
    %c0_i32_0 = arith.constant 0 : i32
    %c0_i32_1 = arith.constant 0 : i32
    return %c0_i32, %c0_i32_0 : i32, i32
  }
  func.func @transform_2(%arg0: i32) -> (i32, i32) {
    %c0_i32 = arith.constant 0 : i32
    %c0_i32_0 = arith.constant 0 : i32
    %c0_i32_1 = arith.constant 0 : i32
    return %c0_i32, %c0_i32_0 : i32, i32
  }
  func.func @transform_3(%arg0: i32) -> (i32, i32) {
    %c0_i32 = arith.constant 0 : i32
    %c0_i32_0 = arith.constant 0 : i32
    %c0_i32_1 = arith.constant 0 : i32
    return %c0_i32, %c0_i32_0 : i32, i32
  }
  func.func @transform_4(%arg0: i32) -> (i32, i32) {
    %c0_i32 = arith.constant 0 : i32
    %c0_i32_0 = arith.constant 0 : i32
    %c0_i32_1 = arith.constant 0 : i32
    return %c0_i32, %c0_i32_0 : i32, i32
  }
  func.func @transform_5(%arg0: i32) -> (i32, i32) {
    %c0_i32 = arith.constant 0 : i32
    %c0_i32_0 = arith.constant 0 : i32
    %c0_i32_1 = arith.constant 0 : i32
    return %c0_i32, %c0_i32_0 : i32, i32
  }
  func.func @transform_6(%arg0: i32) -> (i32, i32) {
    %c0_i32 = arith.constant 0 : i32
    %c0_i32_0 = arith.constant 0 : i32
    %c0_i32_1 = arith.constant 0 : i32
    return %c0_i32, %c0_i32_0 : i32, i32
  }
  func.func @transform_7(%arg0: i32) -> (i32, i32) {
    %c0_i32 = arith.constant 0 : i32
    %c0_i32_0 = arith.constant 0 : i32
    %c0_i32_1 = arith.constant 0 : i32
    return %c0_i32, %c0_i32_0 : i32, i32
  }
}

module attributes {stable_mosaic.version = 11 : i64} {
  func.func @_performer_attention_kernel(%arg0: i32, %arg1: i32, %arg2: memref<1x32x16xf32, #tpu.memory_space<vmem>>, %arg3: memref<1x1x16x16xf32, #tpu.memory_space<vmem>>, %arg4: memref<1x1x16x16xf32, #tpu.memory_space<vmem>>, %arg5: memref<16x128xf32, #tpu.memory_space<vmem>>, %arg6: memref<16x16xf32, #tpu.memory_space<vmem>>, %arg7: memref<1x16xf32, #tpu.memory_space<vmem>>, %arg8: memref<1x1x32x16xf32, #tpu.memory_space<vmem>>) attributes {dimension_semantics = [#tpu.dimension_semantics<parallel>, #tpu.dimension_semantics<parallel>], iteration_bounds = array<i64: 2, 4>, scalar_prefetch = 0 : i64, scratch_operands = 0 : i64, tpu.core_type = #tpu.core_type<tc>, window_params = [{transform_indices = @transform_0, window_bounds = array<i64: 1, 32, 16>}, {transform_indices = @transform_1, window_bounds = array<i64: 1, 1, 16, 16>}, {transform_indices = @transform_2, window_bounds = array<i64: 1, 1, 16, 16>}, {pipeline_mode = #tpu.pipeline_mode<synchronous>, transform_indices = @transform_3, window_bounds = array<i64: 16, 128>}, {pipeline_mode = #tpu.pipeline_mode<synchronous>, transform_indices = @transform_4, window_bounds = array<i64: 16, 16>}, {pipeline_mode = #tpu.pipeline_mode<synchronous>, transform_indices = @transform_5, window_bounds = array<i64: 1, 16>}, {transform_indices = @transform_6, window_bounds = array<i64: 1, 1, 32, 16>}]} {
    %c0 = arith.constant 0 : index
    %c0_0 = arith.constant 0 : index
    %c0_1 = arith.constant 0 : index
    %0 = vector.load %arg2[%c0, %c0_0, %c0_1] : memref<1x32x16xf32, #tpu.memory_space<vmem>>, vector<1x32x16xf32>
    %1 = vector.shape_cast %0 : vector<1x32x16xf32> to vector<32x16xf32>
    %c0_2 = arith.constant 0 : index
    %c0_3 = arith.constant 0 : index
    %c0_4 = arith.constant 0 : index
    %c0_5 = arith.constant 0 : index
    %2 = vector.load %arg3[%c0_2, %c0_3, %c0_4, %c0_5] : memref<1x1x16x16xf32, #tpu.memory_space<vmem>>, vector<1x1x16x16xf32>
    %3 = vector.shape_cast %2 : vector<1x1x16x16xf32> to vector<16x16xf32>
    %c0_6 = arith.constant 0 : index
    %c0_7 = arith.constant 0 : index
    %c0_8 = arith.constant 0 : index
    %c0_9 = arith.constant 0 : index
    %4 = vector.load %arg4[%c0_6, %c0_7, %c0_8, %c0_9] : memref<1x1x16x16xf32, #tpu.memory_space<vmem>>, vector<1x1x16x16xf32>
    %5 = vector.shape_cast %4 : vector<1x1x16x16xf32> to vector<16x16xf32>
    %c0_10 = arith.constant 0 : index
    %c0_11 = arith.constant 0 : index
    %6 = vector.load %arg5[%c0_10, %c0_11] : memref<16x128xf32, #tpu.memory_space<vmem>>, vector<16x128xf32>
    %c0_12 = arith.constant 0 : index
    %c0_13 = arith.constant 0 : index
    %7 = vector.load %arg6[%c0_12, %c0_13] : memref<16x16xf32, #tpu.memory_space<vmem>>, vector<16x16xf32>
    %cst = arith.constant dense<0.000000e+00> : vector<16x16xf32>
    %8 = tpu.matmul %5, %7, %cst {dimension_numbers = #tpu.dot_dimension_numbers<[1], [0], [0], [1], [0, 0, 1, 1], [], []>} : vector<16x16xf32>, vector<16x16xf32>, vector<16x16xf32> -> vector<16x16xf32>
    %c0_14 = arith.constant 0 : index
    %c0_15 = arith.constant 0 : index
    %9 = vector.load %arg7[%c0_14, %c0_15] : memref<1x16xf32, #tpu.memory_space<vmem>>, vector<1x16xf32>
    %10 = vector.broadcast %9 : vector<1x16xf32> to vector<16x16xf32>
    %11 = arith.addf %8, %10 : vector<16x16xf32>
    %12 = tpu.iota {dimensions = array<i32: 1>} : vector<1x128xi32>
    %c44_i32 = arith.constant 44 : i32
    %13 = vector.broadcast %c44_i32 : i32 to vector<1x128xi32>
    %14 = arith.cmpi slt, %12, %13 : vector<1x128xi32>
    %cst_16 = arith.constant 5.000000e-01 : f32
    %15 = vector.broadcast %cst_16 : f32 to vector<32x16xf32>
    %16 = arith.mulf %15, %1 : vector<32x16xf32>
    %cst_17 = arith.constant dense<0.000000e+00> : vector<32x128xf32>
    %17 = tpu.matmul %16, %6, %cst_17 {dimension_numbers = #tpu.dot_dimension_numbers<[1], [0], [0], [1], [0, 0, 1, 1], [], []>} : vector<32x16xf32>, vector<16x128xf32>, vector<32x128xf32> -> vector<32x128xf32>
    %18 = arith.mulf %1, %1 : vector<32x16xf32>
    %cst_18 = arith.constant dense<0.000000e+00> : vector<32xf32>
    %19 = vector.multi_reduction <add>, %18, %cst_18 [1] : vector<32x16xf32> to vector<32xf32>
    %20 = vector.shape_cast %19 : vector<32xf32> to vector<32x1xf32>
    %cst_19 = arith.constant 1.250000e-01 : f32
    %21 = vector.broadcast %cst_19 : f32 to vector<32x1xf32>
    %22 = arith.mulf %20, %21 : vector<32x1xf32>
    %cst_20 = arith.constant 0xFF800000 : f32
    %23 = vector.shape_cast %14 : vector<1x128xi1> to vector<1x128xi1>
    %24 = vector.broadcast %23 : vector<1x128xi1> to vector<32x128xi1>
    %25 = vector.broadcast %cst_20 : f32 to vector<32x128xf32>
    %26 = arith.select %24, %17, %25 : vector<32x128xi1>, vector<32x128xf32>
    %cst_21 = arith.constant dense<0xFF800000> : vector<32xf32>
    %27 = vector.multi_reduction <maximumf>, %26, %cst_21 [1] : vector<32x128xf32> to vector<32xf32>
    %28 = vector.shape_cast %27 : vector<32xf32> to vector<32x1xf32>
    %29 = vector.broadcast %22 : vector<32x1xf32> to vector<32x128xf32>
    %30 = arith.subf %17, %29 : vector<32x128xf32>
    %31 = vector.broadcast %28 : vector<32x1xf32> to vector<32x128xf32>
    %32 = arith.subf %30, %31 : vector<32x128xf32>
    %33 = math.exp %32 : vector<32x128xf32>
    %cst_22 = arith.constant 9.99999974E-5 : f32
    %34 = vector.broadcast %cst_22 : f32 to vector<32x128xf32>
    %35 = arith.addf %33, %34 : vector<32x128xf32>
    %cst_23 = arith.constant 0.150755674 : f32
    %36 = vector.broadcast %cst_23 : f32 to vector<32x128xf32>
    %37 = arith.mulf %36, %35 : vector<32x128xf32>
    %cst_24 = arith.constant 0.000000e+00 : f32
    %38 = vector.shape_cast %14 : vector<1x128xi1> to vector<1x128xi1>
    %39 = vector.broadcast %38 : vector<1x128xi1> to vector<32x128xi1>
    %40 = vector.broadcast %cst_24 : f32 to vector<32x128xf32>
    %41 = arith.select %39, %37, %40 : vector<32x128xi1>, vector<32x128xf32>
    %cst_25 = arith.constant 5.000000e-01 : f32
    %42 = vector.broadcast %cst_25 : f32 to vector<16x16xf32>
    %43 = arith.mulf %42, %3 : vector<16x16xf32>
    %cst_26 = arith.constant dense<0.000000e+00> : vector<16x128xf32>
    %44 = tpu.matmul %43, %6, %cst_26 {dimension_numbers = #tpu.dot_dimension_numbers<[1], [0], [0], [1], [0, 0, 1, 1], [], []>} : vector<16x16xf32>, vector<16x128xf32>, vector<16x128xf32> -> vector<16x128xf32>
    %45 = arith.mulf %3, %3 : vector<16x16xf32>
    %cst_27 = arith.constant dense<0.000000e+00> : vector<16xf32>
    %46 = vector.multi_reduction <add>, %45, %cst_27 [1] : vector<16x16xf32> to vector<16xf32>
    %47 = vector.shape_cast %46 : vector<16xf32> to vector<16x1xf32>
    %cst_28 = arith.constant 1.250000e-01 : f32
    %48 = vector.broadcast %cst_28 : f32 to vector<16x1xf32>
    %49 = arith.mulf %47, %48 : vector<16x1xf32>
    %cst_29 = arith.constant 0xFF800000 : f32
    %50 = vector.shape_cast %14 : vector<1x128xi1> to vector<1x128xi1>
    %51 = vector.broadcast %50 : vector<1x128xi1> to vector<16x128xi1>
    %52 = vector.broadcast %cst_29 : f32 to vector<16x128xf32>
    %53 = arith.select %51, %44, %52 : vector<16x128xi1>, vector<16x128xf32>
    %54 = vector.shape_cast %53 : vector<16x128xf32> to vector<1x16x128xf32>
    %cst_30 = arith.constant dense<0xFF800000> : vector<1xf32>
    %55 = vector.multi_reduction <maximumf>, %54, %cst_30 [1, 2] : vector<1x16x128xf32> to vector<1xf32>
    %56 = vector.shape_cast %55 : vector<1xf32> to vector<1x1x1xf32>
    %57 = vector.extract %56[0, 0, 0] : f32 from vector<1x1x1xf32>
    %58 = vector.broadcast %49 : vector<16x1xf32> to vector<16x128xf32>
    %59 = arith.subf %44, %58 : vector<16x128xf32>
    %60 = vector.broadcast %57 : f32 to vector<16x128xf32>
    %61 = arith.subf %59, %60 : vector<16x128xf32>
    %62 = math.exp %61 : vector<16x128xf32>
    %cst_31 = arith.constant 9.99999974E-5 : f32
    %63 = vector.broadcast %cst_31 : f32 to vector<16x128xf32>
    %64 = arith.addf %62, %63 : vector<16x128xf32>
    %cst_32 = arith.constant 0.150755674 : f32
    %65 = vector.broadcast %cst_32 : f32 to vector<16x128xf32>
    %66 = arith.mulf %65, %64 : vector<16x128xf32>
    %cst_33 = arith.constant 0.000000e+00 : f32
    %67 = vector.shape_cast %14 : vector<1x128xi1> to vector<1x128xi1>
    %68 = vector.broadcast %67 : vector<1x128xi1> to vector<16x128xi1>
    %69 = vector.broadcast %cst_33 : f32 to vector<16x128xf32>
    %70 = arith.select %68, %66, %69 : vector<16x128xi1>, vector<16x128xf32>
    %cst_34 = arith.constant dense<0.000000e+00> : vector<128xf32>
    %71 = vector.multi_reduction <add>, %70, %cst_34 [0] : vector<16x128xf32> to vector<128xf32>
    %72 = vector.shape_cast %71 : vector<128xf32> to vector<1x128xf32>
    %73 = vector.broadcast %72 : vector<1x128xf32> to vector<32x128xf32>
    %74 = arith.mulf %41, %73 : vector<32x128xf32>
    %cst_35 = arith.constant dense<0.000000e+00> : vector<32xf32>
    %75 = vector.multi_reduction <add>, %74, %cst_35 [1] : vector<32x128xf32> to vector<32xf32>
    %76 = vector.shape_cast %75 : vector<32xf32> to vector<32x1xf32>
    %77 = tpu.reciprocal %76 {approx = true} : vector<32x1xf32> -> vector<32x1xf32>
    %cst_36 = arith.constant dense<0.000000e+00> : vector<128x16xf32>
    %78 = tpu.matmul %70, %11, %cst_36 {dimension_numbers = #tpu.dot_dimension_numbers<[0], [0], [1], [1], [0, 1, 1, 1], [], []>} : vector<16x128xf32>, vector<16x16xf32>, vector<128x16xf32> -> vector<128x16xf32>
    %cst_37 = arith.constant dense<0.000000e+00> : vector<32x16xf32>
    %79 = tpu.matmul %41, %78, %cst_37 {dimension_numbers = #tpu.dot_dimension_numbers<[1], [0], [0], [1], [0, 0, 1, 1], [], []>} : vector<32x128xf32>, vector<128x16xf32>, vector<32x16xf32> -> vector<32x16xf32>
    %80 = vector.broadcast %77 : vector<32x1xf32> to vector<32x16xf32>
    %81 = arith.mulf %79, %80 : vector<32x16xf32>
    %82 = vector.shape_cast %81 : vector<32x16xf32> to vector<1x1x32x16xf32>
    %c0_38 = arith.constant 0 : index
    %c0_39 = arith.constant 0 : index
    %c0_40 = arith.constant 0 : index
    %c0_41 = arith.constant 0 : index
    %83 = vector.load %arg8[%c0_38, %c0_39, %c0_40, %c0_41] : memref<1x1x32x16xf32, #tpu.memory_space<vmem>>, vector<1x1x32x16xf32>
    tpu.vector_store %arg8[%c0_38, %c0_39, %c0_40, %c0_41], %82 {strides = array<i32>} : memref<1x1x32x16xf32, #tpu.memory_space<vmem>>, vector<1x1x32x16xf32>,
    return
  }
  func.func @transform_0(%arg0: i32, %arg1: i32) -> (i32, i32, i32) {
    %c0_i32 = arith.constant 0 : i32
    %c0_i32_0 = arith.constant 0 : i32
    %c0_i32_1 = arith.constant 0 : i32
    return %arg1, %c0_i32, %c0_i32_0 : i32, i32, i32
  }
  func.func @transform_1(%arg0: i32, %arg1: i32) -> (i32, i32, i32, i32) {
    %c0_i32 = arith.constant 0 : i32
    %c0_i32_0 = arith.constant 0 : i32
    %c0_i32_1 = arith.constant 0 : i32
    return %arg0, %arg1, %c0_i32, %c0_i32_0 : i32, i32, i32, i32
  }
  func.func @transform_2(%arg0: i32, %arg1: i32) -> (i32, i32, i32, i32) {
    %c0_i32 = arith.constant 0 : i32
    %c0_i32_0 = arith.constant 0 : i32
    %c0_i32_1 = arith.constant 0 : i32
    return %arg0, %arg1, %c0_i32, %c0_i32_0 : i32, i32, i32, i32
  }
  func.func @transform_3(%arg0: i32, %arg1: i32) -> (i32, i32) {
    %c0_i32 = arith.constant 0 : i32
    %c0_i32_0 = arith.constant 0 : i32
    %c0_i32_1 = arith.constant 0 : i32
    return %c0_i32, %c0_i32_0 : i32, i32
  }
  func.func @transform_4(%arg0: i32, %arg1: i32) -> (i32, i32) {
    %c0_i32 = arith.constant 0 : i32
    %c0_i32_0 = arith.constant 0 : i32
    %c0_i32_1 = arith.constant 0 : i32
    return %c0_i32, %c0_i32_0 : i32, i32
  }
  func.func @transform_5(%arg0: i32, %arg1: i32) -> (i32, i32) {
    %c0_i32 = arith.constant 0 : i32
    %c0_i32_0 = arith.constant 0 : i32
    %c0_i32_1 = arith.constant 0 : i32
    return %c0_i32, %c0_i32_0 : i32, i32
  }
  func.func @transform_6(%arg0: i32, %arg1: i32) -> (i32, i32, i32, i32) {
    %c0_i32 = arith.constant 0 : i32
    %c0_i32_0 = arith.constant 0 : i32
    %c0_i32_1 = arith.constant 0 : i32
    return %arg0, %arg1, %c0_i32, %c0_i32_0 : i32, i32, i32, i32
  }
}

module attributes {stable_mosaic.version = 11 : i64} {
  func.func @_linear_bias_kernel(%arg0: i32, %arg1: memref<32x64xf32, #tpu.memory_space<vmem>>, %arg2: memref<64x64xf32, #tpu.memory_space<vmem>>, %arg3: memref<1x64xf32, #tpu.memory_space<vmem>>, %arg4: memref<32x64xf32, #tpu.memory_space<vmem>>) attributes {dimension_semantics = [#tpu.dimension_semantics<parallel>], iteration_bounds = array<i64: 1>, scalar_prefetch = 0 : i64, scratch_operands = 0 : i64, tpu.core_type = #tpu.core_type<tc>, window_params = [{transform_indices = @transform_0, window_bounds = array<i64: 32, 64>}, {pipeline_mode = #tpu.pipeline_mode<synchronous>, transform_indices = @transform_1, window_bounds = array<i64: 64, 64>}, {pipeline_mode = #tpu.pipeline_mode<synchronous>, transform_indices = @transform_2, window_bounds = array<i64: 1, 64>}, {transform_indices = @transform_3, window_bounds = array<i64: 32, 64>}]} {
    %c0 = arith.constant 0 : index
    %c0_0 = arith.constant 0 : index
    %0 = vector.load %arg1[%c0, %c0_0] : memref<32x64xf32, #tpu.memory_space<vmem>>, vector<32x64xf32>
    %c0_1 = arith.constant 0 : index
    %c0_2 = arith.constant 0 : index
    %1 = vector.load %arg2[%c0_1, %c0_2] : memref<64x64xf32, #tpu.memory_space<vmem>>, vector<64x64xf32>
    %cst = arith.constant dense<0.000000e+00> : vector<32x64xf32>
    %2 = tpu.matmul %0, %1, %cst {dimension_numbers = #tpu.dot_dimension_numbers<[1], [0], [0], [1], [0, 0, 1, 1], [], []>} : vector<32x64xf32>, vector<64x64xf32>, vector<32x64xf32> -> vector<32x64xf32>
    %c0_3 = arith.constant 0 : index
    %c0_4 = arith.constant 0 : index
    %3 = vector.load %arg3[%c0_3, %c0_4] : memref<1x64xf32, #tpu.memory_space<vmem>>, vector<1x64xf32>
    %4 = vector.broadcast %3 : vector<1x64xf32> to vector<32x64xf32>
    %5 = arith.addf %2, %4 : vector<32x64xf32>
    %c0_5 = arith.constant 0 : index
    %c0_6 = arith.constant 0 : index
    %6 = vector.load %arg4[%c0_5, %c0_6] : memref<32x64xf32, #tpu.memory_space<vmem>>, vector<32x64xf32>
    tpu.vector_store %arg4[%c0_5, %c0_6], %5 {strides = array<i32>} : memref<32x64xf32, #tpu.memory_space<vmem>>, vector<32x64xf32>,
    return
  }
  func.func @transform_0(%arg0: i32) -> (i32, i32) {
    %c0_i32 = arith.constant 0 : i32
    %c0_i32_0 = arith.constant 0 : i32
    return %arg0, %c0_i32 : i32, i32
  }
  func.func @transform_1(%arg0: i32) -> (i32, i32) {
    %c0_i32 = arith.constant 0 : i32
    %c0_i32_0 = arith.constant 0 : i32
    %c0_i32_1 = arith.constant 0 : i32
    return %c0_i32, %c0_i32_0 : i32, i32
  }
  func.func @transform_2(%arg0: i32) -> (i32, i32) {
    %c0_i32 = arith.constant 0 : i32
    %c0_i32_0 = arith.constant 0 : i32
    %c0_i32_1 = arith.constant 0 : i32
    return %c0_i32, %c0_i32_0 : i32, i32
  }
  func.func @transform_3(%arg0: i32) -> (i32, i32) {
    %c0_i32 = arith.constant 0 : i32
    %c0_i32_0 = arith.constant 0 : i32
    return %arg0, %c0_i32 : i32, i32
  }
}

</mosaic_0001>

<llo_original>
// kernel: attention_forward.6
$region0: #{attention_forward.6}
  #allocation0 [shape = 'u32[]', space=smem, size = 0x4, offset = 0x4, fixed_abs, tag = 'smem constant byte address 0x4 - core index']
  #allocation1 [shape = 'u32[144,128]{1,0:T(1,128)}', space=vmem, size = 0x12000, scoped, tag = 'internal scratch']
  %s0 = inlined_call_operand.vmem [shape: f32[32,64], index: 0, kind: input, shape index: {}]
  %s1 = inlined_call_operand.hbm [shape: f32[64,192], index: 1, kind: input, shape index: {}]
  %s2 = inlined_call_operand.vmem [shape: f32[32,192], index: 2, kind: output, shape index: {}]
  %s3 = sld [smem:[#allocation0]]
  $region22: #{attention_forward.6} parent=0
    _
  %s5 = ssub.s32 1, %s3
  %s6 = scalar_select 0, %s5, %s3
  $region1: #{attention_forward.6} parent=0
    #allocation2 [shape = 'u8[65536]{0}', space=vmem, size = 0x10000, scoped, tag = 'input window, operand 1, single buffered']
    #allocation3 [shape = 's32[1]{0}', space=sflag, size = 0x4, scoped, tag = 'scoped memory for attention_forward.6']
    %7 = vsyncpa [#allocation3], 0
    // Predicated region
    $region2: #{attention_forward.6} parent=1 // pred_check
      _
    $region3: #{attention_forward.6} parent=1 // pred_check_branch
      %9 = sbr.rel (0) target = $region5
    $region4: #{attention_forward.6} parent=1 // pred_region
      _
    $region5: #{attention_forward.6} parent=1 // pred_fallthru
      _
    // Predicated region
    $region6: #{attention_forward.6} parent=1 // pred_check
      _
    $region7: #{attention_forward.6} parent=1 // pred_check_branch
      %11 = sbr.rel (0) target = $region9
    $region8: #{attention_forward.6} parent=1 // pred_region
      %s13 = ssub.s32 2048, 2048
      %14 = vsyncadd [#allocation3], %s13
      %s15 = sshll.u32 [#allocation2], 4
      %s16 = int_to_ptr.vmem [resolvable:$true] %s15
      %21 = dma.hbm_to_vmem [thread:$0]  %s1, 2048, %s16, [#allocation3], 256, 256, 16
    $region9: #{attention_forward.6} parent=1 // pred_fallthru
      _
    // Predicated region
    $region10: #{attention_forward.6} parent=1 // pred_check
      _
    $region11: #{attention_forward.6} parent=1 // pred_check_branch
      %23 = sbr.rel (0) target = $region13
    $region12: #{attention_forward.6} parent=1 // pred_region
      %24 = dma.done [#allocation3], 2048
    $region13: #{attention_forward.6} parent=1 // pred_fallthru
      _
    %v25 = vld [vmem:[%s0] sm:$0xff]
    %v26 = vld [vmem:[%s0 + $0x8] sm:$0xff]
    %v27 = vld [vmem:[%s0 + $0x10] sm:$0xff]
    %v28 = vld [vmem:[%s0 + $0x18] sm:$0xff]
    %v29 = vld [vmem:[#allocation2] sm:$0xff]
    %v30 = vld [vmem:[#allocation2 + $0x8] sm:$0xff]
    %v31 = vld [vmem:[#allocation2 + $0x10] sm:$0xff]
    %v32 = vld [vmem:[#allocation2 + $0x18] sm:$0xff]
    %v33 = vld [vmem:[#allocation2 + $0x20] sm:$0xff]
    %v34 = vld [vmem:[#allocation2 + $0x28] sm:$0xff]
    %v35 = vld [vmem:[#allocation2 + $0x30] sm:$0xff]
    %v36 = vld [vmem:[#allocation2 + $0x38] sm:$0xff]
    %v37 = vld [vmem:[#allocation2 + $0x40] sm:$0xff]
    %v38 = vld [vmem:[#allocation2 + $0x48] sm:$0xff]
    %v39 = vld [vmem:[#allocation2 + $0x50] sm:$0xff]
    %v40 = vld [vmem:[#allocation2 + $0x58] sm:$0xff]
    %v41 = vld [vmem:[#allocation2 + $0x60] sm:$0xff]
    %v42 = vld [vmem:[#allocation2 + $0x68] sm:$0xff]
    %v43 = vld [vmem:[#allocation2 + $0x70] sm:$0xff]
    %v44 = vld [vmem:[#allocation2 + $0x78] sm:$0xff]
    %vm45 = vcmask 523264
    %v47 = vsel %vm45, %v25, 0
    %v50 = vsel %vm45, %v26, 0
    %v53 = vsel %vm45, %v27, 0
    %v56 = vsel %vm45, %v28, 0
    %58 = vmatprep.subr.mxu0 %v30
    %59 = vmatpush1.msra.mxu0 %v29
    %60 = vmatprep.subr.mxu0 %v32
    %61 = vmatpush1.msra.mxu0 %v31
    %62 = vmatprep.subr.mxu0 %v34
    %63 = vmatpush1.msra.mxu0 %v33
    %64 = vmatprep.subr.mxu0 %v36
    %65 = vmatpush1.msra.mxu0 %v35
    %66 = vmatprep.subr.mxu0 %v38
    %67 = vmatpush1.msra.mxu0 %v37
    %68 = vmatprep.subr.mxu0 %v40
    %69 = vmatpush1.msra.mxu0 %v39
    %70 = vmatprep.subr.mxu0 %v42
    %71 = vmatpush1.msra.mxu0 %v41
    %72 = vmatprep.subr.mxu0 %v44
    %73 = vmatpush1.msra.mxu0 %v43
    %74 = vmatprep.subr.mxu0 0.0
    %75 = vmatpush1.msra.mxu0 0.0
    %76 = vmatprep.subr.mxu0 0.0
    %77 = vmatpush1.msra.mxu0 0.0
    %78 = vmatprep.subr.mxu0 0.0
    %79 = vmatpush1.msra.mxu0 0.0
    %80 = vmatprep.subr.mxu0 0.0
    %81 = vmatpush1.msra.mxu0 0.0
    %82 = vmatprep.subr.mxu0 0.0
    %83 = vmatpush1.msra.mxu0 0.0
    %84 = vmatprep.subr.mxu0 0.0
    %85 = vmatpush1.msra.mxu0 0.0
    %86 = vmatprep.subr.mxu0 0.0
    %87 = vmatpush1.msra.mxu0 0.0
    %88 = vmatprep.subr.mxu0 0.0
    %89 = vmatpush1.msra.mxu0 0.0
    %90 = vmatprep.subr.mxu0 0.0
    %91 = vmatpush1.msra.mxu0 0.0
    %92 = vmatprep.subr.mxu0 0.0
    %93 = vmatpush1.msra.mxu0 0.0
    %94 = vmatprep.subr.mxu0 0.0
    %95 = vmatpush1.msra.mxu0 0.0
    %96 = vmatprep.subr.mxu0 0.0
    %97 = vmatpush1.msra.mxu0 0.0
    %98 = vmatprep.subr.mxu0 0.0
    %99 = vmatpush1.msra.mxu0 0.0
    %100 = vmatprep.subr.mxu0 0.0
    %101 = vmatpush1.msra.mxu0 0.0
    %102 = vmatprep.subr.mxu0 0.0
    %103 = vmatpush1.msra.mxu0 0.0
    %104 = vmatprep.subr.mxu0 0.0
    %105 = vmatpush1.msra.mxu0 0.0
    %106 = vmatprep.subr.mxu0 0.0
    %107 = vmatpush1.msra.mxu0 0.0
    %108 = vmatprep.subr.mxu0 0.0
    %109 = vmatpush1.msra.mxu0 0.0
    %110 = vmatprep.subr.mxu0 0.0
    %111 = vmatpush1.msra.mxu0 0.0
    %112 = vmatprep.subr.mxu0 0.0
    %113 = vmatpush1.msra.mxu0 0.0
    %114 = vmatprep.subr.mxu0 0.0
    %115 = vmatpush1.msra.mxu0 0.0
    %116 = vmatprep.subr.mxu0 0.0
    %117 = vmatpush1.msra.mxu0 0.0
    %118 = vmatprep.subr.mxu0 0.0
    %119 = vmatpush1.msra.mxu0 0.0
    %120 = vmatprep.subr.mxu0 0.0
    %121 = vmatpush1.msra.mxu0 0.0
    %122 = vmatprep.mubr.f32.mxu0 0.0
    %123 = vmatmul.mubr.f32.gmra.mrb[0].mxu0 %v47
    %v124 = vpop.f32.mrb[0].mxu0
    %v125 = vadd.f32 0.0, %v124
    %v126 = vpop.f32.mrb[0].mxu0
    %v127 = vadd.f32 0.0, %v126
    %128 = vmatprep.mubr.f32.mxu0 0.0
    %129 = vmatmul.mubr.f32.gmra.mrb[0].mxu0 %v50
    %v130 = vpop.f32.mrb[0].mxu0
    %v131 = vadd.f32 0.0, %v130
    %v132 = vpop.f32.mrb[0].mxu0
    %v133 = vadd.f32 0.0, %v132
    %134 = vmatprep.mubr.f32.mxu0 0.0
    %135 = vmatmul.mubr.f32.gmra.mrb[0].mxu0 %v53
    %v136 = vpop.f32.mrb[0].mxu0
    %v137 = vadd.f32 0.0, %v136
    %v138 = vpop.f32.mrb[0].mxu0
    %v139 = vadd.f32 0.0, %v138
    %140 = vmatprep.mubr.f32.mxu0 0.0
    %141 = vmatmul.mubr.f32.gmra.mrb[0].mxu0 %v56
    %v142 = vpop.f32.mrb[0].mxu0
    %v143 = vadd.f32 0.0, %v142
    %v144 = vpop.f32.mrb[0].mxu0
    %v145 = vadd.f32 0.0, %v144
    %146 = vdwg.mxu0
    %147 = vst [vmem:[%s2] sm:$0xff] %v125
    %148 = vst.msk [vmem:[%s2 + $0x8] sm:$0xff] %vm45, %v127
    %149 = vst [vmem:[%s2 + $0x10] sm:$0xff] %v131
    %150 = vst.msk [vmem:[%s2 + $0x18] sm:$0xff] %vm45, %v133
    %151 = vst [vmem:[%s2 + $0x20] sm:$0xff] %v137
    %152 = vst.msk [vmem:[%s2 + $0x28] sm:$0xff] %vm45, %v139
    %153 = vst [vmem:[%s2 + $0x30] sm:$0xff] %v143
    %154 = vst.msk [vmem:[%s2 + $0x38] sm:$0xff] %vm45, %v145
    // Predicated region
    $region14: #{attention_forward.6} parent=1 // pred_check
      _
    $region15: #{attention_forward.6} parent=1 // pred_check_branch
      %156 = sbr.rel (0) target = $region17
    $region16: #{attention_forward.6} parent=1 // pred_region
      _
    $region17: #{attention_forward.6} parent=1 // pred_fallthru
      _
    // Predicated region
    $region18: #{attention_forward.6} parent=1 // pred_check
      _
    $region19: #{attention_forward.6} parent=1 // pred_check_branch
      %158 = sbr.rel (0) target = $region21
    $region20: #{attention_forward.6} parent=1 // pred_region
      _
    $region21: #{attention_forward.6} parent=1 // pred_fallthru
      _
    %159 = vsyncpa [#allocation3], 1

// kernel: attention_forward.8
$region0: #{attention_forward.8}
  #allocation0 [shape = 'u32[]', space=smem, size = 0x4, offset = 0x4, fixed_abs, tag = 'smem constant byte address 0x4 - core index']
  #allocation1 [shape = 'u32[144,128]{1,0:T(1,128)}', space=vmem, size = 0x12000, scoped, tag = 'internal scratch']
  %s0 = inlined_call_operand.vmem [shape: f32[2,4,16,16], index: 0, kind: input, shape index: {}]
  %s1 = inlined_call_operand.vmem [shape: f32[4,64,16], index: 1, kind: input, shape index: {}]
  %s2 = inlined_call_operand.vmem [shape: f32[4,64,16], index: 2, kind: input, shape index: {}]
  %s3 = inlined_call_operand.vmem [shape: f32[16,128], index: 3, kind: input, shape index: {}]
  %s4 = inlined_call_operand.vmem [shape: f32[16,16], index: 4, kind: input, shape index: {}]
  %s5 = inlined_call_operand.vmem [shape: f32[1,16], index: 5, kind: input, shape index: {}]
  %s6 = inlined_call_operand.vmem [shape: f32[16,16], index: 6, kind: input, shape index: {}]
  %s7 = inlined_call_operand.vmem [shape: f32[1,16], index: 7, kind: input, shape index: {}]
  %s8 = inlined_call_operand.vmem [shape: f32[2,4,16,16], index: 8, kind: output, shape index: {}]
  %s9 = sld [smem:[#allocation0]]
  $region65: #{attention_forward.8} parent=0
    _
  %s11 = ssub.s32 1, %s9
  %s12 = scalar_select 0, %s11, %s9
  loop: start=0, step=1, limit=10
  $region2: #{attention_forward.8} parent=0 // loop_pre_header
    _
  $region3: #{attention_forward.8} parent=0 // loop_header
    %s14 = sphi 0, %s18
    %p15 = scmp.ge.s32.totalorder %s14, 10
    %s21 = sphi 0, %s33
    %s22 = sphi 0, %s29
    %s23 = sphi 0, %s21
    %s24 = sphi 0, %s22
    %s25 = sphi 0, %s23
    %s26 = sphi 0, %s24
    %s38 = sphi 0, %s40
    %s41 = sphi 0, %s38
    %s42 = sphi 0, %s41
    %s58 = sphi 0, %s42
    %s64 = sphi 0, %s66
    %s67 = sphi 0, %s64
    %s68 = sphi 0, %s67
    %s84 = sphi 0, %s68
    %s90 = sphi 0, %s92
    %s93 = sphi 0, %s90
    %s94 = sphi 0, %s93
    %s110 = sphi 0, %s94
    %s114 = sphi 0, %s114
    %s116 = sphi 0, %s114
    %s117 = sphi 0, %s116
    %s131 = sphi 0, %s117
    %s135 = sphi 0, %s135
    %s137 = sphi 0, %s135
    %s138 = sphi 0, %s137
    %s152 = sphi 0, %s138
    %s156 = sphi 0, %s156
    %s158 = sphi 0, %s156
    %s159 = sphi 0, %s158
    %s173 = sphi 0, %s159
    %s177 = sphi 0, %s177
    %s179 = sphi 0, %s177
    %s180 = sphi 0, %s179
    %s194 = sphi 0, %s180
    %s198 = sphi 0, %s198
    %s200 = sphi 0, %s198
    %s201 = sphi 0, %s200
    %s215 = sphi 0, %s201
    %s223 = sphi 0, %s225
    %s226 = sphi 0, %s223
    %s227 = sphi 0, %s226
    %s243 = sphi 0, %s227
  $region4: #{attention_forward.8} parent=0 // loop_header_branch
    %17 = sbr.rel (%p15) target = $region8
  $region5: #{attention_forward.8} parent=0 // loop_body
    %s19 = ssub.s32 %s14, 1
    %s20 = ssub.s32 %s14, 2
    %s27 = sadd.s32 1, %s22
    %p28 = scmp.ge.s32.totalorder %s27, 4
    %s29 = scalar_select %p28, 0, %s27
    %s30 = sadd.s32 1, %s21
    %s31 = scalar_select %p28, %s30, %s21
    %p32 = scmp.ge.s32.totalorder %s31, 2
    %s33 = scalar_select %p32, 0, %s31
    %s34 = ssub.s32 %s21, %s33
    %s35 = ssub.s32 %s22, %s29
    %s36 = sor.u32 %s34, %s35
    %p37 = scmp.eq.s32.totalorder %s36, 0
    %s39 = sadd.s32 %s38, 1
    %s40 = scalar_select %p37, %s38, %s39
    %p43 = pneg %p37
    %p44 = scmp.eq.s32.totalorder %s14, 7
    %p45 = por %p43, %p44
    %p46 = scmp.ne.s32.totalorder %s38, %s41
    %p47 = scmp.eq.s32.totalorder %s14, 0
    %p48 = por %p46, %p47
    %p49 = scmp.ne.s32.totalorder %s38, %s41
    %p50 = scmp.eq.s32.totalorder %s19, 7
    %p51 = por %p49, %p50
    %p52 = scmp.ne.s32.totalorder %s41, %s42
    %p53 = scmp.eq.s32.totalorder %s19, 0
    %p54 = por %p52, %p53
    %p55 = scmp.ne.s32.totalorder %s41, %s42
    %p56 = scmp.eq.s32.totalorder %s20, 7
    %p57 = por %p55, %p56
    %p59 = scmp.ne.s32.totalorder %s42, %s58
    %p60 = scmp.eq.s32.totalorder %s20, 0
    %p61 = por %p59, %p60
    %s62 = ssub.s32 %s22, %s29
    %p63 = scmp.eq.s32.totalorder %s62, 0
    %s65 = sadd.s32 %s64, 1
    %s66 = scalar_select %p63, %s64, %s65
    %p69 = pneg %p63
    %p70 = scmp.eq.s32.totalorder %s14, 7
    %p71 = por %p69, %p70
    %p72 = scmp.ne.s32.totalorder %s64, %s67
    %p73 = scmp.eq.s32.totalorder %s14, 0
    %p74 = por %p72, %p73
    %p75 = scmp.ne.s32.totalorder %s64, %s67
    %p76 = scmp.eq.s32.totalorder %s19, 7
    %p77 = por %p75, %p76
    %p78 = scmp.ne.s32.totalorder %s67, %s68
    %p79 = scmp.eq.s32.totalorder %s19, 0
    %p80 = por %p78, %p79
    %p81 = scmp.ne.s32.totalorder %s67, %s68
    %p82 = scmp.eq.s32.totalorder %s20, 7
    %p83 = por %p81, %p82
    %p85 = scmp.ne.s32.totalorder %s68, %s84
    %p86 = scmp.eq.s32.totalorder %s20, 0
    %p87 = por %p85, %p86
    %s88 = ssub.s32 %s22, %s29
    %p89 = scmp.eq.s32.totalorder %s88, 0
    %s91 = sadd.s32 %s90, 1
    %s92 = scalar_select %p89, %s90, %s91
    %p95 = pneg %p89
    %p96 = scmp.eq.s32.totalorder %s14, 7
    %p97 = por %p95, %p96
    %p98 = scmp.ne.s32.totalorder %s90, %s93
    %p99 = scmp.eq.s32.totalorder %s14, 0
    %p100 = por %p98, %p99
    %p101 = scmp.ne.s32.totalorder %s90, %s93
    %p102 = scmp.eq.s32.totalorder %s19, 7
    %p103 = por %p101, %p102
    %p104 = scmp.ne.s32.totalorder %s93, %s94
    %p105 = scmp.eq.s32.totalorder %s19, 0
    %p106 = por %p104, %p105
    %p107 = scmp.ne.s32.totalorder %s93, %s94
    %p108 = scmp.eq.s32.totalorder %s20, 7
    %p109 = por %p107, %p108
    %p111 = scmp.ne.s32.totalorder %s94, %s110
    %p112 = scmp.eq.s32.totalorder %s20, 0
    %p113 = por %p111, %p112
    %s115 = sadd.s32 %s114, 1
    %p118 = scmp.eq.s32.totalorder %s14, 7
    %p119 = scmp.ne.s32.totalorder %s114, %s116
    %p120 = scmp.eq.s32.totalorder %s14, 0
    %p121 = por %p119, %p120
    %p122 = scmp.ne.s32.totalorder %s114, %s116
    %p123 = scmp.eq.s32.totalorder %s19, 7
    %p124 = por %p122, %p123
    %p125 = scmp.ne.s32.totalorder %s116, %s117
    %p126 = scmp.eq.s32.totalorder %s19, 0
    %p127 = por %p125, %p126
    %p128 = scmp.ne.s32.totalorder %s116, %s117
    %p129 = scmp.eq.s32.totalorder %s20, 7
    %p130 = por %p128, %p129
    %p132 = scmp.ne.s32.totalorder %s117, %s131
    %p133 = scmp.eq.s32.totalorder %s20, 0
    %p134 = por %p132, %p133
    %s136 = sadd.s32 %s135, 1
    %p139 = scmp.eq.s32.totalorder %s14, 7
    %p140 = scmp.ne.s32.totalorder %s135, %s137
    %p141 = scmp.eq.s32.totalorder %s14, 0
    %p142 = por %p140, %p141
    %p143 = scmp.ne.s32.totalorder %s135, %s137
    %p144 = scmp.eq.s32.totalorder %s19, 7
    %p145 = por %p143, %p144
    %p146 = scmp.ne.s32.totalorder %s137, %s138
    %p147 = scmp.eq.s32.totalorder %s19, 0
    %p148 = por %p146, %p147
    %p149 = scmp.ne.s32.totalorder %s137, %s138
    %p150 = scmp.eq.s32.totalorder %s20, 7
    %p151 = por %p149, %p150
    %p153 = scmp.ne.s32.totalorder %s138, %s152
    %p154 = scmp.eq.s32.totalorder %s20, 0
    %p155 = por %p153, %p154
    %s157 = sadd.s32 %s156, 1
    %p160 = scmp.eq.s32.totalorder %s14, 7
    %p161 = scmp.ne.s32.totalorder %s156, %s158
    %p162 = scmp.eq.s32.totalorder %s14, 0
    %p163 = por %p161, %p162
    %p164 = scmp.ne.s32.totalorder %s156, %s158
    %p165 = scmp.eq.s32.totalorder %s19, 7
    %p166 = por %p164, %p165
    %p167 = scmp.ne.s32.totalorder %s158, %s159
    %p168 = scmp.eq.s32.totalorder %s19, 0
    %p169 = por %p167, %p168
    %p170 = scmp.ne.s32.totalorder %s158, %s159
    %p171 = scmp.eq.s32.totalorder %s20, 7
    %p172 = por %p170, %p171
    %p174 = scmp.ne.s32.totalorder %s159, %s173
    %p175 = scmp.eq.s32.totalorder %s20, 0
    %p176 = por %p174, %p175
    %s178 = sadd.s32 %s177, 1
    %p181 = scmp.eq.s32.totalorder %s14, 7
    %p182 = scmp.ne.s32.totalorder %s177, %s179
    %p183 = scmp.eq.s32.totalorder %s14, 0
    %p184 = por %p182, %p183
    %p185 = scmp.ne.s32.totalorder %s177, %s179
    %p186 = scmp.eq.s32.totalorder %s19, 7
    %p187 = por %p185, %p186
    %p188 = scmp.ne.s32.totalorder %s179, %s180
    %p189 = scmp.eq.s32.totalorder %s19, 0
    %p190 = por %p188, %p189
    %p191 = scmp.ne.s32.totalorder %s179, %s180
    %p192 = scmp.eq.s32.totalorder %s20, 7
    %p193 = por %p191, %p192
    %p195 = scmp.ne.s32.totalorder %s180, %s194
    %p196 = scmp.eq.s32.totalorder %s20, 0
    %p197 = por %p195, %p196
    %s199 = sadd.s32 %s198, 1
    %p202 = scmp.eq.s32.totalorder %s14, 7
    %p203 = scmp.ne.s32.totalorder %s198, %s200
    %p204 = scmp.eq.s32.totalorder %s14, 0
    %p205 = por %p203, %p204
    %p206 = scmp.ne.s32.totalorder %s198, %s200
    %p207 = scmp.eq.s32.totalorder %s19, 7
    %p208 = por %p206, %p207
    %p209 = scmp.ne.s32.totalorder %s200, %s201
    %p210 = scmp.eq.s32.totalorder %s19, 0
    %p211 = por %p209, %p210
    %p212 = scmp.ne.s32.totalorder %s200, %s201
    %p213 = scmp.eq.s32.totalorder %s20, 7
    %p214 = por %p212, %p213
    %p216 = scmp.ne.s32.totalorder %s201, %s215
    %p217 = scmp.eq.s32.totalorder %s20, 0
    %p218 = por %p216, %p217
    %s219 = ssub.s32 %s21, %s33
    %s220 = ssub.s32 %s22, %s29
    %s221 = sor.u32 %s219, %s220
    %p222 = scmp.eq.s32.totalorder %s221, 0
    %s224 = sadd.s32 %s223, 1
    %s225 = scalar_select %p222, %s223, %s224
    %p228 = pneg %p222
    %p229 = scmp.eq.s32.totalorder %s14, 7
    %p230 = por %p228, %p229
    %p231 = scmp.ne.s32.totalorder %s223, %s226
    %p232 = scmp.eq.s32.totalorder %s14, 0
    %p233 = por %p231, %p232
    %p234 = scmp.ne.s32.totalorder %s223, %s226
    %p235 = scmp.eq.s32.totalorder %s19, 7
    %p236 = por %p234, %p235
    %p237 = scmp.ne.s32.totalorder %s226, %s227
    %p238 = scmp.eq.s32.totalorder %s19, 0
    %p239 = por %p237, %p238
    %p240 = scmp.ne.s32.totalorder %s226, %s227
    %p241 = scmp.eq.s32.totalorder %s20, 7
    %p242 = por %p240, %p241
    %p244 = scmp.ne.s32.totalorder %s227, %s243
    %p245 = scmp.eq.s32.totalorder %s20, 0
    %p246 = por %p244, %p245
    %p247 = scmp.le.s32.totalorder 1, %s14
    %p248 = scmp.lt.s32.totalorder %s14, 9
    %p249 = pnand %p247, %p248
    %p250 = pneg %p249
    // Predicated region
    $region9: #{attention_forward.8} parent=5 // pred_check
      _
    $region10: #{attention_forward.8} parent=5 // pred_check_branch
      %252 = sbr.rel (%p249) target = $region12
    $region11: #{attention_forward.8} parent=5 // pred_region
      %s253 = ssub.s32 %s14, 1
      // Predicated region
      $region13: #{attention_forward.8} parent=11 // pred_check
        %p254 = pneg %p127
      $region14: #{attention_forward.8} parent=11 // pred_check_branch
        %256 = sbr.rel (%p254) target = $region16
      $region15: #{attention_forward.8} parent=11 // pred_region
        _
      $region16: #{attention_forward.8} parent=11 // pred_fallthru
        _
      // Predicated region
      $region17: #{attention_forward.8} parent=11 // pred_check
        %p257 = pneg %p148
      $region18: #{attention_forward.8} parent=11 // pred_check_branch
        %259 = sbr.rel (%p257) target = $region20
      $region19: #{attention_forward.8} parent=11 // pred_region
        _
      $region20: #{attention_forward.8} parent=11 // pred_fallthru
        _
      // Predicated region
      $region21: #{attention_forward.8} parent=11 // pred_check
        %p260 = pneg %p169
      $region22: #{attention_forward.8} parent=11 // pred_check_branch
        %262 = sbr.rel (%p260) target = $region24
      $region23: #{attention_forward.8} parent=11 // pred_region
        _
      $region24: #{attention_forward.8} parent=11 // pred_fallthru
        _
      // Predicated region
      $region25: #{attention_forward.8} parent=11 // pred_check
        %p263 = pneg %p190
      $region26: #{attention_forward.8} parent=11 // pred_check_branch
        %265 = sbr.rel (%p263) target = $region28
      $region27: #{attention_forward.8} parent=11 // pred_region
        _
      $region28: #{attention_forward.8} parent=11 // pred_fallthru
        _
      // Predicated region
      $region29: #{attention_forward.8} parent=11 // pred_check
        %p266 = pneg %p211
      $region30: #{attention_forward.8} parent=11 // pred_check_branch
        %268 = sbr.rel (%p266) target = $region32
      $region31: #{attention_forward.8} parent=11 // pred_region
        _
      $region32: #{attention_forward.8} parent=11 // pred_fallthru
        _
    $region12: #{attention_forward.8} parent=5 // pred_fallthru
      _
    %p269 = scmp.lt.s32.totalorder %s14, 8
    // Predicated region
    $region33: #{attention_forward.8} parent=5 // pred_check
      %p270 = pneg %p269
    $region34: #{attention_forward.8} parent=5 // pred_check_branch
      %272 = sbr.rel (%p270) target = $region36
    $region35: #{attention_forward.8} parent=5 // pred_region
      // Predicated region
      $region37: #{attention_forward.8} parent=35 // pred_check
        %p273 = pneg %p48
      $region38: #{attention_forward.8} parent=35 // pred_check_branch
        %275 = sbr.rel (%p273) target = $region40
      $region39: #{attention_forward.8} parent=35 // pred_region
        %p276 = scmp.lt.s32.totalorder %s21, 1
        %s277 = scalar_select %p276, %s21, 1
        %p278 = scmp.lt.s32.totalorder %s22, 3
        %s279 = scalar_select %p278, %s22, 3
        %s280 = smul.addr %s279, 2
        %s281 = smul.addr %s277, 8
        %s282 = sadd.s32 %s280, %s281
        %s283 = smul.addr %s282, 8
        %s284 = scalar_lea.vmem %s0, %s283
      $region40: #{attention_forward.8} parent=35 // pred_fallthru
        _
      // Predicated region
      $region41: #{attention_forward.8} parent=35 // pred_check
        %p285 = pneg %p74
      $region42: #{attention_forward.8} parent=35 // pred_check_branch
        %287 = sbr.rel (%p285) target = $region44
      $region43: #{attention_forward.8} parent=35 // pred_region
        %p288 = scmp.lt.s32.totalorder %s22, 3
        %s289 = scalar_select %p288, %s22, 3
        %s290 = smul.addr %s289, 8
        %s291 = smul.addr %s290, 8
        %s292 = scalar_lea.vmem %s1, %s291
      $region44: #{attention_forward.8} parent=35 // pred_fallthru
        _
      // Predicated region
      $region45: #{attention_forward.8} parent=35 // pred_check
        %p293 = pneg %p100
      $region46: #{attention_forward.8} parent=35 // pred_check_branch
        %295 = sbr.rel (%p293) target = $region48
      $region47: #{attention_forward.8} parent=35 // pred_region
        %p296 = scmp.lt.s32.totalorder %s22, 3
        %s297 = scalar_select %p296, %s22, 3
        %s298 = smul.addr %s297, 8
        %s299 = smul.addr %s298, 8
        %s300 = scalar_lea.vmem %s2, %s299
      $region48: #{attention_forward.8} parent=35 // pred_fallthru
        _
    $region36: #{attention_forward.8} parent=5 // pred_fallthru
      _
    %p301 = scmp.le.s32.totalorder 1, %s14
    %p302 = scmp.lt.s32.totalorder %s14, 9
    %p303 = pnand %p301, %p302
    %p304 = pneg %p303
    // Predicated region
    $region49: #{attention_forward.8} parent=5 // pred_check
      _
    $region50: #{attention_forward.8} parent=5 // pred_check_branch
      %306 = sbr.rel (%p303) target = $region52
    $region51: #{attention_forward.8} parent=5 // pred_region
      %s307 = ssub.s32 %s14, 1
      %p308 = scmp.lt.s32.totalorder %s23, 1
      %s309 = scalar_select %p308, %s23, 1
      %p310 = scmp.lt.s32.totalorder %s24, 3
      %s311 = scalar_select %p310, %s24, 3
      %s312 = smul.addr %s311, 2
      %s313 = smul.addr %s309, 8
      %s314 = sadd.s32 %s312, %s313
      %s315 = smul.addr %s314, 8
      %s316 = scalar_lea.vmem %s0, %s315
      %p317 = pneg %p54
      %p318 = pneg %p51
      %p319 = scmp.lt.s32.totalorder %s24, 3
      %s320 = scalar_select %p319, %s24, 3
      %s321 = smul.addr %s320, 8
      %s322 = smul.addr %s321, 8
      %s323 = scalar_lea.vmem %s1, %s322
      %p324 = pneg %p80
      %p325 = pneg %p77
      %p326 = scmp.lt.s32.totalorder %s24, 3
      %s327 = scalar_select %p326, %s24, 3
      %s328 = smul.addr %s327, 8
      %s329 = smul.addr %s328, 8
      %s330 = scalar_lea.vmem %s2, %s329
      %p331 = pneg %p106
      %p332 = pneg %p103
      %p333 = pneg %p127
      %p334 = pneg %p124
      %p335 = pneg %p148
      %p336 = pneg %p145
      %p337 = pneg %p169
      %p338 = pneg %p166
      %p339 = pneg %p190
      %p340 = pneg %p187
      %p341 = pneg %p211
      %p342 = pneg %p208
      %p343 = pneg %p239
      %p344 = pneg %p236
      %p345 = scmp.lt.s32.totalorder %s23, 1
      %s346 = scalar_select %p345, %s23, 1
      %p347 = scmp.lt.s32.totalorder %s24, 3
      %s348 = scalar_select %p347, %s24, 3
      %s349 = smul.addr %s348, 2
      %s350 = smul.addr %s346, 8
      %s351 = sadd.s32 %s349, %s350
      %s352 = smul.addr %s351, 8
      %s353 = scalar_lea.vmem %s8, %s352
      %p354 = scmp.lt.s32.totalorder %s23, 1
      %s355 = scalar_select %p354, %s23, 1
      %p356 = scmp.lt.s32.totalorder %s24, 3
      %s357 = scalar_select %p356, %s24, 3
      %s358 = smul.addr %s357, 2
      %s359 = smul.addr %s355, 8
      %s360 = sadd.s32 %s358, %s359
      %s361 = smul.addr %s360, 8
      %s362 = scalar_lea.vmem %s0, %s361
      %p363 = scmp.lt.s32.totalorder %s24, 3
      %s364 = scalar_select %p363, %s24, 3
      %s365 = smul.addr %s364, 8
      %s366 = smul.addr %s365, 8
      %s367 = scalar_lea.vmem %s1, %s366
      %p368 = scmp.lt.s32.totalorder %s24, 3
      %s369 = scalar_select %p368, %s24, 3
      %s370 = smul.addr %s369, 8
      %s371 = smul.addr %s370, 8
      %s372 = scalar_lea.vmem %s2, %s371
      %p373 = scmp.lt.s32.totalorder %s23, 1
      %s374 = scalar_select %p373, %s23, 1
      %p375 = scmp.lt.s32.totalorder %s24, 3
      %s376 = scalar_select %p375, %s24, 3
      %s377 = smul.addr %s376, 2
      %s378 = smul.addr %s374, 8
      %s379 = sadd.s32 %s377, %s378
      %s380 = smul.addr %s379, 8
      %s381 = scalar_lea.vmem %s8, %s380
      %v382 = vld [vmem:[%s362] sm:$0xff]
      %v383 = vld [vmem:[%s362 + $0x8] sm:$0xff]
      %v384 = vld [vmem:[%s367] sm:$0xff]
      %v385 = vld [vmem:[%s367 + $0x8] sm:$0xff]
      %v386 = vld [vmem:[%s367 + $0x10] sm:$0xff]
      %v387 = vld [vmem:[%s367 + $0x18] sm:$0xff]
      %v388 = vld [vmem:[%s367 + $0x20] sm:$0xff]
      %v389 = vld [vmem:[%s367 + $0x28] sm:$0xff]
      %v390 = vld [vmem:[%s367 + $0x30] sm:$0xff]
      %v391 = vld [vmem:[%s367 + $0x38] sm:$0xff]
      %v392 = vld [vmem:[%s372] sm:$0xff]
      %v393 = vld [vmem:[%s372 + $0x8] sm:$0xff]
      %v394 = vld [vmem:[%s372 + $0x10] sm:$0xff]
      %v395 = vld [vmem:[%s372 + $0x18] sm:$0xff]
      %v396 = vld [vmem:[%s372 + $0x20] sm:$0xff]
      %v397 = vld [vmem:[%s372 + $0x28] sm:$0xff]
      %v398 = vld [vmem:[%s372 + $0x30] sm:$0xff]
      %v399 = vld [vmem:[%s372 + $0x38] sm:$0xff]
      %v400 = vld [vmem:[%s3] sm:$0xff]
      %v401 = vld [vmem:[%s3 + $0x8] sm:$0xff]
      %v402 = vld [vmem:[%s4] sm:$0xff]
      %v403 = vld [vmem:[%s4 + $0x8] sm:$0xff]
      %v404 = vld [vmem:[%s5] sm:$0x1]
      %v406 = vlaneseq
      %v407 = vshrl.u32 %v406, 7
      %v408 = vsub.s32 0, %v407
      %v409 = vrot.slane %v404, %v408
      %vm411 = vcmask 130048
      %v413 = vsel %vm411, %v384, 0
      %v416 = vsel %vm411, %v385, 0
      %v419 = vsel %vm411, %v386, 0
      %v422 = vsel %vm411, %v387, 0
      %v425 = vsel %vm411, %v388, 0
      %v428 = vsel %vm411, %v389, 0
      %v431 = vsel %vm411, %v390, 0
      %v434 = vsel %vm411, %v391, 0
      %436 = vmatprep.subr.mxu0 0.0
      %437 = vmatpush1.msra.mxu0 %v402
      %438 = vmatprep.subr.mxu0 0.0
      %439 = vmatpush1.msra.mxu0 %v403
      %440 = vmatprep.subr.mxu0 0.0
      %441 = vmatpush1.msra.mxu0 0.0
      %442 = vmatprep.subr.mxu0 0.0
      %443 = vmatpush1.msra.mxu0 0.0
      %444 = vmatprep.subr.mxu0 0.0
      %445 = vmatpush1.msra.mxu0 0.0
      %446 = vmatprep.subr.mxu0 0.0
      %447 = vmatpush1.msra.mxu0 0.0
      %448 = vmatprep.subr.mxu0 0.0
      %449 = vmatpush1.msra.mxu0 0.0
      %450 = vmatprep.subr.mxu0 0.0
      %451 = vmatpush1.msra.mxu0 0.0
      %452 = vmatprep.subr.mxu0 0.0
      %453 = vmatpush1.msra.mxu0 0.0
      %454 = vmatprep.subr.mxu0 0.0
      %455 = vmatpush1.msra.mxu0 0.0
      %456 = vmatprep.subr.mxu0 0.0
      %457 = vmatpush1.msra.mxu0 0.0
      %458 = vmatprep.subr.mxu0 0.0
      %459 = vmatpush1.msra.mxu0 0.0
      %460 = vmatprep.subr.mxu0 0.0
      %461 = vmatpush1.msra.mxu0 0.0
      %462 = vmatprep.subr.mxu0 0.0
      %463 = vmatpush1.msra.mxu0 0.0
      %464 = vmatprep.subr.mxu0 0.0
      %465 = vmatpush1.msra.mxu0 0.0
      %466 = vmatprep.subr.mxu0 0.0
      %467 = vmatpush1.msra.mxu0 0.0
      %468 = vmatprep.subr.mxu0 0.0
      %469 = vmatpush1.msra.mxu0 0.0
      %470 = vmatprep.subr.mxu0 0.0
      %471 = vmatpush1.msra.mxu0 0.0
      %472 = vmatprep.subr.mxu0 0.0
      %473 = vmatpush1.msra.mxu0 0.0
      %474 = vmatprep.subr.mxu0 0.0
      %475 = vmatpush1.msra.mxu0 0.0
      %476 = vmatprep.subr.mxu0 0.0
      %477 = vmatpush1.msra.mxu0 0.0
      %478 = vmatprep.subr.mxu0 0.0
      %479 = vmatpush1.msra.mxu0 0.0
      %480 = vmatprep.subr.mxu0 0.0
      %481 = vmatpush1.msra.mxu0 0.0
      %482 = vmatprep.subr.mxu0 0.0
      %483 = vmatpush1.msra.mxu0 0.0
      %484 = vmatprep.subr.mxu0 0.0
      %485 = vmatpush1.msra.mxu0 0.0
      %486 = vmatprep.subr.mxu0 0.0
      %487 = vmatpush1.msra.mxu0 0.0
      %488 = vmatprep.subr.mxu0 0.0
      %489 = vmatpush1.msra.mxu0 0.0
      %490 = vmatprep.subr.mxu0 0.0
      %491 = vmatpush1.msra.mxu0 0.0
      %492 = vmatprep.subr.mxu0 0.0
      %493 = vmatpush1.msra.mxu0 0.0
      %494 = vmatprep.subr.mxu0 0.0
      %495 = vmatpush1.msra.mxu0 0.0
      %496 = vmatprep.subr.mxu0 0.0
      %497 = vmatpush1.msra.mxu0 0.0
      %498 = vmatprep.subr.mxu0 0.0
      %499 = vmatpush1.msra.mxu0 0.0
      %500 = vmatprep.mubr.f32.mxu0 0.0
      %501 = vmatmul.mubr.f32.gmra.mrb[0].mxu0 %v413
      %v502 = vpop.f32.mrb[0].mxu0
      %v503 = vadd.f32 %v409, %v502
      %v504 = vpop.f32.mrb[0].mxu0
      %505 = vmatprep.mubr.f32.mxu0 0.0
      %506 = vmatmul.mubr.f32.gmra.mrb[0].mxu0 %v416
      %v507 = vpop.f32.mrb[0].mxu0
      %v508 = vadd.f32 %v409, %v507
      %v509 = vpop.f32.mrb[0].mxu0
      %510 = vmatprep.mubr.f32.mxu0 0.0
      %511 = vmatmul.mubr.f32.gmra.mrb[0].mxu0 %v419
      %v512 = vpop.f32.mrb[0].mxu0
      %v513 = vadd.f32 %v409, %v512
      %v514 = vpop.f32.mrb[0].mxu0
      %515 = vmatprep.mubr.f32.mxu0 0.0
      %516 = vmatmul.mubr.f32.gmra.mrb[0].mxu0 %v422
      %v517 = vpop.f32.mrb[0].mxu0
      %v518 = vadd.f32 %v409, %v517
      %v519 = vpop.f32.mrb[0].mxu0
      %520 = vmatprep.mubr.f32.mxu0 0.0
      %521 = vmatmul.mubr.f32.gmra.mrb[0].mxu0 %v425
      %v522 = vpop.f32.mrb[0].mxu0
      %v523 = vadd.f32 %v409, %v522
      %v524 = vpop.f32.mrb[0].mxu0
      %525 = vmatprep.mubr.f32.mxu0 0.0
      %526 = vmatmul.mubr.f32.gmra.mrb[0].mxu0 %v428
      %v527 = vpop.f32.mrb[0].mxu0
      %v528 = vadd.f32 %v409, %v527
      %v529 = vpop.f32.mrb[0].mxu0
      %530 = vmatprep.mubr.f32.mxu0 0.0
      %531 = vmatmul.mubr.f32.gmra.mrb[0].mxu0 %v431
      %v532 = vpop.f32.mrb[0].mxu0
      %v533 = vadd.f32 %v409, %v532
      %v534 = vpop.f32.mrb[0].mxu0
      %535 = vmatprep.mubr.f32.mxu0 0.0
      %536 = vmatmul.mubr.f32.gmra.mrb[0].mxu0 %v434
      %v537 = vpop.f32.mrb[0].mxu0
      %v538 = vadd.f32 %v409, %v537
      %v539 = vpop.f32.mrb[0].mxu0
      %540 = vdwg.mxu0
      %v541 = vld [vmem:[%s6] sm:$0xff]
      %v542 = vld [vmem:[%s6 + $0x8] sm:$0xff]
      %v543 = vld [vmem:[%s7] sm:$0x1]
      %v545 = vlaneseq
      %v546 = vshrl.u32 %v545, 7
      %v547 = vsub.s32 0, %v546
      %v548 = vrot.slane %v543, %v547
      %v551 = vsel %vm411, %v392, 0
      %v554 = vsel %vm411, %v393, 0
      %v557 = vsel %vm411, %v394, 0
      %v560 = vsel %vm411, %v395, 0
      %v563 = vsel %vm411, %v396, 0
      %v566 = vsel %vm411, %v397, 0
      %v569 = vsel %vm411, %v398, 0
      %v572 = vsel %vm411, %v399, 0
      %574 = vmatprep.subr.mxu0 0.0
      %575 = vmatpush1.msra.mxu0 %v541
      %576 = vmatprep.subr.mxu0 0.0
      %577 = vmatpush1.msra.mxu0 %v542
      %578 = vmatprep.subr.mxu0 0.0
      %579 = vmatpush1.msra.mxu0 0.0
      %580 = vmatprep.subr.mxu0 0.0
      %581 = vmatpush1.msra.mxu0 0.0
      %582 = vmatprep.subr.mxu0 0.0
      %583 = vmatpush1.msra.mxu0 0.0
      %584 = vmatprep.subr.mxu0 0.0
      %585 = vmatpush1.msra.mxu0 0.0
      %586 = vmatprep.subr.mxu0 0.0
      %587 = vmatpush1.msra.mxu0 0.0
      %588 = vmatprep.subr.mxu0 0.0
      %589 = vmatpush1.msra.mxu0 0.0
      %590 = vmatprep.subr.mxu0 0.0
      %591 = vmatpush1.msra.mxu0 0.0
      %592 = vmatprep.subr.mxu0 0.0
      %593 = vmatpush1.msra.mxu0 0.0
      %594 = vmatprep.subr.mxu0 0.0
      %595 = vmatpush1.msra.mxu0 0.0
      %596 = vmatprep.subr.mxu0 0.0
      %597 = vmatpush1.msra.mxu0 0.0
      %598 = vmatprep.subr.mxu0 0.0
      %599 = vmatpush1.msra.mxu0 0.0
      %600 = vmatprep.subr.mxu0 0.0
      %601 = vmatpush1.msra.mxu0 0.0
      %602 = vmatprep.subr.mxu0 0.0
      %603 = vmatpush1.msra.mxu0 0.0
      %604 = vmatprep.subr.mxu0 0.0
      %605 = vmatpush1.msra.mxu0 0.0
      %606 = vmatprep.subr.mxu0 0.0
      %607 = vmatpush1.msra.mxu0 0.0
      %608 = vmatprep.subr.mxu0 0.0
      %609 = vmatpush1.msra.mxu0 0.0
      %610 = vmatprep.subr.mxu0 0.0
      %611 = vmatpush1.msra.mxu0 0.0
      %612 = vmatprep.subr.mxu0 0.0
      %613 = vmatpush1.msra.mxu0 0.0
      %614 = vmatprep.subr.mxu0 0.0
      %615 = vmatpush1.msra.mxu0 0.0
      %616 = vmatprep.subr.mxu0 0.0
      %617 = vmatpush1.msra.mxu0 0.0
      %618 = vmatprep.subr.mxu0 0.0
      %619 = vmatpush1.msra.mxu0 0.0
      %620 = vmatprep.subr.mxu0 0.0
      %621 = vmatpush1.msra.mxu0 0.0
      %622 = vmatprep.subr.mxu0 0.0
      %623 = vmatpush1.msra.mxu0 0.0
      %624 = vmatprep.subr.mxu0 0.0
      %625 = vmatpush1.msra.mxu0 0.0
      %626 = vmatprep.subr.mxu0 0.0
      %627 = vmatpush1.msra.mxu0 0.0
      %628 = vmatprep.subr.mxu0 0.0
      %629 = vmatpush1.msra.mxu0 0.0
      %630 = vmatprep.subr.mxu0 0.0
      %631 = vmatpush1.msra.mxu0 0.0
      %632 = vmatprep.subr.mxu0 0.0
      %633 = vmatpush1.msra.mxu0 0.0
      %634 = vmatprep.subr.mxu0 0.0
      %635 = vmatpush1.msra.mxu0 0.0
      %636 = vmatprep.subr.mxu0 0.0
      %637 = vmatpush1.msra.mxu0 0.0
      %638 = vmatprep.mubr.f32.mxu0 0.0
      %639 = vmatmul.mubr.f32.gmra.mrb[0].mxu0 %v551
      %v640 = vpop.f32.mrb[0].mxu0
      %v641 = vadd.f32 %v548, %v640
      %v642 = vpop.f32.mrb[0].mxu0
      %643 = vmatprep.mubr.f32.mxu0 0.0
      %644 = vmatmul.mubr.f32.gmra.mrb[0].mxu0 %v554
      %v645 = vpop.f32.mrb[0].mxu0
      %v646 = vadd.f32 %v548, %v645
      %v647 = vpop.f32.mrb[0].mxu0
      %648 = vmatprep.mubr.f32.mxu0 0.0
      %649 = vmatmul.mubr.f32.gmra.mrb[0].mxu0 %v557
      %v650 = vpop.f32.mrb[0].mxu0
      %v651 = vadd.f32 %v548, %v650
      %v652 = vpop.f32.mrb[0].mxu0
      %653 = vmatprep.mubr.f32.mxu0 0.0
      %654 = vmatmul.mubr.f32.gmra.mrb[0].mxu0 %v560
      %v655 = vpop.f32.mrb[0].mxu0
      %v656 = vadd.f32 %v548, %v655
      %v657 = vpop.f32.mrb[0].mxu0
      %658 = vmatprep.mubr.f32.mxu0 0.0
      %659 = vmatmul.mubr.f32.gmra.mrb[0].mxu0 %v563
      %v660 = vpop.f32.mrb[0].mxu0
      %v661 = vadd.f32 %v548, %v660
      %v662 = vpop.f32.mrb[0].mxu0
      %663 = vmatprep.mubr.f32.mxu0 0.0
      %664 = vmatmul.mubr.f32.gmra.mrb[0].mxu0 %v566
      %v665 = vpop.f32.mrb[0].mxu0
      %v666 = vadd.f32 %v548, %v665
      %v667 = vpop.f32.mrb[0].mxu0
      %668 = vmatprep.mubr.f32.mxu0 0.0
      %669 = vmatmul.mubr.f32.gmra.mrb[0].mxu0 %v569
      %v670 = vpop.f32.mrb[0].mxu0
      %v671 = vadd.f32 %v548, %v670
      %v672 = vpop.f32.mrb[0].mxu0
      %673 = vmatprep.mubr.f32.mxu0 0.0
      %674 = vmatmul.mubr.f32.gmra.mrb[0].mxu0 %v572
      %v675 = vpop.f32.mrb[0].mxu0
      %v676 = vadd.f32 %v548, %v675
      %v677 = vpop.f32.mrb[0].mxu0
      %678 = vdwg.mxu0
      %v679 = vlaneseq
      %v680 = vand.u32 %v679, 127
      %vm681 = vcmp.lt.s32.totalorder %v680, 44
      %v682 = vmul.f32 %v382, 0.5
      %v683 = vmul.f32 %v383, 0.5
      %v685 = vsel %vm411, %v682, 0
      %v688 = vsel %vm411, %v683, 0
      %690 = vmatprep.subr.mxu0 0.0
      %691 = vmatpush1.msra.mxu0 %v400
      %692 = vmatprep.subr.mxu0 0.0
      %693 = vmatpush1.msra.mxu0 %v401
      %694 = vmatprep.subr.mxu0 0.0
      %695 = vmatpush1.msra.mxu0 0.0
      %696 = vmatprep.subr.mxu0 0.0
      %697 = vmatpush1.msra.mxu0 0.0
      %698 = vmatprep.subr.mxu0 0.0
      %699 = vmatpush1.msra.mxu0 0.0
      %700 = vmatprep.subr.mxu0 0.0
      %701 = vmatpush1.msra.mxu0 0.0
      %702 = vmatprep.subr.mxu0 0.0
      %703 = vmatpush1.msra.mxu0 0.0
      %704 = vmatprep.subr.mxu0 0.0
      %705 = vmatpush1.msra.mxu0 0.0
      %706 = vmatprep.subr.mxu0 0.0
      %707 = vmatpush1.msra.mxu0 0.0
      %708 = vmatprep.subr.mxu0 0.0
      %709 = vmatpush1.msra.mxu0 0.0
      %710 = vmatprep.subr.mxu0 0.0
      %711 = vmatpush1.msra.mxu0 0.0
      %712 = vmatprep.subr.mxu0 0.0
      %713 = vmatpush1.msra.mxu0 0.0
      %714 = vmatprep.subr.mxu0 0.0
      %715 = vmatpush1.msra.mxu0 0.0
      %716 = vmatprep.subr.mxu0 0.0
      %717 = vmatpush1.msra.mxu0 0.0
      %718 = vmatprep.subr.mxu0 0.0
      %719 = vmatpush1.msra.mxu0 0.0
      %720 = vmatprep.subr.mxu0 0.0
      %721 = vmatpush1.msra.mxu0 0.0
      %722 = vmatprep.subr.mxu0 0.0
      %723 = vmatpush1.msra.mxu0 0.0
      %724 = vmatprep.subr.mxu0 0.0
      %725 = vmatpush1.msra.mxu0 0.0
      %726 = vmatprep.subr.mxu0 0.0
      %727 = vmatpush1.msra.mxu0 0.0
      %728 = vmatprep.subr.mxu0 0.0
      %729 = vmatpush1.msra.mxu0 0.0
      %730 = vmatprep.subr.mxu0 0.0
      %731 = vmatpush1.msra.mxu0 0.0
      %732 = vmatprep.subr.mxu0 0.0
      %733 = vmatpush1.msra.mxu0 0.0
      %734 = vmatprep.subr.mxu0 0.0
      %735 = vmatpush1.msra.mxu0 0.0
      %736 = vmatprep.subr.mxu0 0.0
      %737 = vmatpush1.msra.mxu0 0.0
      %738 = vmatprep.subr.mxu0 0.0
      %739 = vmatpush1.msra.mxu0 0.0
      %740 = vmatprep.subr.mxu0 0.0
      %741 = vmatpush1.msra.mxu0 0.0
      %742 = vmatprep.subr.mxu0 0.0
      %743 = vmatpush1.msra.mxu0 0.0
      %744 = vmatprep.subr.mxu0 0.0
      %745 = vmatpush1.msra.mxu0 0.0
      %746 = vmatprep.subr.mxu0 0.0
      %747 = vmatpush1.msra.mxu0 0.0
      %748 = vmatprep.subr.mxu0 0.0
      %749 = vmatpush1.msra.mxu0 0.0
      %750 = vmatprep.subr.mxu0 0.0
      %751 = vmatpush1.msra.mxu0 0.0
      %752 = vmatprep.subr.mxu0 0.0
      %753 = vmatpush1.msra.mxu0 0.0
      %754 = vmatprep.mubr.f32.mxu0 0.0
      %755 = vmatmul.mubr.f32.gmra.mrb[0].mxu0 %v685
      %v756 = vpop.f32.mrb[0].mxu0
      %v757 = vadd.f32 0.0, %v756
      %v758 = vpop.f32.mrb[0].mxu0
      %759 = vmatprep.mubr.f32.mxu0 0.0
      %760 = vmatmul.mubr.f32.gmra.mrb[0].mxu0 %v688
      %v761 = vpop.f32.mrb[0].mxu0
      %v762 = vadd.f32 0.0, %v761
      %v763 = vpop.f32.mrb[0].mxu0
      %764 = vdwg.mxu0
      %v765 = vmul.f32 %v382, %v382
      %v766 = vmul.f32 %v383, %v383
      %v767 = vsel %vm411, %v765, 0.0
      %768 = vadd.xlane.f32.xlu0 %v767
      %v769 = vpop.xlane.xlu0 %768
      %v770 = vsel %vm411, %v766, 0.0
      %771 = vadd.xlane.f32.xlu0 %v770
      %v772 = vpop.xlane.xlu0 %771
      %v773 = vmul.f32 %v769, 0.125
      %v774 = vmul.f32 %v772, 0.125
      %v775 = vsel %vm681, 1, 0
      %vm776 = vcmp.eq.s32.totalorder %v775, 1
      %v777 = vsel %vm776, %v757, -inf
      %v778 = vsel %vm776, %v762, -inf
      %779 = vmax.xlane.f32.xlu0 %v777
      %v780 = vpop.xlane.xlu0 %779
      %781 = vmax.xlane.f32.xlu0 %v778
      %v782 = vpop.xlane.xlu0 %781
      %v783 = vsub.f32 %v757, %v773
      %v784 = vsub.f32 %v762, %v774
      %v785 = vsub.f32 %v783, %v780
      %v786 = vsub.f32 %v784, %v782
      %v787 = vmul.f32 %v785, 1.442695
      %v788 = vpow.pop %v787
      %v789 = vmul.f32 %v786, 1.442695
      %v790 = vpow.pop %v789
      %v791 = vadd.f32 %v788, 0.0001
      %v792 = vadd.f32 %v790, 0.0001
      %v793 = vmul.f32 %v791, 0.15075567
      %v794 = vmul.f32 %v792, 0.15075567
      %v795 = vsel %vm776, %v793, 0.0
      %v796 = vsel %vm776, %v794, 0.0
      %v797 = vmul.f32 %v503, 0.5
      %v798 = vmul.f32 %v508, 0.5
      %v799 = vmul.f32 %v513, 0.5
      %v800 = vmul.f32 %v518, 0.5
      %v801 = vmul.f32 %v523, 0.5
      %v802 = vmul.f32 %v528, 0.5
      %v803 = vmul.f32 %v533, 0.5
      %v804 = vmul.f32 %v538, 0.5
      %v806 = vsel %vm411, %v797, 0
      %v809 = vsel %vm411, %v798, 0
      %v812 = vsel %vm411, %v799, 0
      %v815 = vsel %vm411, %v800, 0
      %v818 = vsel %vm411, %v801, 0
      %v821 = vsel %vm411, %v802, 0
      %v824 = vsel %vm411, %v803, 0
      %v827 = vsel %vm411, %v804, 0
      %829 = vmatprep.subr.mxu0 0.0
      %830 = vmatpush1.msra.mxu0 %v400
      %831 = vmatprep.subr.mxu0 0.0
      %832 = vmatpush1.msra.mxu0 %v401
      %833 = vmatprep.subr.mxu0 0.0
      %834 = vmatpush1.msra.mxu0 0.0
      %835 = vmatprep.subr.mxu0 0.0
      %836 = vmatpush1.msra.mxu0 0.0
      %837 = vmatprep.subr.mxu0 0.0
      %838 = vmatpush1.msra.mxu0 0.0
      %839 = vmatprep.subr.mxu0 0.0
      %840 = vmatpush1.msra.mxu0 0.0
      %841 = vmatprep.subr.mxu0 0.0
      %842 = vmatpush1.msra.mxu0 0.0
      %843 = vmatprep.subr.mxu0 0.0
      %844 = vmatpush1.msra.mxu0 0.0
      %845 = vmatprep.subr.mxu0 0.0
      %846 = vmatpush1.msra.mxu0 0.0
      %847 = vmatprep.subr.mxu0 0.0
      %848 = vmatpush1.msra.mxu0 0.0
      %849 = vmatprep.subr.mxu0 0.0
      %850 = vmatpush1.msra.mxu0 0.0
      %851 = vmatprep.subr.mxu0 0.0
      %852 = vmatpush1.msra.mxu0 0.0
      %853 = vmatprep.subr.mxu0 0.0
      %854 = vmatpush1.msra.mxu0 0.0
      %855 = vmatprep.subr.mxu0 0.0
      %856 = vmatpush1.msra.mxu0 0.0
      %857 = vmatprep.subr.mxu0 0.0
      %858 = vmatpush1.msra.mxu0 0.0
      %859 = vmatprep.subr.mxu0 0.0
      %860 = vmatpush1.msra.mxu0 0.0
      %861 = vmatprep.subr.mxu0 0.0
      %862 = vmatpush1.msra.mxu0 0.0
      %863 = vmatprep.subr.mxu0 0.0
      %864 = vmatpush1.msra.mxu0 0.0
      %865 = vmatprep.subr.mxu0 0.0
      %866 = vmatpush1.msra.mxu0 0.0
      %867 = vmatprep.subr.mxu0 0.0
      %868 = vmatpush1.msra.mxu0 0.0
      %869 = vmatprep.subr.mxu0 0.0
      %870 = vmatpush1.msra.mxu0 0.0
      %871 = vmatprep.subr.mxu0 0.0
      %872 = vmatpush1.msra.mxu0 0.0
      %873 = vmatprep.subr.mxu0 0.0
      %874 = vmatpush1.msra.mxu0 0.0
      %875 = vmatprep.subr.mxu0 0.0
      %876 = vmatpush1.msra.mxu0 0.0
      %877 = vmatprep.subr.mxu0 0.0
      %878 = vmatpush1.msra.mxu0 0.0
      %879 = vmatprep.subr.mxu0 0.0
      %880 = vmatpush1.msra.mxu0 0.0
      %881 = vmatprep.subr.mxu0 0.0
      %882 = vmatpush1.msra.mxu0 0.0
      %883 = vmatprep.subr.mxu0 0.0
      %884 = vmatpush1.msra.mxu0 0.0
      %885 = vmatprep.subr.mxu0 0.0
      %886 = vmatpush1.msra.mxu0 0.0
      %887 = vmatprep.subr.mxu0 0.0
      %888 = vmatpush1.msra.mxu0 0.0
      %889 = vmatprep.subr.mxu0 0.0
      %890 = vmatpush1.msra.mxu0 0.0
      %891 = vmatprep.subr.mxu0 0.0
      %892 = vmatpush1.msra.mxu0 0.0
      %893 = vmatprep.mubr.f32.mxu0 0.0
      %894 = vmatmul.mubr.f32.gmra.mrb[0].mxu0 %v806
      %v895 = vpop.f32.mrb[0].mxu0
      %v896 = vadd.f32 0.0, %v895
      %v897 = vpop.f32.mrb[0].mxu0
      %898 = vmatprep.mubr.f32.mxu0 0.0
      %899 = vmatmul.mubr.f32.gmra.mrb[0].mxu0 %v809
      %v900 = vpop.f32.mrb[0].mxu0
      %v901 = vadd.f32 0.0, %v900
      %v902 = vpop.f32.mrb[0].mxu0
      %903 = vmatprep.mubr.f32.mxu0 0.0
      %904 = vmatmul.mubr.f32.gmra.mrb[0].mxu0 %v812
      %v905 = vpop.f32.mrb[0].mxu0
      %v906 = vadd.f32 0.0, %v905
      %v907 = vpop.f32.mrb[0].mxu0
      %908 = vmatprep.mubr.f32.mxu0 0.0
      %909 = vmatmul.mubr.f32.gmra.mrb[0].mxu0 %v815
      %v910 = vpop.f32.mrb[0].mxu0
      %v911 = vadd.f32 0.0, %v910
      %v912 = vpop.f32.mrb[0].mxu0
      %913 = vmatprep.mubr.f32.mxu0 0.0
      %914 = vmatmul.mubr.f32.gmra.mrb[0].mxu0 %v818
      %v915 = vpop.f32.mrb[0].mxu0
      %v916 = vadd.f32 0.0, %v915
      %v917 = vpop.f32.mrb[0].mxu0
      %918 = vmatprep.mubr.f32.mxu0 0.0
      %919 = vmatmul.mubr.f32.gmra.mrb[0].mxu0 %v821
      %v920 = vpop.f32.mrb[0].mxu0
      %v921 = vadd.f32 0.0, %v920
      %v922 = vpop.f32.mrb[0].mxu0
      %923 = vmatprep.mubr.f32.mxu0 0.0
      %924 = vmatmul.mubr.f32.gmra.mrb[0].mxu0 %v824
      %v925 = vpop.f32.mrb[0].mxu0
      %v926 = vadd.f32 0.0, %v925
      %v927 = vpop.f32.mrb[0].mxu0
      %928 = vmatprep.mubr.f32.mxu0 0.0
      %929 = vmatmul.mubr.f32.gmra.mrb[0].mxu0 %v827
      %v930 = vpop.f32.mrb[0].mxu0
      %v931 = vadd.f32 0.0, %v930
      %v932 = vpop.f32.mrb[0].mxu0
      %933 = vdwg.mxu0
      %v934 = vmul.f32 %v503, %v503
      %v935 = vmul.f32 %v508, %v508
      %v936 = vmul.f32 %v513, %v513
      %v937 = vmul.f32 %v518, %v518
      %v938 = vmul.f32 %v523, %v523
      %v939 = vmul.f32 %v528, %v528
      %v940 = vmul.f32 %v533, %v533
      %v941 = vmul.f32 %v538, %v538
      %v942 = vsel %vm411, %v934, 0.0
      %943 = vadd.xlane.f32.xlu0 %v942
      %v944 = vpop.xlane.xlu0 %943
      %v945 = vsel %vm411, %v935, 0.0
      %946 = vadd.xlane.f32.xlu0 %v945
      %v947 = vpop.xlane.xlu0 %946
      %v948 = vsel %vm411, %v936, 0.0
      %949 = vadd.xlane.f32.xlu0 %v948
      %v950 = vpop.xlane.xlu0 %949
      %v951 = vsel %vm411, %v937, 0.0
      %952 = vadd.xlane.f32.xlu0 %v951
      %v953 = vpop.xlane.xlu0 %952
      %v954 = vsel %vm411, %v938, 0.0
      %955 = vadd.xlane.f32.xlu0 %v954
      %v956 = vpop.xlane.xlu0 %955
      %v957 = vsel %vm411, %v939, 0.0
      %958 = vadd.xlane.f32.xlu0 %v957
      %v959 = vpop.xlane.xlu0 %958
      %v960 = vsel %vm411, %v940, 0.0
      %961 = vadd.xlane.f32.xlu0 %v960
      %v962 = vpop.xlane.xlu0 %961
      %v963 = vsel %vm411, %v941, 0.0
      %964 = vadd.xlane.f32.xlu0 %v963
      %v965 = vpop.xlane.xlu0 %964
      %v966 = vmul.f32 %v944, 0.125
      %v967 = vmul.f32 %v947, 0.125
      %v968 = vmul.f32 %v950, 0.125
      %v969 = vmul.f32 %v953, 0.125
      %v970 = vmul.f32 %v956, 0.125
      %v971 = vmul.f32 %v959, 0.125
      %v972 = vmul.f32 %v962, 0.125
      %v973 = vmul.f32 %v965, 0.125
      %v974 = vsel %vm776, %v896, -inf
      %v975 = vsel %vm776, %v901, -inf
      %v976 = vsel %vm776, %v906, -inf
      %v977 = vsel %vm776, %v911, -inf
      %v978 = vsel %vm776, %v916, -inf
      %v979 = vsel %vm776, %v921, -inf
      %v980 = vsel %vm776, %v926, -inf
      %v981 = vsel %vm776, %v931, -inf
      %v982 = vmax.f32 %v974, %v978
      %v983 = vmax.f32 %v975, %v979
      %v984 = vmax.f32 %v976, %v980
      %v985 = vmax.f32 %v977, %v981
      %v986 = vmax.f32 %v982, %v983
      %v987 = vmax.f32 %v984, %v985
      %v988 = vmax.f32 %v986, %v987
      %989 = vmax.xlane.f32.xlu0 %v988
      %v990 = vpop.xlane.xlu0 %989
      %v991 = vrot.slane %v990, 4
      %v992 = vmax.f32 %v990, %v991
      %v993 = vrot.slane %v992, 2
      %v994 = vmax.f32 %v992, %v993
      %v995 = vrot.slane %v994, 1
      %v996 = vmax.f32 %v994, %v995
      %s997 = vtos %v996
      %v998 = vsub.f32 %v896, %v966
      %v999 = vsub.f32 %v901, %v967
      %v1000 = vsub.f32 %v906, %v968
      %v1001 = vsub.f32 %v911, %v969
      %v1002 = vsub.f32 %v916, %v970
      %v1003 = vsub.f32 %v921, %v971
      %v1004 = vsub.f32 %v926, %v972
      %v1005 = vsub.f32 %v931, %v973
      %v1006 = vstv %s997
      %v1007 = vsub.f32 %v998, %v1006
      %v1008 = vsub.f32 %v999, %v1006
      %v1009 = vsub.f32 %v1000, %v1006
      %v1010 = vsub.f32 %v1001, %v1006
      %v1011 = vsub.f32 %v1002, %v1006
      %v1012 = vsub.f32 %v1003, %v1006
      %v1013 = vsub.f32 %v1004, %v1006
      %v1014 = vsub.f32 %v1005, %v1006
      %v1015 = vmul.f32 %v1007, 1.442695
      %v1016 = vpow.pop %v1015
      %v1017 = vmul.f32 %v1008, 1.442695
      %v1018 = vpow.pop %v1017
      %v1019 = vmul.f32 %v1009, 1.442695
      %v1020 = vpow.pop %v1019
      %v1021 = vmul.f32 %v1010, 1.442695
      %v1022 = vpow.pop %v1021
      %v1023 = vmul.f32 %v1011, 1.442695
      %v1024 = vpow.pop %v1023
      %v1025 = vmul.f32 %v1012, 1.442695
      %v1026 = vpow.pop %v1025
      %v1027 = vmul.f32 %v1013, 1.442695
      %v1028 = vpow.pop %v1027
      %v1029 = vmul.f32 %v1014, 1.442695
      %v1030 = vpow.pop %v1029
      %v1031 = vadd.f32 %v1016, 0.0001
      %v1032 = vadd.f32 %v1018, 0.0001
      %v1033 = vadd.f32 %v1020, 0.0001
      %v1034 = vadd.f32 %v1022, 0.0001
      %v1035 = vadd.f32 %v1024, 0.0001
      %v1036 = vadd.f32 %v1026, 0.0001
      %v1037 = vadd.f32 %v1028, 0.0001
      %v1038 = vadd.f32 %v1030, 0.0001
      %v1039 = vmul.f32 %v1031, 0.15075567
      %v1040 = vmul.f32 %v1032, 0.15075567
      %v1041 = vmul.f32 %v1033, 0.15075567
      %v1042 = vmul.f32 %v1034, 0.15075567
      %v1043 = vmul.f32 %v1035, 0.15075567
      %v1044 = vmul.f32 %v1036, 0.15075567
      %v1045 = vmul.f32 %v1037, 0.15075567
      %v1046 = vmul.f32 %v1038, 0.15075567
      %v1047 = vsel %vm776, %v1039, 0.0
      %v1048 = vsel %vm776, %v1040, 0.0
      %v1049 = vsel %vm776, %v1041, 0.0
      %v1050 = vsel %vm776, %v1042, 0.0
      %v1051 = vsel %vm776, %v1043, 0.0
      %v1052 = vsel %vm776, %v1044, 0.0
      %v1053 = vsel %vm776, %v1045, 0.0
      %v1054 = vsel %vm776, %v1046, 0.0
      %v1055 = vadd.f32 %v1047, %v1048
      %v1056 = vadd.f32 %v1055, %v1049
      %v1057 = vadd.f32 %v1056, %v1050
      %v1058 = vadd.f32 %v1057, %v1051
      %v1059 = vadd.f32 %v1058, %v1052
      %v1060 = vadd.f32 %v1059, %v1053
      %v1061 = vadd.f32 %v1060, %v1054
      %v1062 = vrot.slane %v1061, 4
      %v1063 = vadd.f32 %v1061, %v1062
      %v1064 = vrot.slane %v1063, 2
      %v1065 = vadd.f32 %v1063, %v1064
      %v1066 = vrot.slane %v1065, 1
      %v1067 = vadd.f32 %v1065, %v1066
      %v1068 = vmul.f32 %v795, %v1067
      %v1069 = vmul.f32 %v796, %v1067
      %1070 = vadd.xlane.f32.xlu0 %v1068
      %v1071 = vpop.xlane.xlu0 %1070
      %1072 = vadd.xlane.f32.xlu0 %v1069
      %v1073 = vpop.xlane.xlu0 %1072
      %v1074 = vrcp.pop %v1071
      %v1075 = vrcp.pop %v1073
      %1076 = vxpose.xlu0.b32.start [1/16] %v1047, 128
      %1077 = vxpose.xlu0.b32.cont [2/16] %v1048, 128
      %1078 = vxpose.xlu0.b32.cont [3/16] %v1049, 128
      %1079 = vxpose.xlu0.b32.cont [4/16] %v1050, 128
      %1080 = vxpose.xlu0.b32.cont [5/16] %v1051, 128
      %1081 = vxpose.xlu0.b32.cont [6/16] %v1052, 128
      %1082 = vxpose.xlu0.b32.cont [7/16] %v1053, 128
      %1083 = vxpose.xlu0.b32.cont [8/16] %v1054, 128
      %1084 = vxpose.xlu0.b32.cont [9/16] 0.0, 128
      %1085 = vxpose.xlu0.b32.cont [10/16] 0.0, 128
      %1086 = vxpose.xlu0.b32.cont [11/16] 0.0, 128
      %1087 = vxpose.xlu0.b32.cont [12/16] 0.0, 128
      %1088 = vxpose.xlu0.b32.cont [13/16] 0.0, 128
      %1089 = vxpose.xlu0.b32.cont [14/16] 0.0, 128
      %1090 = vxpose.xlu0.b32.cont [15/16] 0.0, 128
      %1091 = vxpose.xlu0.b32.end [16/16] 0.0, 128
      %v1092 = vpop.trf.xlu0
      %v1093 = vpop.trf.xlu0
      %v1094 = vpop.trf.xlu0
      %v1095 = vpop.trf.xlu0
      %v1096 = vpop.trf.xlu0
      %v1097 = vpop.trf.xlu0
      %v1098 = vpop.trf.xlu0
      %v1099 = vpop.trf.xlu0
      %v1100 = vpop.trf.xlu0
      %v1101 = vpop.trf.xlu0
      %v1102 = vpop.trf.xlu0
      %v1103 = vpop.trf.xlu0
      %v1104 = vpop.trf.xlu0
      %v1105 = vpop.trf.xlu0
      %v1106 = vpop.trf.xlu0
      %v1107 = vpop.trf.xlu0
      %vm1108 = vcmask 523264
      %v1110 = vsel %vm1108, %v1092, 0
      %v1113 = vsel %vm1108, %v1093, 0
      %v1116 = vsel %vm1108, %v1094, 0
      %v1119 = vsel %vm1108, %v1095, 0
      %v1122 = vsel %vm1108, %v1096, 0
      %v1125 = vsel %vm1108, %v1097, 0
      %v1128 = vsel %vm1108, %v1098, 0
      %v1131 = vsel %vm1108, %v1099, 0
      %v1134 = vsel %vm1108, %v1100, 0
      %v1137 = vsel %vm1108, %v1101, 0
      %v1140 = vsel %vm1108, %v1102, 0
      %v1143 = vsel %vm1108, %v1103, 0
      %v1146 = vsel %vm1108, %v1104, 0
      %v1149 = vsel %vm1108, %v1105, 0
      %v1152 = vsel %vm1108, %v1106, 0
      %v1155 = vsel %vm1108, %v1107, 0
      %1157 = vmatprep.subr.mxu0 0.0
      %1158 = vmatpush1.msra.mxu0 %v641
      %1159 = vmatprep.subr.mxu0 0.0
      %1160 = vmatpush1.msra.mxu0 %v646
      %1161 = vmatprep.subr.mxu0 0.0
      %1162 = vmatpush1.msra.mxu0 %v651
      %1163 = vmatprep.subr.mxu0 0.0
      %1164 = vmatpush1.msra.mxu0 %v656
      %1165 = vmatprep.subr.mxu0 0.0
      %1166 = vmatpush1.msra.mxu0 %v661
      %1167 = vmatprep.subr.mxu0 0.0
      %1168 = vmatpush1.msra.mxu0 %v666
      %1169 = vmatprep.subr.mxu0 0.0
      %1170 = vmatpush1.msra.mxu0 %v671
      %1171 = vmatprep.subr.mxu0 0.0
      %1172 = vmatpush1.msra.mxu0 %v676
      %1173 = vmatprep.subr.mxu0 0.0
      %1174 = vmatpush1.msra.mxu0 0.0
      %1175 = vmatprep.subr.mxu0 0.0
      %1176 = vmatpush1.msra.mxu0 0.0
      %1177 = vmatprep.subr.mxu0 0.0
      %1178 = vmatpush1.msra.mxu0 0.0
      %1179 = vmatprep.subr.mxu0 0.0
      %1180 = vmatpush1.msra.mxu0 0.0
      %1181 = vmatprep.subr.mxu0 0.0
      %1182 = vmatpush1.msra.mxu0 0.0
      %1183 = vmatprep.subr.mxu0 0.0
      %1184 = vmatpush1.msra.mxu0 0.0
      %1185 = vmatprep.subr.mxu0 0.0
      %1186 = vmatpush1.msra.mxu0 0.0
      %1187 = vmatprep.subr.mxu0 0.0
      %1188 = vmatpush1.msra.mxu0 0.0
      %1189 = vmatprep.subr.mxu0 0.0
      %1190 = vmatpush1.msra.mxu0 0.0
      %1191 = vmatprep.subr.mxu0 0.0
      %1192 = vmatpush1.msra.mxu0 0.0
      %1193 = vmatprep.subr.mxu0 0.0
      %1194 = vmatpush1.msra.mxu0 0.0
      %1195 = vmatprep.subr.mxu0 0.0
      %1196 = vmatpush1.msra.mxu0 0.0
      %1197 = vmatprep.subr.mxu0 0.0
      %1198 = vmatpush1.msra.mxu0 0.0
      %1199 = vmatprep.subr.mxu0 0.0
      %1200 = vmatpush1.msra.mxu0 0.0
      %1201 = vmatprep.subr.mxu0 0.0
      %1202 = vmatpush1.msra.mxu0 0.0
      %1203 = vmatprep.subr.mxu0 0.0
      %1204 = vmatpush1.msra.mxu0 0.0
      %1205 = vmatprep.subr.mxu0 0.0
      %1206 = vmatpush1.msra.mxu0 0.0
      %1207 = vmatprep.subr.mxu0 0.0
      %1208 = vmatpush1.msra.mxu0 0.0
      %1209 = vmatprep.subr.mxu0 0.0
      %1210 = vmatpush1.msra.mxu0 0.0
      %1211 = vmatprep.subr.mxu0 0.0
      %1212 = vmatpush1.msra.mxu0 0.0
      %1213 = vmatprep.subr.mxu0 0.0
      %1214 = vmatpush1.msra.mxu0 0.0
      %1215 = vmatprep.subr.mxu0 0.0
      %1216 = vmatpush1.msra.mxu0 0.0
      %1217 = vmatprep.subr.mxu0 0.0
      %1218 = vmatpush1.msra.mxu0 0.0
      %1219 = vmatprep.subr.mxu0 0.0
      %1220 = vmatpush1.msra.mxu0 0.0
      %1221 = vmatprep.mubr.f32.mxu0 0.0
      %1222 = vmatmul.mubr.f32.gmra.mrb[0].mxu0 %v1110
      %v1223 = vpop.f32.mrb[0].mxu0
      %v1224 = vadd.f32 0.0, %v1223
      %v1225 = vpop.f32.mrb[0].mxu0
      %1226 = vmatprep.mubr.f32.mxu0 0.0
      %1227 = vmatmul.mubr.f32.gmra.mrb[0].mxu0 %v1113
      %v1228 = vpop.f32.mrb[0].mxu0
      %v1229 = vadd.f32 0.0, %v1228
      %v1230 = vpop.f32.mrb[0].mxu0
      %1231 = vmatprep.mubr.f32.mxu0 0.0
      %1232 = vmatmul.mubr.f32.gmra.mrb[0].mxu0 %v1116
      %v1233 = vpop.f32.mrb[0].mxu0
      %v1234 = vadd.f32 0.0, %v1233
      %v1235 = vpop.f32.mrb[0].mxu0
      %1236 = vmatprep.mubr.f32.mxu0 0.0
      %1237 = vmatmul.mubr.f32.gmra.mrb[0].mxu0 %v1119
      %v1238 = vpop.f32.mrb[0].mxu0
      %v1239 = vadd.f32 0.0, %v1238
      %v1240 = vpop.f32.mrb[0].mxu0
      %1241 = vmatprep.mubr.f32.mxu0 0.0
      %1242 = vmatmul.mubr.f32.gmra.mrb[0].mxu0 %v1122
      %v1243 = vpop.f32.mrb[0].mxu0
      %v1244 = vadd.f32 0.0, %v1243
      %v1245 = vpop.f32.mrb[0].mxu0
      %1246 = vmatprep.mubr.f32.mxu0 0.0
      %1247 = vmatmul.mubr.f32.gmra.mrb[0].mxu0 %v1125
      %v1248 = vpop.f32.mrb[0].mxu0
      %v1249 = vadd.f32 0.0, %v1248
      %v1250 = vpop.f32.mrb[0].mxu0
      %1251 = vmatprep.mubr.f32.mxu0 0.0
      %1252 = vmatmul.mubr.f32.gmra.mrb[0].mxu0 %v1128
      %v1253 = vpop.f32.mrb[0].mxu0
      %v1254 = vadd.f32 0.0, %v1253
      %v1255 = vpop.f32.mrb[0].mxu0
      %1256 = vmatprep.mubr.f32.mxu0 0.0
      %1257 = vmatmul.mubr.f32.gmra.mrb[0].mxu0 %v1131
      %v1258 = vpop.f32.mrb[0].mxu0
      %v1259 = vadd.f32 0.0, %v1258
      %v1260 = vpop.f32.mrb[0].mxu0
      %1261 = vmatprep.mubr.f32.mxu0 0.0
      %1262 = vmatmul.mubr.f32.gmra.mrb[0].mxu0 %v1134
      %v1263 = vpop.f32.mrb[0].mxu0
      %v1264 = vadd.f32 0.0, %v1263
      %v1265 = vpop.f32.mrb[0].mxu0
      %1266 = vmatprep.mubr.f32.mxu0 0.0
      %1267 = vmatmul.mubr.f32.gmra.mrb[0].mxu0 %v1137
      %v1268 = vpop.f32.mrb[0].mxu0
      %v1269 = vadd.f32 0.0, %v1268
      %v1270 = vpop.f32.mrb[0].mxu0
      %1271 = vmatprep.mubr.f32.mxu0 0.0
      %1272 = vmatmul.mubr.f32.gmra.mrb[0].mxu0 %v1140
      %v1273 = vpop.f32.mrb[0].mxu0
      %v1274 = vadd.f32 0.0, %v1273
      %v1275 = vpop.f32.mrb[0].mxu0
      %1276 = vmatprep.mubr.f32.mxu0 0.0
      %1277 = vmatmul.mubr.f32.gmra.mrb[0].mxu0 %v1143
      %v1278 = vpop.f32.mrb[0].mxu0
      %v1279 = vadd.f32 0.0, %v1278
      %v1280 = vpop.f32.mrb[0].mxu0
      %1281 = vmatprep.mubr.f32.mxu0 0.0
      %1282 = vmatmul.mubr.f32.gmra.mrb[0].mxu0 %v1146
      %v1283 = vpop.f32.mrb[0].mxu0
      %v1284 = vadd.f32 0.0, %v1283
      %v1285 = vpop.f32.mrb[0].mxu0
      %1286 = vmatprep.mubr.f32.mxu0 0.0
      %1287 = vmatmul.mubr.f32.gmra.mrb[0].mxu0 %v1149
      %v1288 = vpop.f32.mrb[0].mxu0
      %v1289 = vadd.f32 0.0, %v1288
      %v1290 = vpop.f32.mrb[0].mxu0
      %1291 = vmatprep.mubr.f32.mxu0 0.0
      %1292 = vmatmul.mubr.f32.gmra.mrb[0].mxu0 %v1152
      %v1293 = vpop.f32.mrb[0].mxu0
      %v1294 = vadd.f32 0.0, %v1293
      %v1295 = vpop.f32.mrb[0].mxu0
      %1296 = vmatprep.mubr.f32.mxu0 0.0
      %1297 = vmatmul.mubr.f32.gmra.mrb[0].mxu0 %v1155
      %v1298 = vpop.f32.mrb[0].mxu0
      %v1299 = vadd.f32 0.0, %v1298
      %v1300 = vpop.f32.mrb[0].mxu0
      %1301 = vdwg.mxu0
      %1302 = vmatprep.subr.mxu0 0.0
      %1303 = vmatpush1.msra.mxu0 %v1224
      %1304 = vmatprep.subr.mxu0 0.0
      %1305 = vmatpush1.msra.mxu0 %v1229
      %1306 = vmatprep.subr.mxu0 0.0
      %1307 = vmatpush1.msra.mxu0 %v1234
      %1308 = vmatprep.subr.mxu0 0.0
      %1309 = vmatpush1.msra.mxu0 %v1239
      %1310 = vmatprep.subr.mxu0 0.0
      %1311 = vmatpush1.msra.mxu0 %v1244
      %1312 = vmatprep.subr.mxu0 0.0
      %1313 = vmatpush1.msra.mxu0 %v1249
      %1314 = vmatprep.subr.mxu0 0.0
      %1315 = vmatpush1.msra.mxu0 %v1254
      %1316 = vmatprep.subr.mxu0 0.0
      %1317 = vmatpush1.msra.mxu0 %v1259
      %1318 = vmatprep.subr.mxu0 0.0
      %1319 = vmatpush1.msra.mxu0 %v1264
      %1320 = vmatprep.subr.mxu0 0.0
      %1321 = vmatpush1.msra.mxu0 %v1269
      %1322 = vmatprep.subr.mxu0 0.0
      %1323 = vmatpush1.msra.mxu0 %v1274
      %1324 = vmatprep.subr.mxu0 0.0
      %1325 = vmatpush1.msra.mxu0 %v1279
      %1326 = vmatprep.subr.mxu0 0.0
      %1327 = vmatpush1.msra.mxu0 %v1284
      %1328 = vmatprep.subr.mxu0 0.0
      %1329 = vmatpush1.msra.mxu0 %v1289
      %1330 = vmatprep.subr.mxu0 0.0
      %1331 = vmatpush1.msra.mxu0 %v1294
      %1332 = vmatprep.subr.mxu0 0.0
      %1333 = vmatpush1.msra.mxu0 %v1299
      %1334 = vmatprep.subr.mxu0 0.0
      %1335 = vmatpush1.msra.mxu0 0.0
      %1336 = vmatprep.subr.mxu0 0.0
      %1337 = vmatpush1.msra.mxu0 0.0
      %1338 = vmatprep.subr.mxu0 0.0
      %1339 = vmatpush1.msra.mxu0 0.0
      %1340 = vmatprep.subr.mxu0 0.0
      %1341 = vmatpush1.msra.mxu0 0.0
      %1342 = vmatprep.subr.mxu0 0.0
      %1343 = vmatpush1.msra.mxu0 0.0
      %1344 = vmatprep.subr.mxu0 0.0
      %1345 = vmatpush1.msra.mxu0 0.0
      %1346 = vmatprep.subr.mxu0 0.0
      %1347 = vmatpush1.msra.mxu0 0.0
      %1348 = vmatprep.subr.mxu0 0.0
      %1349 = vmatpush1.msra.mxu0 0.0
      %1350 = vmatprep.subr.mxu0 0.0
      %1351 = vmatpush1.msra.mxu0 0.0
      %1352 = vmatprep.subr.mxu0 0.0
      %1353 = vmatpush1.msra.mxu0 0.0
      %1354 = vmatprep.subr.mxu0 0.0
      %1355 = vmatpush1.msra.mxu0 0.0
      %1356 = vmatprep.subr.mxu0 0.0
      %1357 = vmatpush1.msra.mxu0 0.0
      %1358 = vmatprep.subr.mxu0 0.0
      %1359 = vmatpush1.msra.mxu0 0.0
      %1360 = vmatprep.subr.mxu0 0.0
      %1361 = vmatpush1.msra.mxu0 0.0
      %1362 = vmatprep.subr.mxu0 0.0
      %1363 = vmatpush1.msra.mxu0 0.0
      %1364 = vmatprep.subr.mxu0 0.0
      %1365 = vmatpush1.msra.mxu0 0.0
      %1366 = vmatprep.mubr.f32.mxu0 0.0
      %1367 = vmatmul.mubr.f32.gmra.mrb[0].mxu0 %v795
      %v1368 = vpop.f32.mrb[0].mxu0
      %v1369 = vadd.f32 0.0, %v1368
      %v1370 = vpop.f32.mrb[0].mxu0
      %1371 = vmatprep.mubr.f32.mxu0 0.0
      %1372 = vmatmul.mubr.f32.gmra.mrb[0].mxu0 %v796
      %v1373 = vpop.f32.mrb[0].mxu0
      %v1374 = vadd.f32 0.0, %v1373
      %v1375 = vpop.f32.mrb[0].mxu0
      %1376 = vdwg.mxu0
      %v1377 = vmul.f32 %v1369, %v1074
      %v1378 = vmul.f32 %v1374, %v1075
      %1379 = vst.msk [vmem:[%s381] sm:$0xff] %vm411, %v1377
      %1380 = vst.msk [vmem:[%s381 + $0x8] sm:$0xff] %vm411, %v1378
      %p1381 = scmp.lt.s32.totalorder %s23, 1
      %s1382 = scalar_select %p1381, %s23, 1
      %p1383 = scmp.lt.s32.totalorder %s24, 3
      %s1384 = scalar_select %p1383, %s24, 3
      %s1385 = smul.addr %s1384, 2
      %s1386 = smul.addr %s1382, 8
      %s1387 = sadd.s32 %s1385, %s1386
      %s1388 = smul.addr %s1387, 8
      %s1389 = scalar_lea.vmem %s8, %s1388
      // Predicated region
      $region53: #{attention_forward.8} parent=51 // pred_check
        %p1390 = pneg %p236
      $region54: #{attention_forward.8} parent=51 // pred_check_branch
        %1392 = sbr.rel (%p1390) target = $region56
      $region55: #{attention_forward.8} parent=51 // pred_region
        _
      $region56: #{attention_forward.8} parent=51 // pred_fallthru
        _
    $region52: #{attention_forward.8} parent=5 // pred_fallthru
      _
    %p1393 = scmp.le.s32.totalorder 2, %s14
    // Predicated region
    $region57: #{attention_forward.8} parent=5 // pred_check
      %p1394 = pneg %p1393
    $region58: #{attention_forward.8} parent=5 // pred_check_branch
      %1396 = sbr.rel (%p1394) target = $region60
    $region59: #{attention_forward.8} parent=5 // pred_region
      %s1397 = ssub.s32 %s14, 2
      // Predicated region
      $region61: #{attention_forward.8} parent=59 // pred_check
        %p1398 = pneg %p242
      $region62: #{attention_forward.8} parent=59 // pred_check_branch
        %1400 = sbr.rel (%p1398) target = $region64
      $region63: #{attention_forward.8} parent=59 // pred_region
        %p1401 = scmp.lt.s32.totalorder %s25, 1
        %s1402 = scalar_select %p1401, %s25, 1
        %p1403 = scmp.lt.s32.totalorder %s26, 3
        %s1404 = scalar_select %p1403, %s26, 3
        %s1405 = smul.addr %s1404, 2
        %s1406 = smul.addr %s1402, 8
        %s1407 = sadd.s32 %s1405, %s1406
        %s1408 = smul.addr %s1407, 8
        %s1409 = scalar_lea.vmem %s8, %s1408
      $region64: #{attention_forward.8} parent=59 // pred_fallthru
        _
    $region60: #{attention_forward.8} parent=5 // pred_fallthru
      _
  $region6: #{attention_forward.8} parent=0 // loop_footer
    %s18 = sadd.s32 1, %s14
  $region7: #{attention_forward.8} parent=0 // loop_footer_branch
    %13 = sbr.rel target = $region3
  $region8: #{attention_forward.8} parent=0 // loop_exit
    _

// kernel: attention_forward.7
$region0: #{attention_forward.7}
  #allocation0 [shape = 'u32[]', space=smem, size = 0x4, offset = 0x4, fixed_abs, tag = 'smem constant byte address 0x4 - core index']
  #allocation1 [shape = 'u32[144,128]{1,0:T(1,128)}', space=vmem, size = 0x12000, scoped, tag = 'internal scratch']
  %s0 = inlined_call_operand.vmem [shape: f32[2,4,16,16], index: 0, kind: input, shape index: {}]
  %s1 = inlined_call_operand.vmem [shape: f32[2,4,16,16], index: 1, kind: input, shape index: {}]
  %s2 = inlined_call_operand.vmem [shape: f32[2,4,16,16], index: 2, kind: input, shape index: {}]
  %s3 = inlined_call_operand.vmem [shape: f32[16,128], index: 3, kind: input, shape index: {}]
  %s4 = inlined_call_operand.vmem [shape: f32[2,4,16,16], index: 4, kind: output, shape index: {}]
  %s5 = sld [smem:[#allocation0]]
  $region49: #{attention_forward.7} parent=0
    _
  %s7 = ssub.s32 1, %s5
  %s8 = scalar_select 0, %s7, %s5
  loop: start=0, step=1, limit=10
  $region2: #{attention_forward.7} parent=0 // loop_pre_header
    _
  $region3: #{attention_forward.7} parent=0 // loop_header
    %s10 = sphi 0, %s14
    %p11 = scmp.ge.s32.totalorder %s10, 10
    %s17 = sphi 0, %s29
    %s18 = sphi 0, %s25
    %s19 = sphi 0, %s17
    %s20 = sphi 0, %s18
    %s21 = sphi 0, %s19
    %s22 = sphi 0, %s20
    %s34 = sphi 0, %s36
    %s37 = sphi 0, %s34
    %s38 = sphi 0, %s37
    %s54 = sphi 0, %s38
    %s62 = sphi 0, %s64
    %s65 = sphi 0, %s62
    %s66 = sphi 0, %s65
    %s82 = sphi 0, %s66
    %s90 = sphi 0, %s92
    %s93 = sphi 0, %s90
    %s94 = sphi 0, %s93
    %s110 = sphi 0, %s94
    %s114 = sphi 0, %s114
    %s116 = sphi 0, %s114
    %s117 = sphi 0, %s116
    %s131 = sphi 0, %s117
    %s139 = sphi 0, %s141
    %s142 = sphi 0, %s139
    %s143 = sphi 0, %s142
    %s159 = sphi 0, %s143
  $region4: #{attention_forward.7} parent=0 // loop_header_branch
    %13 = sbr.rel (%p11) target = $region8
  $region5: #{attention_forward.7} parent=0 // loop_body
    %s15 = ssub.s32 %s10, 1
    %s16 = ssub.s32 %s10, 2
    %s23 = sadd.s32 1, %s18
    %p24 = scmp.ge.s32.totalorder %s23, 4
    %s25 = scalar_select %p24, 0, %s23
    %s26 = sadd.s32 1, %s17
    %s27 = scalar_select %p24, %s26, %s17
    %p28 = scmp.ge.s32.totalorder %s27, 2
    %s29 = scalar_select %p28, 0, %s27
    %s30 = ssub.s32 %s17, %s29
    %s31 = ssub.s32 %s18, %s25
    %s32 = sor.u32 %s30, %s31
    %p33 = scmp.eq.s32.totalorder %s32, 0
    %s35 = sadd.s32 %s34, 1
    %s36 = scalar_select %p33, %s34, %s35
    %p39 = pneg %p33
    %p40 = scmp.eq.s32.totalorder %s10, 7
    %p41 = por %p39, %p40
    %p42 = scmp.ne.s32.totalorder %s34, %s37
    %p43 = scmp.eq.s32.totalorder %s10, 0
    %p44 = por %p42, %p43
    %p45 = scmp.ne.s32.totalorder %s34, %s37
    %p46 = scmp.eq.s32.totalorder %s15, 7
    %p47 = por %p45, %p46
    %p48 = scmp.ne.s32.totalorder %s37, %s38
    %p49 = scmp.eq.s32.totalorder %s15, 0
    %p50 = por %p48, %p49
    %p51 = scmp.ne.s32.totalorder %s37, %s38
    %p52 = scmp.eq.s32.totalorder %s16, 7
    %p53 = por %p51, %p52
    %p55 = scmp.ne.s32.totalorder %s38, %s54
    %p56 = scmp.eq.s32.totalorder %s16, 0
    %p57 = por %p55, %p56
    %s58 = ssub.s32 %s17, %s29
    %s59 = ssub.s32 %s18, %s25
    %s60 = sor.u32 %s58, %s59
    %p61 = scmp.eq.s32.totalorder %s60, 0
    %s63 = sadd.s32 %s62, 1
    %s64 = scalar_select %p61, %s62, %s63
    %p67 = pneg %p61
    %p68 = scmp.eq.s32.totalorder %s10, 7
    %p69 = por %p67, %p68
    %p70 = scmp.ne.s32.totalorder %s62, %s65
    %p71 = scmp.eq.s32.totalorder %s10, 0
    %p72 = por %p70, %p71
    %p73 = scmp.ne.s32.totalorder %s62, %s65
    %p74 = scmp.eq.s32.totalorder %s15, 7
    %p75 = por %p73, %p74
    %p76 = scmp.ne.s32.totalorder %s65, %s66
    %p77 = scmp.eq.s32.totalorder %s15, 0
    %p78 = por %p76, %p77
    %p79 = scmp.ne.s32.totalorder %s65, %s66
    %p80 = scmp.eq.s32.totalorder %s16, 7
    %p81 = por %p79, %p80
    %p83 = scmp.ne.s32.totalorder %s66, %s82
    %p84 = scmp.eq.s32.totalorder %s16, 0
    %p85 = por %p83, %p84
    %s86 = ssub.s32 %s17, %s29
    %s87 = ssub.s32 %s18, %s25
    %s88 = sor.u32 %s86, %s87
    %p89 = scmp.eq.s32.totalorder %s88, 0
    %s91 = sadd.s32 %s90, 1
    %s92 = scalar_select %p89, %s90, %s91
    %p95 = pneg %p89
    %p96 = scmp.eq.s32.totalorder %s10, 7
    %p97 = por %p95, %p96
    %p98 = scmp.ne.s32.totalorder %s90, %s93
    %p99 = scmp.eq.s32.totalorder %s10, 0
    %p100 = por %p98, %p99
    %p101 = scmp.ne.s32.totalorder %s90, %s93
    %p102 = scmp.eq.s32.totalorder %s15, 7
    %p103 = por %p101, %p102
    %p104 = scmp.ne.s32.totalorder %s93, %s94
    %p105 = scmp.eq.s32.totalorder %s15, 0
    %p106 = por %p104, %p105
    %p107 = scmp.ne.s32.totalorder %s93, %s94
    %p108 = scmp.eq.s32.totalorder %s16, 7
    %p109 = por %p107, %p108
    %p111 = scmp.ne.s32.totalorder %s94, %s110
    %p112 = scmp.eq.s32.totalorder %s16, 0
    %p113 = por %p111, %p112
    %s115 = sadd.s32 %s114, 1
    %p118 = scmp.eq.s32.totalorder %s10, 7
    %p119 = scmp.ne.s32.totalorder %s114, %s116
    %p120 = scmp.eq.s32.totalorder %s10, 0
    %p121 = por %p119, %p120
    %p122 = scmp.ne.s32.totalorder %s114, %s116
    %p123 = scmp.eq.s32.totalorder %s15, 7
    %p124 = por %p122, %p123
    %p125 = scmp.ne.s32.totalorder %s116, %s117
    %p126 = scmp.eq.s32.totalorder %s15, 0
    %p127 = por %p125, %p126
    %p128 = scmp.ne.s32.totalorder %s116, %s117
    %p129 = scmp.eq.s32.totalorder %s16, 7
    %p130 = por %p128, %p129
    %p132 = scmp.ne.s32.totalorder %s117, %s131
    %p133 = scmp.eq.s32.totalorder %s16, 0
    %p134 = por %p132, %p133
    %s135 = ssub.s32 %s17, %s29
    %s136 = ssub.s32 %s18, %s25
    %s137 = sor.u32 %s135, %s136
    %p138 = scmp.eq.s32.totalorder %s137, 0
    %s140 = sadd.s32 %s139, 1
    %s141 = scalar_select %p138, %s139, %s140
    %p144 = pneg %p138
    %p145 = scmp.eq.s32.totalorder %s10, 7
    %p146 = por %p144, %p145
    %p147 = scmp.ne.s32.totalorder %s139, %s142
    %p148 = scmp.eq.s32.totalorder %s10, 0
    %p149 = por %p147, %p148
    %p150 = scmp.ne.s32.totalorder %s139, %s142
    %p151 = scmp.eq.s32.totalorder %s15, 7
    %p152 = por %p150, %p151
    %p153 = scmp.ne.s32.totalorder %s142, %s143
    %p154 = scmp.eq.s32.totalorder %s15, 0
    %p155 = por %p153, %p154
    %p156 = scmp.ne.s32.totalorder %s142, %s143
    %p157 = scmp.eq.s32.totalorder %s16, 7
    %p158 = por %p156, %p157
    %p160 = scmp.ne.s32.totalorder %s143, %s159
    %p161 = scmp.eq.s32.totalorder %s16, 0
    %p162 = por %p160, %p161
    %p163 = scmp.le.s32.totalorder 1, %s10
    %p164 = scmp.lt.s32.totalorder %s10, 9
    %p165 = pnand %p163, %p164
    %p166 = pneg %p165
    // Predicated region
    $region9: #{attention_forward.7} parent=5 // pred_check
      _
    $region10: #{attention_forward.7} parent=5 // pred_check_branch
      %168 = sbr.rel (%p165) target = $region12
    $region11: #{attention_forward.7} parent=5 // pred_region
      %s169 = ssub.s32 %s10, 1
      // Predicated region
      $region13: #{attention_forward.7} parent=11 // pred_check
        %p170 = pneg %p127
      $region14: #{attention_forward.7} parent=11 // pred_check_branch
        %172 = sbr.rel (%p170) target = $region16
      $region15: #{attention_forward.7} parent=11 // pred_region
        _
      $region16: #{attention_forward.7} parent=11 // pred_fallthru
        _
    $region12: #{attention_forward.7} parent=5 // pred_fallthru
      _
    %p173 = scmp.lt.s32.totalorder %s10, 8
    // Predicated region
    $region17: #{attention_forward.7} parent=5 // pred_check
      %p174 = pneg %p173
    $region18: #{attention_forward.7} parent=5 // pred_check_branch
      %176 = sbr.rel (%p174) target = $region20
    $region19: #{attention_forward.7} parent=5 // pred_region
      // Predicated region
      $region21: #{attention_forward.7} parent=19 // pred_check
        %p177 = pneg %p44
      $region22: #{attention_forward.7} parent=19 // pred_check_branch
        %179 = sbr.rel (%p177) target = $region24
      $region23: #{attention_forward.7} parent=19 // pred_region
        %p180 = scmp.lt.s32.totalorder %s17, 1
        %s181 = scalar_select %p180, %s17, 1
        %p182 = scmp.lt.s32.totalorder %s18, 3
        %s183 = scalar_select %p182, %s18, 3
        %s184 = smul.addr %s183, 2
        %s185 = smul.addr %s181, 8
        %s186 = sadd.s32 %s184, %s185
        %s187 = smul.addr %s186, 8
        %s188 = scalar_lea.vmem %s0, %s187
      $region24: #{attention_forward.7} parent=19 // pred_fallthru
        _
      // Predicated region
      $region25: #{attention_forward.7} parent=19 // pred_check
        %p189 = pneg %p72
      $region26: #{attention_forward.7} parent=19 // pred_check_branch
        %191 = sbr.rel (%p189) target = $region28
      $region27: #{attention_forward.7} parent=19 // pred_region
        %p192 = scmp.lt.s32.totalorder %s17, 1
        %s193 = scalar_select %p192, %s17, 1
        %p194 = scmp.lt.s32.totalorder %s18, 3
        %s195 = scalar_select %p194, %s18, 3
        %s196 = smul.addr %s195, 2
        %s197 = smul.addr %s193, 8
        %s198 = sadd.s32 %s196, %s197
        %s199 = smul.addr %s198, 8
        %s200 = scalar_lea.vmem %s1, %s199
      $region28: #{attention_forward.7} parent=19 // pred_fallthru
        _
      // Predicated region
      $region29: #{attention_forward.7} parent=19 // pred_check
        %p201 = pneg %p100
      $region30: #{attention_forward.7} parent=19 // pred_check_branch
        %203 = sbr.rel (%p201) target = $region32
      $region31: #{attention_forward.7} parent=19 // pred_region
        %p204 = scmp.lt.s32.totalorder %s17, 1
        %s205 = scalar_select %p204, %s17, 1
        %p206 = scmp.lt.s32.totalorder %s18, 3
        %s207 = scalar_select %p206, %s18, 3
        %s208 = smul.addr %s207, 2
        %s209 = smul.addr %s205, 8
        %s210 = sadd.s32 %s208, %s209
        %s211 = smul.addr %s210, 8
        %s212 = scalar_lea.vmem %s2, %s211
      $region32: #{attention_forward.7} parent=19 // pred_fallthru
        _
    $region20: #{attention_forward.7} parent=5 // pred_fallthru
      _
    %p213 = scmp.le.s32.totalorder 1, %s10
    %p214 = scmp.lt.s32.totalorder %s10, 9
    %p215 = pnand %p213, %p214
    %p216 = pneg %p215
    // Predicated region
    $region33: #{attention_forward.7} parent=5 // pred_check
      _
    $region34: #{attention_forward.7} parent=5 // pred_check_branch
      %218 = sbr.rel (%p215) target = $region36
    $region35: #{attention_forward.7} parent=5 // pred_region
      %s219 = ssub.s32 %s10, 1
      %p220 = scmp.lt.s32.totalorder %s19, 1
      %s221 = scalar_select %p220, %s19, 1
      %p222 = scmp.lt.s32.totalorder %s20, 3
      %s223 = scalar_select %p222, %s20, 3
      %s224 = smul.addr %s223, 2
      %s225 = smul.addr %s221, 8
      %s226 = sadd.s32 %s224, %s225
      %s227 = smul.addr %s226, 8
      %s228 = scalar_lea.vmem %s0, %s227
      %p229 = pneg %p50
      %p230 = pneg %p47
      %p231 = scmp.lt.s32.totalorder %s19, 1
      %s232 = scalar_select %p231, %s19, 1
      %p233 = scmp.lt.s32.totalorder %s20, 3
      %s234 = scalar_select %p233, %s20, 3
      %s235 = smul.addr %s234, 2
      %s236 = smul.addr %s232, 8
      %s237 = sadd.s32 %s235, %s236
      %s238 = smul.addr %s237, 8
      %s239 = scalar_lea.vmem %s1, %s238
      %p240 = pneg %p78
      %p241 = pneg %p75
      %p242 = scmp.lt.s32.totalorder %s19, 1
      %s243 = scalar_select %p242, %s19, 1
      %p244 = scmp.lt.s32.totalorder %s20, 3
      %s245 = scalar_select %p244, %s20, 3
      %s246 = smul.addr %s245, 2
      %s247 = smul.addr %s243, 8
      %s248 = sadd.s32 %s246, %s247
      %s249 = smul.addr %s248, 8
      %s250 = scalar_lea.vmem %s2, %s249
      %p251 = pneg %p106
      %p252 = pneg %p103
      %p253 = pneg %p127
      %p254 = pneg %p124
      %p255 = pneg %p155
      %p256 = pneg %p152
      %p257 = scmp.lt.s32.totalorder %s19, 1
      %s258 = scalar_select %p257, %s19, 1
      %p259 = scmp.lt.s32.totalorder %s20, 3
      %s260 = scalar_select %p259, %s20, 3
      %s261 = smul.addr %s260, 2
      %s262 = smul.addr %s258, 8
      %s263 = sadd.s32 %s261, %s262
      %s264 = smul.addr %s263, 8
      %s265 = scalar_lea.vmem %s4, %s264
      %p266 = scmp.lt.s32.totalorder %s19, 1
      %s267 = scalar_select %p266, %s19, 1
      %p268 = scmp.lt.s32.totalorder %s20, 3
      %s269 = scalar_select %p268, %s20, 3
      %s270 = smul.addr %s269, 2
      %s271 = smul.addr %s267, 8
      %s272 = sadd.s32 %s270, %s271
      %s273 = smul.addr %s272, 8
      %s274 = scalar_lea.vmem %s0, %s273
      %p275 = scmp.lt.s32.totalorder %s19, 1
      %s276 = scalar_select %p275, %s19, 1
      %p277 = scmp.lt.s32.totalorder %s20, 3
      %s278 = scalar_select %p277, %s20, 3
      %s279 = smul.addr %s278, 2
      %s280 = smul.addr %s276, 8
      %s281 = sadd.s32 %s279, %s280
      %s282 = smul.addr %s281, 8
      %s283 = scalar_lea.vmem %s1, %s282
      %p284 = scmp.lt.s32.totalorder %s19, 1
      %s285 = scalar_select %p284, %s19, 1
      %p286 = scmp.lt.s32.totalorder %s20, 3
      %s287 = scalar_select %p286, %s20, 3
      %s288 = smul.addr %s287, 2
      %s289 = smul.addr %s285, 8
      %s290 = sadd.s32 %s288, %s289
      %s291 = smul.addr %s290, 8
      %s292 = scalar_lea.vmem %s2, %s291
      %p293 = scmp.lt.s32.totalorder %s19, 1
      %s294 = scalar_select %p293, %s19, 1
      %p295 = scmp.lt.s32.totalorder %s20, 3
      %s296 = scalar_select %p295, %s20, 3
      %s297 = smul.addr %s296, 2
      %s298 = smul.addr %s294, 8
      %s299 = sadd.s32 %s297, %s298
      %s300 = smul.addr %s299, 8
      %s301 = scalar_lea.vmem %s4, %s300
      %v302 = vld [vmem:[%s274] sm:$0xff]
      %v303 = vld [vmem:[%s274 + $0x8] sm:$0xff]
      %v304 = vld [vmem:[%s283] sm:$0xff]
      %v305 = vld [vmem:[%s283 + $0x8] sm:$0xff]
      %v306 = vld [vmem:[%s292] sm:$0xff]
      %v307 = vld [vmem:[%s292 + $0x8] sm:$0xff]
      %v308 = vld [vmem:[%s3] sm:$0xff]
      %v309 = vld [vmem:[%s3 + $0x8] sm:$0xff]
      %v310 = vlaneseq
      %v311 = vand.u32 %v310, 127
      %vm312 = vcmp.lt.s32.totalorder %v311, 44
      %v313 = vmul.f32 %v302, 0.5
      %v314 = vmul.f32 %v303, 0.5
      %vm315 = vcmask 130048
      %v317 = vsel %vm315, %v313, 0
      %v320 = vsel %vm315, %v314, 0
      %322 = vmatprep.subr.mxu0 0.0
      %323 = vmatpush1.msra.mxu0 %v308
      %324 = vmatprep.subr.mxu0 0.0
      %325 = vmatpush1.msra.mxu0 %v309
      %326 = vmatprep.subr.mxu0 0.0
      %327 = vmatpush1.msra.mxu0 0.0
      %328 = vmatprep.subr.mxu0 0.0
      %329 = vmatpush1.msra.mxu0 0.0
      %330 = vmatprep.subr.mxu0 0.0
      %331 = vmatpush1.msra.mxu0 0.0
      %332 = vmatprep.subr.mxu0 0.0
      %333 = vmatpush1.msra.mxu0 0.0
      %334 = vmatprep.subr.mxu0 0.0
      %335 = vmatpush1.msra.mxu0 0.0
      %336 = vmatprep.subr.mxu0 0.0
      %337 = vmatpush1.msra.mxu0 0.0
      %338 = vmatprep.subr.mxu0 0.0
      %339 = vmatpush1.msra.mxu0 0.0
      %340 = vmatprep.subr.mxu0 0.0
      %341 = vmatpush1.msra.mxu0 0.0
      %342 = vmatprep.subr.mxu0 0.0
      %343 = vmatpush1.msra.mxu0 0.0
      %344 = vmatprep.subr.mxu0 0.0
      %345 = vmatpush1.msra.mxu0 0.0
      %346 = vmatprep.subr.mxu0 0.0
      %347 = vmatpush1.msra.mxu0 0.0
      %348 = vmatprep.subr.mxu0 0.0
      %349 = vmatpush1.msra.mxu0 0.0
      %350 = vmatprep.subr.mxu0 0.0
      %351 = vmatpush1.msra.mxu0 0.0
      %352 = vmatprep.subr.mxu0 0.0
      %353 = vmatpush1.msra.mxu0 0.0
      %354 = vmatprep.subr.mxu0 0.0
      %355 = vmatpush1.msra.mxu0 0.0
      %356 = vmatprep.subr.mxu0 0.0
      %357 = vmatpush1.msra.mxu0 0.0
      %358 = vmatprep.subr.mxu0 0.0
      %359 = vmatpush1.msra.mxu0 0.0
      %360 = vmatprep.subr.mxu0 0.0
      %361 = vmatpush1.msra.mxu0 0.0
      %362 = vmatprep.subr.mxu0 0.0
      %363 = vmatpush1.msra.mxu0 0.0
      %364 = vmatprep.subr.mxu0 0.0
      %365 = vmatpush1.msra.mxu0 0.0
      %366 = vmatprep.subr.mxu0 0.0
      %367 = vmatpush1.msra.mxu0 0.0
      %368 = vmatprep.subr.mxu0 0.0
      %369 = vmatpush1.msra.mxu0 0.0
      %370 = vmatprep.subr.mxu0 0.0
      %371 = vmatpush1.msra.mxu0 0.0
      %372 = vmatprep.subr.mxu0 0.0
      %373 = vmatpush1.msra.mxu0 0.0
      %374 = vmatprep.subr.mxu0 0.0
      %375 = vmatpush1.msra.mxu0 0.0
      %376 = vmatprep.subr.mxu0 0.0
      %377 = vmatpush1.msra.mxu0 0.0
      %378 = vmatprep.subr.mxu0 0.0
      %379 = vmatpush1.msra.mxu0 0.0
      %380 = vmatprep.subr.mxu0 0.0
      %381 = vmatpush1.msra.mxu0 0.0
      %382 = vmatprep.subr.mxu0 0.0
      %383 = vmatpush1.msra.mxu0 0.0
      %384 = vmatprep.subr.mxu0 0.0
      %385 = vmatpush1.msra.mxu0 0.0
      %386 = vmatprep.mubr.f32.mxu0 0.0
      %387 = vmatmul.mubr.f32.gmra.mrb[0].mxu0 %v317
      %v388 = vpop.f32.mrb[0].mxu0
      %v389 = vadd.f32 0.0, %v388
      %v390 = vpop.f32.mrb[0].mxu0
      %391 = vmatprep.mubr.f32.mxu0 0.0
      %392 = vmatmul.mubr.f32.gmra.mrb[0].mxu0 %v320
      %v393 = vpop.f32.mrb[0].mxu0
      %v394 = vadd.f32 0.0, %v393
      %v395 = vpop.f32.mrb[0].mxu0
      %396 = vdwg.mxu0
      %v397 = vmul.f32 %v302, %v302
      %v398 = vmul.f32 %v303, %v303
      %v399 = vsel %vm315, %v397, 0.0
      %400 = vadd.xlane.f32.xlu0 %v399
      %v401 = vpop.xlane.xlu0 %400
      %v402 = vsel %vm315, %v398, 0.0
      %403 = vadd.xlane.f32.xlu0 %v402
      %v404 = vpop.xlane.xlu0 %403
      %v405 = vmul.f32 %v401, 0.125
      %v406 = vmul.f32 %v404, 0.125
      %v407 = vsel %vm312, 1, 0
      %vm408 = vcmp.eq.s32.totalorder %v407, 1
      %v409 = vsel %vm408, %v389, -inf
      %v410 = vsel %vm408, %v394, -inf
      %411 = vmax.xlane.f32.xlu0 %v409
      %v412 = vpop.xlane.xlu0 %411
      %413 = vmax.xlane.f32.xlu0 %v410
      %v414 = vpop.xlane.xlu0 %413
      %v415 = vsub.f32 %v389, %v405
      %v416 = vsub.f32 %v394, %v406
      %v417 = vsub.f32 %v415, %v412
      %v418 = vsub.f32 %v416, %v414
      %v419 = vmul.f32 %v417, 1.442695
      %v420 = vpow.pop %v419
      %v421 = vmul.f32 %v418, 1.442695
      %v422 = vpow.pop %v421
      %v423 = vadd.f32 %v420, 0.0001
      %v424 = vadd.f32 %v422, 0.0001
      %v425 = vmul.f32 %v423, 0.15075567
      %v426 = vmul.f32 %v424, 0.15075567
      %v427 = vsel %vm408, %v425, 0.0
      %v428 = vsel %vm408, %v426, 0.0
      %v429 = vmul.f32 %v304, 0.5
      %v430 = vmul.f32 %v305, 0.5
      %v432 = vsel %vm315, %v429, 0
      %v435 = vsel %vm315, %v430, 0
      %437 = vmatprep.subr.mxu0 0.0
      %438 = vmatpush1.msra.mxu0 %v308
      %439 = vmatprep.subr.mxu0 0.0
      %440 = vmatpush1.msra.mxu0 %v309
      %441 = vmatprep.subr.mxu0 0.0
      %442 = vmatpush1.msra.mxu0 0.0
      %443 = vmatprep.subr.mxu0 0.0
      %444 = vmatpush1.msra.mxu0 0.0
      %445 = vmatprep.subr.mxu0 0.0
      %446 = vmatpush1.msra.mxu0 0.0
      %447 = vmatprep.subr.mxu0 0.0
      %448 = vmatpush1.msra.mxu0 0.0
      %449 = vmatprep.subr.mxu0 0.0
      %450 = vmatpush1.msra.mxu0 0.0
      %451 = vmatprep.subr.mxu0 0.0
      %452 = vmatpush1.msra.mxu0 0.0
      %453 = vmatprep.subr.mxu0 0.0
      %454 = vmatpush1.msra.mxu0 0.0
      %455 = vmatprep.subr.mxu0 0.0
      %456 = vmatpush1.msra.mxu0 0.0
      %457 = vmatprep.subr.mxu0 0.0
      %458 = vmatpush1.msra.mxu0 0.0
      %459 = vmatprep.subr.mxu0 0.0
      %460 = vmatpush1.msra.mxu0 0.0
      %461 = vmatprep.subr.mxu0 0.0
      %462 = vmatpush1.msra.mxu0 0.0
      %463 = vmatprep.subr.mxu0 0.0
      %464 = vmatpush1.msra.mxu0 0.0
      %465 = vmatprep.subr.mxu0 0.0
      %466 = vmatpush1.msra.mxu0 0.0
      %467 = vmatprep.subr.mxu0 0.0
      %468 = vmatpush1.msra.mxu0 0.0
      %469 = vmatprep.subr.mxu0 0.0
      %470 = vmatpush1.msra.mxu0 0.0
      %471 = vmatprep.subr.mxu0 0.0
      %472 = vmatpush1.msra.mxu0 0.0
      %473 = vmatprep.subr.mxu0 0.0
      %474 = vmatpush1.msra.mxu0 0.0
      %475 = vmatprep.subr.mxu0 0.0
      %476 = vmatpush1.msra.mxu0 0.0
      %477 = vmatprep.subr.mxu0 0.0
      %478 = vmatpush1.msra.mxu0 0.0
      %479 = vmatprep.subr.mxu0 0.0
      %480 = vmatpush1.msra.mxu0 0.0
      %481 = vmatprep.subr.mxu0 0.0
      %482 = vmatpush1.msra.mxu0 0.0
      %483 = vmatprep.subr.mxu0 0.0
      %484 = vmatpush1.msra.mxu0 0.0
      %485 = vmatprep.subr.mxu0 0.0
      %486 = vmatpush1.msra.mxu0 0.0
      %487 = vmatprep.subr.mxu0 0.0
      %488 = vmatpush1.msra.mxu0 0.0
      %489 = vmatprep.subr.mxu0 0.0
      %490 = vmatpush1.msra.mxu0 0.0
      %491 = vmatprep.subr.mxu0 0.0
      %492 = vmatpush1.msra.mxu0 0.0
      %493 = vmatprep.subr.mxu0 0.0
      %494 = vmatpush1.msra.mxu0 0.0
      %495 = vmatprep.subr.mxu0 0.0
      %496 = vmatpush1.msra.mxu0 0.0
      %497 = vmatprep.subr.mxu0 0.0
      %498 = vmatpush1.msra.mxu0 0.0
      %499 = vmatprep.subr.mxu0 0.0
      %500 = vmatpush1.msra.mxu0 0.0
      %501 = vmatprep.mubr.f32.mxu0 0.0
      %502 = vmatmul.mubr.f32.gmra.mrb[0].mxu0 %v432
      %v503 = vpop.f32.mrb[0].mxu0
      %v504 = vadd.f32 0.0, %v503
      %v505 = vpop.f32.mrb[0].mxu0
      %506 = vmatprep.mubr.f32.mxu0 0.0
      %507 = vmatmul.mubr.f32.gmra.mrb[0].mxu0 %v435
      %v508 = vpop.f32.mrb[0].mxu0
      %v509 = vadd.f32 0.0, %v508
      %v510 = vpop.f32.mrb[0].mxu0
      %511 = vdwg.mxu0
      %v512 = vmul.f32 %v304, %v304
      %v513 = vmul.f32 %v305, %v305
      %v514 = vsel %vm315, %v512, 0.0
      %515 = vadd.xlane.f32.xlu0 %v514
      %v516 = vpop.xlane.xlu0 %515
      %v517 = vsel %vm315, %v513, 0.0
      %518 = vadd.xlane.f32.xlu0 %v517
      %v519 = vpop.xlane.xlu0 %518
      %v520 = vmul.f32 %v516, 0.125
      %v521 = vmul.f32 %v519, 0.125
      %v522 = vsel %vm408, %v504, -inf
      %v523 = vsel %vm408, %v509, -inf
      %v524 = vmax.f32 %v522, %v523
      %525 = vmax.xlane.f32.xlu0 %v524
      %v526 = vpop.xlane.xlu0 %525
      %v527 = vrot.slane %v526, 4
      %v528 = vmax.f32 %v526, %v527
      %v529 = vrot.slane %v528, 2
      %v530 = vmax.f32 %v528, %v529
      %v531 = vrot.slane %v530, 1
      %v532 = vmax.f32 %v530, %v531
      %s533 = vtos %v532
      %v534 = vsub.f32 %v504, %v520
      %v535 = vsub.f32 %v509, %v521
      %v536 = vstv %s533
      %v537 = vsub.f32 %v534, %v536
      %v538 = vsub.f32 %v535, %v536
      %v539 = vmul.f32 %v537, 1.442695
      %v540 = vpow.pop %v539
      %v541 = vmul.f32 %v538, 1.442695
      %v542 = vpow.pop %v541
      %v543 = vadd.f32 %v540, 0.0001
      %v544 = vadd.f32 %v542, 0.0001
      %v545 = vmul.f32 %v543, 0.15075567
      %v546 = vmul.f32 %v544, 0.15075567
      %v547 = vsel %vm408, %v545, 0.0
      %v548 = vsel %vm408, %v546, 0.0
      %v549 = vadd.f32 %v547, %v548
      %v550 = vrot.slane %v549, 4
      %v551 = vadd.f32 %v549, %v550
      %v552 = vrot.slane %v551, 2
      %v553 = vadd.f32 %v551, %v552
      %v554 = vrot.slane %v553, 1
      %v555 = vadd.f32 %v553, %v554
      %v556 = vmul.f32 %v427, %v555
      %v557 = vmul.f32 %v428, %v555
      %558 = vadd.xlane.f32.xlu0 %v556
      %v559 = vpop.xlane.xlu0 %558
      %560 = vadd.xlane.f32.xlu0 %v557
      %v561 = vpop.xlane.xlu0 %560
      %v562 = vrcp.pop %v559
      %v563 = vrcp.pop %v561
      %564 = vxpose.xlu0.b32.start [1/16] %v547, 128
      %565 = vxpose.xlu0.b32.cont [2/16] %v548, 128
      %566 = vxpose.xlu0.b32.cont [3/16] 0.0, 128
      %567 = vxpose.xlu0.b32.cont [4/16] 0.0, 128
      %568 = vxpose.xlu0.b32.cont [5/16] 0.0, 128
      %569 = vxpose.xlu0.b32.cont [6/16] 0.0, 128
      %570 = vxpose.xlu0.b32.cont [7/16] 0.0, 128
      %571 = vxpose.xlu0.b32.cont [8/16] 0.0, 128
      %572 = vxpose.xlu0.b32.cont [9/16] 0.0, 128
      %573 = vxpose.xlu0.b32.cont [10/16] 0.0, 128
      %574 = vxpose.xlu0.b32.cont [11/16] 0.0, 128
      %575 = vxpose.xlu0.b32.cont [12/16] 0.0, 128
      %576 = vxpose.xlu0.b32.cont [13/16] 0.0, 128
      %577 = vxpose.xlu0.b32.cont [14/16] 0.0, 128
      %578 = vxpose.xlu0.b32.cont [15/16] 0.0, 128
      %579 = vxpose.xlu0.b32.end [16/16] 0.0, 128
      %v580 = vpop.trf.xlu0
      %v581 = vpop.trf.xlu0
      %v582 = vpop.trf.xlu0
      %v583 = vpop.trf.xlu0
      %v584 = vpop.trf.xlu0
      %v585 = vpop.trf.xlu0
      %v586 = vpop.trf.xlu0
      %v587 = vpop.trf.xlu0
      %v588 = vpop.trf.xlu0
      %v589 = vpop.trf.xlu0
      %v590 = vpop.trf.xlu0
      %v591 = vpop.trf.xlu0
      %v592 = vpop.trf.xlu0
      %v593 = vpop.trf.xlu0
      %v594 = vpop.trf.xlu0
      %v595 = vpop.trf.xlu0
      %v597 = vsel %vm315, %v580, 0
      %v600 = vsel %vm315, %v581, 0
      %v603 = vsel %vm315, %v582, 0
      %v606 = vsel %vm315, %v583, 0
      %v609 = vsel %vm315, %v584, 0
      %v612 = vsel %vm315, %v585, 0
      %v615 = vsel %vm315, %v586, 0
      %v618 = vsel %vm315, %v587, 0
      %v621 = vsel %vm315, %v588, 0
      %v624 = vsel %vm315, %v589, 0
      %v627 = vsel %vm315, %v590, 0
      %v630 = vsel %vm315, %v591, 0
      %v633 = vsel %vm315, %v592, 0
      %v636 = vsel %vm315, %v593, 0
      %v639 = vsel %vm315, %v594, 0
      %v642 = vsel %vm315, %v595, 0
      %644 = vmatprep.subr.mxu0 0.0
      %645 = vmatpush1.msra.mxu0 %v306
      %646 = vmatprep.subr.mxu0 0.0
      %647 = vmatpush1.msra.mxu0 %v307
      %648 = vmatprep.subr.mxu0 0.0
      %649 = vmatpush1.msra.mxu0 0.0
      %650 = vmatprep.subr.mxu0 0.0
      %651 = vmatpush1.msra.mxu0 0.0
      %652 = vmatprep.subr.mxu0 0.0
      %653 = vmatpush1.msra.mxu0 0.0
      %654 = vmatprep.subr.mxu0 0.0
      %655 = vmatpush1.msra.mxu0 0.0
      %656 = vmatprep.subr.mxu0 0.0
      %657 = vmatpush1.msra.mxu0 0.0
      %658 = vmatprep.subr.mxu0 0.0
      %659 = vmatpush1.msra.mxu0 0.0
      %660 = vmatprep.subr.mxu0 0.0
      %661 = vmatpush1.msra.mxu0 0.0
      %662 = vmatprep.subr.mxu0 0.0
      %663 = vmatpush1.msra.mxu0 0.0
      %664 = vmatprep.subr.mxu0 0.0
      %665 = vmatpush1.msra.mxu0 0.0
      %666 = vmatprep.subr.mxu0 0.0
      %667 = vmatpush1.msra.mxu0 0.0
      %668 = vmatprep.subr.mxu0 0.0
      %669 = vmatpush1.msra.mxu0 0.0
      %670 = vmatprep.subr.mxu0 0.0
      %671 = vmatpush1.msra.mxu0 0.0
      %672 = vmatprep.subr.mxu0 0.0
      %673 = vmatpush1.msra.mxu0 0.0
      %674 = vmatprep.subr.mxu0 0.0
      %675 = vmatpush1.msra.mxu0 0.0
      %676 = vmatprep.subr.mxu0 0.0
      %677 = vmatpush1.msra.mxu0 0.0
      %678 = vmatprep.subr.mxu0 0.0
      %679 = vmatpush1.msra.mxu0 0.0
      %680 = vmatprep.subr.mxu0 0.0
      %681 = vmatpush1.msra.mxu0 0.0
      %682 = vmatprep.subr.mxu0 0.0
      %683 = vmatpush1.msra.mxu0 0.0
      %684 = vmatprep.subr.mxu0 0.0
      %685 = vmatpush1.msra.mxu0 0.0
      %686 = vmatprep.subr.mxu0 0.0
      %687 = vmatpush1.msra.mxu0 0.0
      %688 = vmatprep.subr.mxu0 0.0
      %689 = vmatpush1.msra.mxu0 0.0
      %690 = vmatprep.subr.mxu0 0.0
      %691 = vmatpush1.msra.mxu0 0.0
      %692 = vmatprep.subr.mxu0 0.0
      %693 = vmatpush1.msra.mxu0 0.0
      %694 = vmatprep.subr.mxu0 0.0
      %695 = vmatpush1.msra.mxu0 0.0
      %696 = vmatprep.subr.mxu0 0.0
      %697 = vmatpush1.msra.mxu0 0.0
      %698 = vmatprep.subr.mxu0 0.0
      %699 = vmatpush1.msra.mxu0 0.0
      %700 = vmatprep.subr.mxu0 0.0
      %701 = vmatpush1.msra.mxu0 0.0
      %702 = vmatprep.subr.mxu0 0.0
      %703 = vmatpush1.msra.mxu0 0.0
      %704 = vmatprep.subr.mxu0 0.0
      %705 = vmatpush1.msra.mxu0 0.0
      %706 = vmatprep.subr.mxu0 0.0
      %707 = vmatpush1.msra.mxu0 0.0
      %708 = vmatprep.mubr.f32.mxu0 0.0
      %709 = vmatmul.mubr.f32.gmra.mrb[0].mxu0 %v597
      %v710 = vpop.f32.mrb[0].mxu0
      %v711 = vadd.f32 0.0, %v710
      %v712 = vpop.f32.mrb[0].mxu0
      %713 = vmatprep.mubr.f32.mxu0 0.0
      %714 = vmatmul.mubr.f32.gmra.mrb[0].mxu0 %v600
      %v715 = vpop.f32.mrb[0].mxu0
      %v716 = vadd.f32 0.0, %v715
      %v717 = vpop.f32.mrb[0].mxu0
      %718 = vmatprep.mubr.f32.mxu0 0.0
      %719 = vmatmul.mubr.f32.gmra.mrb[0].mxu0 %v603
      %v720 = vpop.f32.mrb[0].mxu0
      %v721 = vadd.f32 0.0, %v720
      %v722 = vpop.f32.mrb[0].mxu0
      %723 = vmatprep.mubr.f32.mxu0 0.0
      %724 = vmatmul.mubr.f32.gmra.mrb[0].mxu0 %v606
      %v725 = vpop.f32.mrb[0].mxu0
      %v726 = vadd.f32 0.0, %v725
      %v727 = vpop.f32.mrb[0].mxu0
      %728 = vmatprep.mubr.f32.mxu0 0.0
      %729 = vmatmul.mubr.f32.gmra.mrb[0].mxu0 %v609
      %v730 = vpop.f32.mrb[0].mxu0
      %v731 = vadd.f32 0.0, %v730
      %v732 = vpop.f32.mrb[0].mxu0
      %733 = vmatprep.mubr.f32.mxu0 0.0
      %734 = vmatmul.mubr.f32.gmra.mrb[0].mxu0 %v612
      %v735 = vpop.f32.mrb[0].mxu0
      %v736 = vadd.f32 0.0, %v735
      %v737 = vpop.f32.mrb[0].mxu0
      %738 = vmatprep.mubr.f32.mxu0 0.0
      %739 = vmatmul.mubr.f32.gmra.mrb[0].mxu0 %v615
      %v740 = vpop.f32.mrb[0].mxu0
      %v741 = vadd.f32 0.0, %v740
      %v742 = vpop.f32.mrb[0].mxu0
      %743 = vmatprep.mubr.f32.mxu0 0.0
      %744 = vmatmul.mubr.f32.gmra.mrb[0].mxu0 %v618
      %v745 = vpop.f32.mrb[0].mxu0
      %v746 = vadd.f32 0.0, %v745
      %v747 = vpop.f32.mrb[0].mxu0
      %748 = vmatprep.mubr.f32.mxu0 0.0
      %749 = vmatmul.mubr.f32.gmra.mrb[0].mxu0 %v621
      %v750 = vpop.f32.mrb[0].mxu0
      %v751 = vadd.f32 0.0, %v750
      %v752 = vpop.f32.mrb[0].mxu0
      %753 = vmatprep.mubr.f32.mxu0 0.0
      %754 = vmatmul.mubr.f32.gmra.mrb[0].mxu0 %v624
      %v755 = vpop.f32.mrb[0].mxu0
      %v756 = vadd.f32 0.0, %v755
      %v757 = vpop.f32.mrb[0].mxu0
      %758 = vmatprep.mubr.f32.mxu0 0.0
      %759 = vmatmul.mubr.f32.gmra.mrb[0].mxu0 %v627
      %v760 = vpop.f32.mrb[0].mxu0
      %v761 = vadd.f32 0.0, %v760
      %v762 = vpop.f32.mrb[0].mxu0
      %763 = vmatprep.mubr.f32.mxu0 0.0
      %764 = vmatmul.mubr.f32.gmra.mrb[0].mxu0 %v630
      %v765 = vpop.f32.mrb[0].mxu0
      %v766 = vadd.f32 0.0, %v765
      %v767 = vpop.f32.mrb[0].mxu0
      %768 = vmatprep.mubr.f32.mxu0 0.0
      %769 = vmatmul.mubr.f32.gmra.mrb[0].mxu0 %v633
      %v770 = vpop.f32.mrb[0].mxu0
      %v771 = vadd.f32 0.0, %v770
      %v772 = vpop.f32.mrb[0].mxu0
      %773 = vmatprep.mubr.f32.mxu0 0.0
      %774 = vmatmul.mubr.f32.gmra.mrb[0].mxu0 %v636
      %v775 = vpop.f32.mrb[0].mxu0
      %v776 = vadd.f32 0.0, %v775
      %v777 = vpop.f32.mrb[0].mxu0
      %778 = vmatprep.mubr.f32.mxu0 0.0
      %779 = vmatmul.mubr.f32.gmra.mrb[0].mxu0 %v639
      %v780 = vpop.f32.mrb[0].mxu0
      %v781 = vadd.f32 0.0, %v780
      %v782 = vpop.f32.mrb[0].mxu0
      %783 = vmatprep.mubr.f32.mxu0 0.0
      %784 = vmatmul.mubr.f32.gmra.mrb[0].mxu0 %v642
      %v785 = vpop.f32.mrb[0].mxu0
      %v786 = vadd.f32 0.0, %v785
      %v787 = vpop.f32.mrb[0].mxu0
      %788 = vdwg.mxu0
      %789 = vmatprep.subr.mxu0 0.0
      %790 = vmatpush1.msra.mxu0 %v711
      %791 = vmatprep.subr.mxu0 0.0
      %792 = vmatpush1.msra.mxu0 %v716
      %793 = vmatprep.subr.mxu0 0.0
      %794 = vmatpush1.msra.mxu0 %v721
      %795 = vmatprep.subr.mxu0 0.0
      %796 = vmatpush1.msra.mxu0 %v726
      %797 = vmatprep.subr.mxu0 0.0
      %798 = vmatpush1.msra.mxu0 %v731
      %799 = vmatprep.subr.mxu0 0.0
      %800 = vmatpush1.msra.mxu0 %v736
      %801 = vmatprep.subr.mxu0 0.0
      %802 = vmatpush1.msra.mxu0 %v741
      %803 = vmatprep.subr.mxu0 0.0
      %804 = vmatpush1.msra.mxu0 %v746
      %805 = vmatprep.subr.mxu0 0.0
      %806 = vmatpush1.msra.mxu0 %v751
      %807 = vmatprep.subr.mxu0 0.0
      %808 = vmatpush1.msra.mxu0 %v756
      %809 = vmatprep.subr.mxu0 0.0
      %810 = vmatpush1.msra.mxu0 %v761
      %811 = vmatprep.subr.mxu0 0.0
      %812 = vmatpush1.msra.mxu0 %v766
      %813 = vmatprep.subr.mxu0 0.0
      %814 = vmatpush1.msra.mxu0 %v771
      %815 = vmatprep.subr.mxu0 0.0
      %816 = vmatpush1.msra.mxu0 %v776
      %817 = vmatprep.subr.mxu0 0.0
      %818 = vmatpush1.msra.mxu0 %v781
      %819 = vmatprep.subr.mxu0 0.0
      %820 = vmatpush1.msra.mxu0 %v786
      %821 = vmatprep.subr.mxu0 0.0
      %822 = vmatpush1.msra.mxu0 0.0
      %823 = vmatprep.subr.mxu0 0.0
      %824 = vmatpush1.msra.mxu0 0.0
      %825 = vmatprep.subr.mxu0 0.0
      %826 = vmatpush1.msra.mxu0 0.0
      %827 = vmatprep.subr.mxu0 0.0
      %828 = vmatpush1.msra.mxu0 0.0
      %829 = vmatprep.subr.mxu0 0.0
      %830 = vmatpush1.msra.mxu0 0.0
      %831 = vmatprep.subr.mxu0 0.0
      %832 = vmatpush1.msra.mxu0 0.0
      %833 = vmatprep.subr.mxu0 0.0
      %834 = vmatpush1.msra.mxu0 0.0
      %835 = vmatprep.subr.mxu0 0.0
      %836 = vmatpush1.msra.mxu0 0.0
      %837 = vmatprep.subr.mxu0 0.0
      %838 = vmatpush1.msra.mxu0 0.0
      %839 = vmatprep.subr.mxu0 0.0
      %840 = vmatpush1.msra.mxu0 0.0
      %841 = vmatprep.subr.mxu0 0.0
      %842 = vmatpush1.msra.mxu0 0.0
      %843 = vmatprep.subr.mxu0 0.0
      %844 = vmatpush1.msra.mxu0 0.0
      %845 = vmatprep.subr.mxu0 0.0
      %846 = vmatpush1.msra.mxu0 0.0
      %847 = vmatprep.subr.mxu0 0.0
      %848 = vmatpush1.msra.mxu0 0.0
      %849 = vmatprep.subr.mxu0 0.0
      %850 = vmatpush1.msra.mxu0 0.0
      %851 = vmatprep.subr.mxu0 0.0
      %852 = vmatpush1.msra.mxu0 0.0
      %853 = vmatprep.mubr.f32.mxu0 0.0
      %854 = vmatmul.mubr.f32.gmra.mrb[0].mxu0 %v427
      %v855 = vpop.f32.mrb[0].mxu0
      %v856 = vadd.f32 0.0, %v855
      %v857 = vpop.f32.mrb[0].mxu0
      %858 = vmatprep.mubr.f32.mxu0 0.0
      %859 = vmatmul.mubr.f32.gmra.mrb[0].mxu0 %v428
      %v860 = vpop.f32.mrb[0].mxu0
      %v861 = vadd.f32 0.0, %v860
      %v862 = vpop.f32.mrb[0].mxu0
      %863 = vdwg.mxu0
      %v864 = vmul.f32 %v856, %v562
      %v865 = vmul.f32 %v861, %v563
      %866 = vst.msk [vmem:[%s301] sm:$0xff] %vm315, %v864
      %867 = vst.msk [vmem:[%s301 + $0x8] sm:$0xff] %vm315, %v865
      %p868 = scmp.lt.s32.totalorder %s19, 1
      %s869 = scalar_select %p868, %s19, 1
      %p870 = scmp.lt.s32.totalorder %s20, 3
      %s871 = scalar_select %p870, %s20, 3
      %s872 = smul.addr %s871, 2
      %s873 = smul.addr %s869, 8
      %s874 = sadd.s32 %s872, %s873
      %s875 = smul.addr %s874, 8
      %s876 = scalar_lea.vmem %s4, %s875
      // Predicated region
      $region37: #{attention_forward.7} parent=35 // pred_check
        %p877 = pneg %p152
      $region38: #{attention_forward.7} parent=35 // pred_check_branch
        %879 = sbr.rel (%p877) target = $region40
      $region39: #{attention_forward.7} parent=35 // pred_region
        _
      $region40: #{attention_forward.7} parent=35 // pred_fallthru
        _
    $region36: #{attention_forward.7} parent=5 // pred_fallthru
      _
    %p880 = scmp.le.s32.totalorder 2, %s10
    // Predicated region
    $region41: #{attention_forward.7} parent=5 // pred_check
      %p881 = pneg %p880
    $region42: #{attention_forward.7} parent=5 // pred_check_branch
      %883 = sbr.rel (%p881) target = $region44
    $region43: #{attention_forward.7} parent=5 // pred_region
      %s884 = ssub.s32 %s10, 2
      // Predicated region
      $region45: #{attention_forward.7} parent=43 // pred_check
        %p885 = pneg %p158
      $region46: #{attention_forward.7} parent=43 // pred_check_branch
        %887 = sbr.rel (%p885) target = $region48
      $region47: #{attention_forward.7} parent=43 // pred_region
        %p888 = scmp.lt.s32.totalorder %s21, 1
        %s889 = scalar_select %p888, %s21, 1
        %p890 = scmp.lt.s32.totalorder %s22, 3
        %s891 = scalar_select %p890, %s22, 3
        %s892 = smul.addr %s891, 2
        %s893 = smul.addr %s889, 8
        %s894 = sadd.s32 %s892, %s893
        %s895 = smul.addr %s894, 8
        %s896 = scalar_lea.vmem %s4, %s895
      $region48: #{attention_forward.7} parent=43 // pred_fallthru
        _
    $region44: #{attention_forward.7} parent=5 // pred_fallthru
      _
  $region6: #{attention_forward.7} parent=0 // loop_footer
    %s14 = sadd.s32 1, %s10
  $region7: #{attention_forward.7} parent=0 // loop_footer_branch
    %9 = sbr.rel target = $region3
  $region8: #{attention_forward.7} parent=0 // loop_exit
    _

// kernel: attention_forward.9
$region0: #{attention_forward.9}
  #allocation0 [shape = 'u32[]', space=smem, size = 0x4, offset = 0x4, fixed_abs, tag = 'smem constant byte address 0x4 - core index']
  #allocation1 [shape = 'u32[144,128]{1,0:T(1,128)}', space=vmem, size = 0x12000, scoped, tag = 'internal scratch']
  #allocation2 [shape = 'f32[1,1]{1,0:T(1,128)S(1)}', space=vmem, size = 0x200, scoped, tag = 'scoped memory for attention_forward.9']
  %s0 = inlined_call_operand.vmem [shape: f32[128,16], index: 0, kind: input, shape index: {}]
  %s1 = inlined_call_operand.vmem [shape: f32[128,16], index: 1, kind: input, shape index: {}]
  %s2 = inlined_call_operand.vmem [shape: f32[16,16], index: 2, kind: input, shape index: {}]
  %s3 = inlined_call_operand.vmem [shape: f32[1,16], index: 3, kind: input, shape index: {}]
  %s4 = inlined_call_operand.vmem [shape: f32[1,16], index: 4, kind: input, shape index: {}]
  %s5 = inlined_call_operand.vmem [shape: f32[1,16], index: 5, kind: input, shape index: {}]
  %s6 = inlined_call_operand.<no memory space> [shape: f32[1,1], index: 6, kind: input, shape index: {}]
  %s7 = inlined_call_operand.vmem [shape: f32[128,16], index: 7, kind: output, shape index: {}]
  %s8 = sld [smem:[#allocation0]]
  $region38: #{attention_forward.9} parent=0
    _
  %s10 = ssub.s32 1, %s8
  %s11 = scalar_select 0, %s10, %s8
  %v12 = vstv %s6
  %13 = vst [vmem:[#allocation2] sm:$0x1] %v12
  // Predicated region
  $region2: #{attention_forward.9} parent=0 // pred_check
    _
  $region3: #{attention_forward.9} parent=0 // pred_check_branch
    %15 = sbr.rel (0) target = $region5
  $region4: #{attention_forward.9} parent=0 // pred_region
    _
  $region5: #{attention_forward.9} parent=0 // pred_fallthru
    _
  // Predicated region
  $region6: #{attention_forward.9} parent=0 // pred_check
    _
  $region7: #{attention_forward.9} parent=0 // pred_check_branch
    %17 = sbr.rel (0) target = $region9
  $region8: #{attention_forward.9} parent=0 // pred_region
    _
  $region9: #{attention_forward.9} parent=0 // pred_fallthru
    _
  // Predicated region
  $region10: #{attention_forward.9} parent=0 // pred_check
    _
  $region11: #{attention_forward.9} parent=0 // pred_check_branch
    %19 = sbr.rel (0) target = $region13
  $region12: #{attention_forward.9} parent=0 // pred_region
    _
  $region13: #{attention_forward.9} parent=0 // pred_fallthru
    _
  // Predicated region
  $region14: #{attention_forward.9} parent=0 // pred_check
    _
  $region15: #{attention_forward.9} parent=0 // pred_check_branch
    %21 = sbr.rel (0) target = $region17
  $region16: #{attention_forward.9} parent=0 // pred_region
    _
  $region17: #{attention_forward.9} parent=0 // pred_fallthru
    _
  // Predicated region
  $region18: #{attention_forward.9} parent=0 // pred_check
    _
  $region19: #{attention_forward.9} parent=0 // pred_check_branch
    %23 = sbr.rel (0) target = $region21
  $region20: #{attention_forward.9} parent=0 // pred_region
    _
  $region21: #{attention_forward.9} parent=0 // pred_fallthru
    _
  // Predicated region
  $region22: #{attention_forward.9} parent=0 // pred_check
    _
  $region23: #{attention_forward.9} parent=0 // pred_check_branch
    %25 = sbr.rel (0) target = $region25
  $region24: #{attention_forward.9} parent=0 // pred_region
    _
  $region25: #{attention_forward.9} parent=0 // pred_fallthru
    _
  // Predicated region
  $region26: #{attention_forward.9} parent=0 // pred_check
    _
  $region27: #{attention_forward.9} parent=0 // pred_check_branch
    %27 = sbr.rel (0) target = $region29
  $region28: #{attention_forward.9} parent=0 // pred_region
    _
  $region29: #{attention_forward.9} parent=0 // pred_fallthru
    _
  %v28 = vld [vmem:[%s0] sm:$0xff]
  %v29 = vld [vmem:[%s0 + $0x8] sm:$0xff]
  %v30 = vld [vmem:[%s0 + $0x10] sm:$0xff]
  %v31 = vld [vmem:[%s0 + $0x18] sm:$0xff]
  %v32 = vld [vmem:[%s0 + $0x20] sm:$0xff]
  %v33 = vld [vmem:[%s0 + $0x28] sm:$0xff]
  %v34 = vld [vmem:[%s0 + $0x30] sm:$0xff]
  %v35 = vld [vmem:[%s0 + $0x38] sm:$0xff]
  %v36 = vld [vmem:[%s0 + $0x40] sm:$0xff]
  %v37 = vld [vmem:[%s0 + $0x48] sm:$0xff]
  %v38 = vld [vmem:[%s0 + $0x50] sm:$0xff]
  %v39 = vld [vmem:[%s0 + $0x58] sm:$0xff]
  %v40 = vld [vmem:[%s0 + $0x60] sm:$0xff]
  %v41 = vld [vmem:[%s0 + $0x68] sm:$0xff]
  %v42 = vld [vmem:[%s0 + $0x70] sm:$0xff]
  %v43 = vld [vmem:[%s0 + $0x78] sm:$0xff]
  %v44 = vld [vmem:[%s1] sm:$0xff]
  %v45 = vld [vmem:[%s1 + $0x8] sm:$0xff]
  %v46 = vld [vmem:[%s1 + $0x10] sm:$0xff]
  %v47 = vld [vmem:[%s1 + $0x18] sm:$0xff]
  %v48 = vld [vmem:[%s1 + $0x20] sm:$0xff]
  %v49 = vld [vmem:[%s1 + $0x28] sm:$0xff]
  %v50 = vld [vmem:[%s1 + $0x30] sm:$0xff]
  %v51 = vld [vmem:[%s1 + $0x38] sm:$0xff]
  %v52 = vld [vmem:[%s1 + $0x40] sm:$0xff]
  %v53 = vld [vmem:[%s1 + $0x48] sm:$0xff]
  %v54 = vld [vmem:[%s1 + $0x50] sm:$0xff]
  %v55 = vld [vmem:[%s1 + $0x58] sm:$0xff]
  %v56 = vld [vmem:[%s1 + $0x60] sm:$0xff]
  %v57 = vld [vmem:[%s1 + $0x68] sm:$0xff]
  %v58 = vld [vmem:[%s1 + $0x70] sm:$0xff]
  %v59 = vld [vmem:[%s1 + $0x78] sm:$0xff]
  %v60 = vld [vmem:[%s2] sm:$0xff]
  %v61 = vld [vmem:[%s2 + $0x8] sm:$0xff]
  %v62 = vld [vmem:[%s3] sm:$0x1]
  %v64 = vlaneseq
  %v65 = vshrl.u32 %v64, 7
  %v66 = vsub.s32 0, %v65
  %v67 = vrot.slane %v62, %v66
  %vm69 = vcmask 130048
  %v71 = vsel %vm69, %v44, 0
  %v74 = vsel %vm69, %v45, 0
  %v77 = vsel %vm69, %v46, 0
  %v80 = vsel %vm69, %v47, 0
  %v83 = vsel %vm69, %v48, 0
  %v86 = vsel %vm69, %v49, 0
  %v89 = vsel %vm69, %v50, 0
  %v92 = vsel %vm69, %v51, 0
  %v95 = vsel %vm69, %v52, 0
  %v98 = vsel %vm69, %v53, 0
  %v101 = vsel %vm69, %v54, 0
  %v104 = vsel %vm69, %v55, 0
  %v107 = vsel %vm69, %v56, 0
  %v110 = vsel %vm69, %v57, 0
  %v113 = vsel %vm69, %v58, 0
  %v116 = vsel %vm69, %v59, 0
  %118 = vmatprep.subr.mxu0 0.0
  %119 = vmatpush1.msra.mxu0 %v60
  %120 = vmatprep.subr.mxu0 0.0
  %121 = vmatpush1.msra.mxu0 %v61
  %122 = vmatprep.subr.mxu0 0.0
  %123 = vmatpush1.msra.mxu0 0.0
  %124 = vmatprep.subr.mxu0 0.0
  %125 = vmatpush1.msra.mxu0 0.0
  %126 = vmatprep.subr.mxu0 0.0
  %127 = vmatpush1.msra.mxu0 0.0
  %128 = vmatprep.subr.mxu0 0.0
  %129 = vmatpush1.msra.mxu0 0.0
  %130 = vmatprep.subr.mxu0 0.0
  %131 = vmatpush1.msra.mxu0 0.0
  %132 = vmatprep.subr.mxu0 0.0
  %133 = vmatpush1.msra.mxu0 0.0
  %134 = vmatprep.subr.mxu0 0.0
  %135 = vmatpush1.msra.mxu0 0.0
  %136 = vmatprep.subr.mxu0 0.0
  %137 = vmatpush1.msra.mxu0 0.0
  %138 = vmatprep.subr.mxu0 0.0
  %139 = vmatpush1.msra.mxu0 0.0
  %140 = vmatprep.subr.mxu0 0.0
  %141 = vmatpush1.msra.mxu0 0.0
  %142 = vmatprep.subr.mxu0 0.0
  %143 = vmatpush1.msra.mxu0 0.0
  %144 = vmatprep.subr.mxu0 0.0
  %145 = vmatpush1.msra.mxu0 0.0
  %146 = vmatprep.subr.mxu0 0.0
  %147 = vmatpush1.msra.mxu0 0.0
  %148 = vmatprep.subr.mxu0 0.0
  %149 = vmatpush1.msra.mxu0 0.0
  %150 = vmatprep.subr.mxu0 0.0
  %151 = vmatpush1.msra.mxu0 0.0
  %152 = vmatprep.subr.mxu0 0.0
  %153 = vmatpush1.msra.mxu0 0.0
  %154 = vmatprep.subr.mxu0 0.0
  %155 = vmatpush1.msra.mxu0 0.0
  %156 = vmatprep.subr.mxu0 0.0
  %157 = vmatpush1.msra.mxu0 0.0
  %158 = vmatprep.subr.mxu0 0.0
  %159 = vmatpush1.msra.mxu0 0.0
  %160 = vmatprep.subr.mxu0 0.0
  %161 = vmatpush1.msra.mxu0 0.0
  %162 = vmatprep.subr.mxu0 0.0
  %163 = vmatpush1.msra.mxu0 0.0
  %164 = vmatprep.subr.mxu0 0.0
  %165 = vmatpush1.msra.mxu0 0.0
  %166 = vmatprep.subr.mxu0 0.0
  %167 = vmatpush1.msra.mxu0 0.0
  %168 = vmatprep.subr.mxu0 0.0
  %169 = vmatpush1.msra.mxu0 0.0
  %170 = vmatprep.subr.mxu0 0.0
  %171 = vmatpush1.msra.mxu0 0.0
  %172 = vmatprep.subr.mxu0 0.0
  %173 = vmatpush1.msra.mxu0 0.0
  %174 = vmatprep.subr.mxu0 0.0
  %175 = vmatpush1.msra.mxu0 0.0
  %176 = vmatprep.subr.mxu0 0.0
  %177 = vmatpush1.msra.mxu0 0.0
  %178 = vmatprep.subr.mxu0 0.0
  %179 = vmatpush1.msra.mxu0 0.0
  %180 = vmatprep.subr.mxu0 0.0
  %181 = vmatpush1.msra.mxu0 0.0
  %182 = vmatprep.mubr.f32.mxu0 0.0
  %183 = vmatmul.mubr.f32.gmra.mrb[0].mxu0 %v71
  %v184 = vpop.f32.mrb[0].mxu0
  %v185 = vadd.f32 %v67, %v184
  %v186 = vpop.f32.mrb[0].mxu0
  %187 = vmatprep.mubr.f32.mxu0 0.0
  %188 = vmatmul.mubr.f32.gmra.mrb[0].mxu0 %v74
  %v189 = vpop.f32.mrb[0].mxu0
  %v190 = vadd.f32 %v67, %v189
  %v191 = vpop.f32.mrb[0].mxu0
  %192 = vmatprep.mubr.f32.mxu0 0.0
  %193 = vmatmul.mubr.f32.gmra.mrb[0].mxu0 %v77
  %v194 = vpop.f32.mrb[0].mxu0
  %v195 = vadd.f32 %v67, %v194
  %v196 = vpop.f32.mrb[0].mxu0
  %197 = vmatprep.mubr.f32.mxu0 0.0
  %198 = vmatmul.mubr.f32.gmra.mrb[0].mxu0 %v80
  %v199 = vpop.f32.mrb[0].mxu0
  %v200 = vadd.f32 %v67, %v199
  %v201 = vpop.f32.mrb[0].mxu0
  %202 = vmatprep.mubr.f32.mxu0 0.0
  %203 = vmatmul.mubr.f32.gmra.mrb[0].mxu0 %v83
  %v204 = vpop.f32.mrb[0].mxu0
  %v205 = vadd.f32 %v67, %v204
  %v206 = vpop.f32.mrb[0].mxu0
  %207 = vmatprep.mubr.f32.mxu0 0.0
  %208 = vmatmul.mubr.f32.gmra.mrb[0].mxu0 %v86
  %v209 = vpop.f32.mrb[0].mxu0
  %v210 = vadd.f32 %v67, %v209
  %v211 = vpop.f32.mrb[0].mxu0
  %212 = vmatprep.mubr.f32.mxu0 0.0
  %213 = vmatmul.mubr.f32.gmra.mrb[0].mxu0 %v89
  %v214 = vpop.f32.mrb[0].mxu0
  %v215 = vadd.f32 %v67, %v214
  %v216 = vpop.f32.mrb[0].mxu0
  %217 = vmatprep.mubr.f32.mxu0 0.0
  %218 = vmatmul.mubr.f32.gmra.mrb[0].mxu0 %v92
  %v219 = vpop.f32.mrb[0].mxu0
  %v220 = vadd.f32 %v67, %v219
  %v221 = vpop.f32.mrb[0].mxu0
  %222 = vmatprep.mubr.f32.mxu0 0.0
  %223 = vmatmul.mubr.f32.gmra.mrb[0].mxu0 %v95
  %v224 = vpop.f32.mrb[0].mxu0
  %v225 = vadd.f32 %v67, %v224
  %v226 = vpop.f32.mrb[0].mxu0
  %227 = vmatprep.mubr.f32.mxu0 0.0
  %228 = vmatmul.mubr.f32.gmra.mrb[0].mxu0 %v98
  %v229 = vpop.f32.mrb[0].mxu0
  %v230 = vadd.f32 %v67, %v229
  %v231 = vpop.f32.mrb[0].mxu0
  %232 = vmatprep.mubr.f32.mxu0 0.0
  %233 = vmatmul.mubr.f32.gmra.mrb[0].mxu0 %v101
  %v234 = vpop.f32.mrb[0].mxu0
  %v235 = vadd.f32 %v67, %v234
  %v236 = vpop.f32.mrb[0].mxu0
  %237 = vmatprep.mubr.f32.mxu0 0.0
  %238 = vmatmul.mubr.f32.gmra.mrb[0].mxu0 %v104
  %v239 = vpop.f32.mrb[0].mxu0
  %v240 = vadd.f32 %v67, %v239
  %v241 = vpop.f32.mrb[0].mxu0
  %242 = vmatprep.mubr.f32.mxu0 0.0
  %243 = vmatmul.mubr.f32.gmra.mrb[0].mxu0 %v107
  %v244 = vpop.f32.mrb[0].mxu0
  %v245 = vadd.f32 %v67, %v244
  %v246 = vpop.f32.mrb[0].mxu0
  %247 = vmatprep.mubr.f32.mxu0 0.0
  %248 = vmatmul.mubr.f32.gmra.mrb[0].mxu0 %v110
  %v249 = vpop.f32.mrb[0].mxu0
  %v250 = vadd.f32 %v67, %v249
  %v251 = vpop.f32.mrb[0].mxu0
  %252 = vmatprep.mubr.f32.mxu0 0.0
  %253 = vmatmul.mubr.f32.gmra.mrb[0].mxu0 %v113
  %v254 = vpop.f32.mrb[0].mxu0
  %v255 = vadd.f32 %v67, %v254
  %v256 = vpop.f32.mrb[0].mxu0
  %257 = vmatprep.mubr.f32.mxu0 0.0
  %258 = vmatmul.mubr.f32.gmra.mrb[0].mxu0 %v116
  %v259 = vpop.f32.mrb[0].mxu0
  %v260 = vadd.f32 %v67, %v259
  %v261 = vpop.f32.mrb[0].mxu0
  %262 = vdwg.mxu0
  %v263 = vld [vmem:[%s4] sm:$0x1]
  %v265 = vlaneseq
  %v266 = vshrl.u32 %v265, 7
  %v267 = vsub.s32 0, %v266
  %v268 = vrot.slane %v263, %v267
  %v270 = vmul.f32 %v28, %v268
  %v271 = vmul.f32 %v29, %v268
  %v272 = vmul.f32 %v30, %v268
  %v273 = vmul.f32 %v31, %v268
  %v274 = vmul.f32 %v32, %v268
  %v275 = vmul.f32 %v33, %v268
  %v276 = vmul.f32 %v34, %v268
  %v277 = vmul.f32 %v35, %v268
  %v278 = vmul.f32 %v36, %v268
  %v279 = vmul.f32 %v37, %v268
  %v280 = vmul.f32 %v38, %v268
  %v281 = vmul.f32 %v39, %v268
  %v282 = vmul.f32 %v40, %v268
  %v283 = vmul.f32 %v41, %v268
  %v284 = vmul.f32 %v42, %v268
  %v285 = vmul.f32 %v43, %v268
  %v286 = vld [vmem:[%s5] sm:$0x1]
  %v288 = vlaneseq
  %v289 = vshrl.u32 %v288, 7
  %v290 = vsub.s32 0, %v289
  %v291 = vrot.slane %v286, %v290
  %v293 = vmul.f32 %v185, %v291
  %v294 = vmul.f32 %v190, %v291
  %v295 = vmul.f32 %v195, %v291
  %v296 = vmul.f32 %v200, %v291
  %v297 = vmul.f32 %v205, %v291
  %v298 = vmul.f32 %v210, %v291
  %v299 = vmul.f32 %v215, %v291
  %v300 = vmul.f32 %v220, %v291
  %v301 = vmul.f32 %v225, %v291
  %v302 = vmul.f32 %v230, %v291
  %v303 = vmul.f32 %v235, %v291
  %v304 = vmul.f32 %v240, %v291
  %v305 = vmul.f32 %v245, %v291
  %v306 = vmul.f32 %v250, %v291
  %v307 = vmul.f32 %v255, %v291
  %v308 = vmul.f32 %v260, %v291
  %v309 = vadd.f32 %v270, %v293
  %v310 = vadd.f32 %v271, %v294
  %v311 = vadd.f32 %v272, %v295
  %v312 = vadd.f32 %v273, %v296
  %v313 = vadd.f32 %v274, %v297
  %v314 = vadd.f32 %v275, %v298
  %v315 = vadd.f32 %v276, %v299
  %v316 = vadd.f32 %v277, %v300
  %v317 = vadd.f32 %v278, %v301
  %v318 = vadd.f32 %v279, %v302
  %v319 = vadd.f32 %v280, %v303
  %v320 = vadd.f32 %v281, %v304
  %v321 = vadd.f32 %v282, %v305
  %v322 = vadd.f32 %v283, %v306
  %v323 = vadd.f32 %v284, %v307
  %v324 = vadd.f32 %v285, %v308
  %v325 = vmul.f32 %v309, %v309
  %v326 = vmul.f32 %v310, %v310
  %v327 = vmul.f32 %v311, %v311
  %v328 = vmul.f32 %v312, %v312
  %v329 = vmul.f32 %v313, %v313
  %v330 = vmul.f32 %v314, %v314
  %v331 = vmul.f32 %v315, %v315
  %v332 = vmul.f32 %v316, %v316
  %v333 = vmul.f32 %v317, %v317
  %v334 = vmul.f32 %v318, %v318
  %v335 = vmul.f32 %v319, %v319
  %v336 = vmul.f32 %v320, %v320
  %v337 = vmul.f32 %v321, %v321
  %v338 = vmul.f32 %v322, %v322
  %v339 = vmul.f32 %v323, %v323
  %v340 = vmul.f32 %v324, %v324
  %v341 = vsel %vm69, %v325, 0.0
  %342 = vadd.xlane.f32.xlu0 %v341
  %v343 = vpop.xlane.xlu0 %342
  %v344 = vsel %vm69, %v326, 0.0
  %345 = vadd.xlane.f32.xlu0 %v344
  %v346 = vpop.xlane.xlu0 %345
  %v347 = vsel %vm69, %v327, 0.0
  %348 = vadd.xlane.f32.xlu0 %v347
  %v349 = vpop.xlane.xlu0 %348
  %v350 = vsel %vm69, %v328, 0.0
  %351 = vadd.xlane.f32.xlu0 %v350
  %v352 = vpop.xlane.xlu0 %351
  %v353 = vsel %vm69, %v329, 0.0
  %354 = vadd.xlane.f32.xlu0 %v353
  %v355 = vpop.xlane.xlu0 %354
  %v356 = vsel %vm69, %v330, 0.0
  %357 = vadd.xlane.f32.xlu0 %v356
  %v358 = vpop.xlane.xlu0 %357
  %v359 = vsel %vm69, %v331, 0.0
  %360 = vadd.xlane.f32.xlu0 %v359
  %v361 = vpop.xlane.xlu0 %360
  %v362 = vsel %vm69, %v332, 0.0
  %363 = vadd.xlane.f32.xlu0 %v362
  %v364 = vpop.xlane.xlu0 %363
  %v365 = vsel %vm69, %v333, 0.0
  %366 = vadd.xlane.f32.xlu0 %v365
  %v367 = vpop.xlane.xlu0 %366
  %v368 = vsel %vm69, %v334, 0.0
  %369 = vadd.xlane.f32.xlu0 %v368
  %v370 = vpop.xlane.xlu0 %369
  %v371 = vsel %vm69, %v335, 0.0
  %372 = vadd.xlane.f32.xlu0 %v371
  %v373 = vpop.xlane.xlu0 %372
  %v374 = vsel %vm69, %v336, 0.0
  %375 = vadd.xlane.f32.xlu0 %v374
  %v376 = vpop.xlane.xlu0 %375
  %v377 = vsel %vm69, %v337, 0.0
  %378 = vadd.xlane.f32.xlu0 %v377
  %v379 = vpop.xlane.xlu0 %378
  %v380 = vsel %vm69, %v338, 0.0
  %381 = vadd.xlane.f32.xlu0 %v380
  %v382 = vpop.xlane.xlu0 %381
  %v383 = vsel %vm69, %v339, 0.0
  %384 = vadd.xlane.f32.xlu0 %v383
  %v385 = vpop.xlane.xlu0 %384
  %v386 = vsel %vm69, %v340, 0.0
  %387 = vadd.xlane.f32.xlu0 %v386
  %v388 = vpop.xlane.xlu0 %387
  %v389 = vrsqrt.pop %v343
  %v390 = vmul.f32 %v343, %v389
  %vm391 = vcmp.eq.f32.partialorder %v343, inf
  %v392 = vsel %vm391, %v343, %v390
  %vm393 = vcmp.eq.f32.partialorder %v343, 0.0
  %v394 = vand.u32 %v343, 2147483648
  %v395 = vsel %vm393, %v394, %v392
  %v396 = vrsqrt.pop %v346
  %v397 = vmul.f32 %v346, %v396
  %vm398 = vcmp.eq.f32.partialorder %v346, inf
  %v399 = vsel %vm398, %v346, %v397
  %vm400 = vcmp.eq.f32.partialorder %v346, 0.0
  %v401 = vand.u32 %v346, 2147483648
  %v402 = vsel %vm400, %v401, %v399
  %v403 = vrsqrt.pop %v349
  %v404 = vmul.f32 %v349, %v403
  %vm405 = vcmp.eq.f32.partialorder %v349, inf
  %v406 = vsel %vm405, %v349, %v404
  %vm407 = vcmp.eq.f32.partialorder %v349, 0.0
  %v408 = vand.u32 %v349, 2147483648
  %v409 = vsel %vm407, %v408, %v406
  %v410 = vrsqrt.pop %v352
  %v411 = vmul.f32 %v352, %v410
  %vm412 = vcmp.eq.f32.partialorder %v352, inf
  %v413 = vsel %vm412, %v352, %v411
  %vm414 = vcmp.eq.f32.partialorder %v352, 0.0
  %v415 = vand.u32 %v352, 2147483648
  %v416 = vsel %vm414, %v415, %v413
  %v417 = vrsqrt.pop %v355
  %v418 = vmul.f32 %v355, %v417
  %vm419 = vcmp.eq.f32.partialorder %v355, inf
  %v420 = vsel %vm419, %v355, %v418
  %vm421 = vcmp.eq.f32.partialorder %v355, 0.0
  %v422 = vand.u32 %v355, 2147483648
  %v423 = vsel %vm421, %v422, %v420
  %v424 = vrsqrt.pop %v358
  %v425 = vmul.f32 %v358, %v424
  %vm426 = vcmp.eq.f32.partialorder %v358, inf
  %v427 = vsel %vm426, %v358, %v425
  %vm428 = vcmp.eq.f32.partialorder %v358, 0.0
  %v429 = vand.u32 %v358, 2147483648
  %v430 = vsel %vm428, %v429, %v427
  %v431 = vrsqrt.pop %v361
  %v432 = vmul.f32 %v361, %v431
  %vm433 = vcmp.eq.f32.partialorder %v361, inf
  %v434 = vsel %vm433, %v361, %v432
  %vm435 = vcmp.eq.f32.partialorder %v361, 0.0
  %v436 = vand.u32 %v361, 2147483648
  %v437 = vsel %vm435, %v436, %v434
  %v438 = vrsqrt.pop %v364
  %v439 = vmul.f32 %v364, %v438
  %vm440 = vcmp.eq.f32.partialorder %v364, inf
  %v441 = vsel %vm440, %v364, %v439
  %vm442 = vcmp.eq.f32.partialorder %v364, 0.0
  %v443 = vand.u32 %v364, 2147483648
  %v444 = vsel %vm442, %v443, %v441
  %v445 = vrsqrt.pop %v367
  %v446 = vmul.f32 %v367, %v445
  %vm447 = vcmp.eq.f32.partialorder %v367, inf
  %v448 = vsel %vm447, %v367, %v446
  %vm449 = vcmp.eq.f32.partialorder %v367, 0.0
  %v450 = vand.u32 %v367, 2147483648
  %v451 = vsel %vm449, %v450, %v448
  %v452 = vrsqrt.pop %v370
  %v453 = vmul.f32 %v370, %v452
  %vm454 = vcmp.eq.f32.partialorder %v370, inf
  %v455 = vsel %vm454, %v370, %v453
  %vm456 = vcmp.eq.f32.partialorder %v370, 0.0
  %v457 = vand.u32 %v370, 2147483648
  %v458 = vsel %vm456, %v457, %v455
  %v459 = vrsqrt.pop %v373
  %v460 = vmul.f32 %v373, %v459
  %vm461 = vcmp.eq.f32.partialorder %v373, inf
  %v462 = vsel %vm461, %v373, %v460
  %vm463 = vcmp.eq.f32.partialorder %v373, 0.0
  %v464 = vand.u32 %v373, 2147483648
  %v465 = vsel %vm463, %v464, %v462
  %v466 = vrsqrt.pop %v376
  %v467 = vmul.f32 %v376, %v466
  %vm468 = vcmp.eq.f32.partialorder %v376, inf
  %v469 = vsel %vm468, %v376, %v467
  %vm470 = vcmp.eq.f32.partialorder %v376, 0.0
  %v471 = vand.u32 %v376, 2147483648
  %v472 = vsel %vm470, %v471, %v469
  %v473 = vrsqrt.pop %v379
  %v474 = vmul.f32 %v379, %v473
  %vm475 = vcmp.eq.f32.partialorder %v379, inf
  %v476 = vsel %vm475, %v379, %v474
  %vm477 = vcmp.eq.f32.partialorder %v379, 0.0
  %v478 = vand.u32 %v379, 2147483648
  %v479 = vsel %vm477, %v478, %v476
  %v480 = vrsqrt.pop %v382
  %v481 = vmul.f32 %v382, %v480
  %vm482 = vcmp.eq.f32.partialorder %v382, inf
  %v483 = vsel %vm482, %v382, %v481
  %vm484 = vcmp.eq.f32.partialorder %v382, 0.0
  %v485 = vand.u32 %v382, 2147483648
  %v486 = vsel %vm484, %v485, %v483
  %v487 = vrsqrt.pop %v385
  %v488 = vmul.f32 %v385, %v487
  %vm489 = vcmp.eq.f32.partialorder %v385, inf
  %v490 = vsel %vm489, %v385, %v488
  %vm491 = vcmp.eq.f32.partialorder %v385, 0.0
  %v492 = vand.u32 %v385, 2147483648
  %v493 = vsel %vm491, %v492, %v490
  %v494 = vrsqrt.pop %v388
  %v495 = vmul.f32 %v388, %v494
  %vm496 = vcmp.eq.f32.partialorder %v388, inf
  %v497 = vsel %vm496, %v388, %v495
  %vm498 = vcmp.eq.f32.partialorder %v388, 0.0
  %v499 = vand.u32 %v388, 2147483648
  %v500 = vsel %vm498, %v499, %v497
  %v501 = vmul.f32 %v395, 0.25
  %v502 = vmul.f32 %v402, 0.25
  %v503 = vmul.f32 %v409, 0.25
  %v504 = vmul.f32 %v416, 0.25
  %v505 = vmul.f32 %v423, 0.25
  %v506 = vmul.f32 %v430, 0.25
  %v507 = vmul.f32 %v437, 0.25
  %v508 = vmul.f32 %v444, 0.25
  %v509 = vmul.f32 %v451, 0.25
  %v510 = vmul.f32 %v458, 0.25
  %v511 = vmul.f32 %v465, 0.25
  %v512 = vmul.f32 %v472, 0.25
  %v513 = vmul.f32 %v479, 0.25
  %v514 = vmul.f32 %v486, 0.25
  %v515 = vmul.f32 %v493, 0.25
  %v516 = vmul.f32 %v500, 0.25
  %v517 = vmax.f32 %v501, 0.0001
  %v518 = vmax.f32 %v502, 0.0001
  %v519 = vmax.f32 %v503, 0.0001
  %v520 = vmax.f32 %v504, 0.0001
  %v521 = vmax.f32 %v505, 0.0001
  %v522 = vmax.f32 %v506, 0.0001
  %v523 = vmax.f32 %v507, 0.0001
  %v524 = vmax.f32 %v508, 0.0001
  %v525 = vmax.f32 %v509, 0.0001
  %v526 = vmax.f32 %v510, 0.0001
  %v527 = vmax.f32 %v511, 0.0001
  %v528 = vmax.f32 %v512, 0.0001
  %v529 = vmax.f32 %v513, 0.0001
  %v530 = vmax.f32 %v514, 0.0001
  %v531 = vmax.f32 %v515, 0.0001
  %v532 = vmax.f32 %v516, 0.0001
  %v533 = vrcp.pop %v517
  %v534 = vrcp.pop %v518
  %v535 = vrcp.pop %v519
  %v536 = vrcp.pop %v520
  %v537 = vrcp.pop %v521
  %v538 = vrcp.pop %v522
  %v539 = vrcp.pop %v523
  %v540 = vrcp.pop %v524
  %v541 = vrcp.pop %v525
  %v542 = vrcp.pop %v526
  %v543 = vrcp.pop %v527
  %v544 = vrcp.pop %v528
  %v545 = vrcp.pop %v529
  %v546 = vrcp.pop %v530
  %v547 = vrcp.pop %v531
  %v548 = vrcp.pop %v532
  %v549 = vmul.f32 %v309, %v533
  %v550 = vmul.f32 %v310, %v534
  %v551 = vmul.f32 %v311, %v535
  %v552 = vmul.f32 %v312, %v536
  %v553 = vmul.f32 %v313, %v537
  %v554 = vmul.f32 %v314, %v538
  %v555 = vmul.f32 %v315, %v539
  %v556 = vmul.f32 %v316, %v540
  %v557 = vmul.f32 %v317, %v541
  %v558 = vmul.f32 %v318, %v542
  %v559 = vmul.f32 %v319, %v543
  %v560 = vmul.f32 %v320, %v544
  %v561 = vmul.f32 %v321, %v545
  %v562 = vmul.f32 %v322, %v546
  %v563 = vmul.f32 %v323, %v547
  %v564 = vmul.f32 %v324, %v548
  %v565 = vld [vmem:[#allocation2] sm:$0x1]
  %v567 = vlaneseq
  %v568 = vshrl.u32 %v567, 7
  %v569 = vsub.s32 0, %v568
  %v570 = vrot.slane %v565, %v569
  %571 = vset.pattern.permute.xlu0 0
  %572 = vperm.xlu0 %571, %v570
  %v573 = vpop.permute.xlu0 %572
  %v575 = vmul.f32 %v549, %v573
  %v576 = vmul.f32 %v550, %v573
  %v577 = vmul.f32 %v551, %v573
  %v578 = vmul.f32 %v552, %v573
  %v579 = vmul.f32 %v553, %v573
  %v580 = vmul.f32 %v554, %v573
  %v581 = vmul.f32 %v555, %v573
  %v582 = vmul.f32 %v556, %v573
  %v583 = vmul.f32 %v557, %v573
  %v584 = vmul.f32 %v558, %v573
  %v585 = vmul.f32 %v559, %v573
  %v586 = vmul.f32 %v560, %v573
  %v587 = vmul.f32 %v561, %v573
  %v588 = vmul.f32 %v562, %v573
  %v589 = vmul.f32 %v563, %v573
  %v590 = vmul.f32 %v564, %v573
  %591 = vst.msk [vmem:[%s7] sm:$0xff] %vm69, %v575
  %592 = vst.msk [vmem:[%s7 + $0x8] sm:$0xff] %vm69, %v576
  %593 = vst.msk [vmem:[%s7 + $0x10] sm:$0xff] %vm69, %v577
  %594 = vst.msk [vmem:[%s7 + $0x18] sm:$0xff] %vm69, %v578
  %595 = vst.msk [vmem:[%s7 + $0x20] sm:$0xff] %vm69, %v579
  %596 = vst.msk [vmem:[%s7 + $0x28] sm:$0xff] %vm69, %v580
  %597 = vst.msk [vmem:[%s7 + $0x30] sm:$0xff] %vm69, %v581
  %598 = vst.msk [vmem:[%s7 + $0x38] sm:$0xff] %vm69, %v582
  %599 = vst.msk [vmem:[%s7 + $0x40] sm:$0xff] %vm69, %v583
  %600 = vst.msk [vmem:[%s7 + $0x48] sm:$0xff] %vm69, %v584
  %601 = vst.msk [vmem:[%s7 + $0x50] sm:$0xff] %vm69, %v585
  %602 = vst.msk [vmem:[%s7 + $0x58] sm:$0xff] %vm69, %v586
  %603 = vst.msk [vmem:[%s7 + $0x60] sm:$0xff] %vm69, %v587
  %604 = vst.msk [vmem:[%s7 + $0x68] sm:$0xff] %vm69, %v588
  %605 = vst.msk [vmem:[%s7 + $0x70] sm:$0xff] %vm69, %v589
  %606 = vst.msk [vmem:[%s7 + $0x78] sm:$0xff] %vm69, %v590
  // Predicated region
  $region30: #{attention_forward.9} parent=0 // pred_check
    _
  $region31: #{attention_forward.9} parent=0 // pred_check_branch
    %608 = sbr.rel (0) target = $region33
  $region32: #{attention_forward.9} parent=0 // pred_region
    _
  $region33: #{attention_forward.9} parent=0 // pred_fallthru
    _
  // Predicated region
  $region34: #{attention_forward.9} parent=0 // pred_check
    _
  $region35: #{attention_forward.9} parent=0 // pred_check_branch
    %610 = sbr.rel (0) target = $region37
  $region36: #{attention_forward.9} parent=0 // pred_region
    _
  $region37: #{attention_forward.9} parent=0 // pred_fallthru
    _

// kernel: attention_forward.11
$region0: #{attention_forward.11}
  #allocation0 [shape = 'u32[]', space=smem, size = 0x4, offset = 0x4, fixed_abs, tag = 'smem constant byte address 0x4 - core index']
  #allocation1 [shape = 'u32[144,128]{1,0:T(1,128)}', space=vmem, size = 0x12000, scoped, tag = 'internal scratch']
  %s0 = inlined_call_operand.vmem [shape: f32[32,64], index: 0, kind: input, shape index: {}]
  %s1 = inlined_call_operand.vmem [shape: f32[64,64], index: 1, kind: input, shape index: {}]
  %s2 = inlined_call_operand.vmem [shape: f32[1,64], index: 2, kind: input, shape index: {}]
  %s3 = inlined_call_operand.hbm [shape: f32[32,64], index: 3, kind: output, shape index: {}]
  %s4 = sld [smem:[#allocation0]]
  $region22: #{attention_forward.11} parent=0
    _
  %s6 = ssub.s32 1, %s4
  %s7 = scalar_select 0, %s6, %s4
  $region1: #{attention_forward.11} parent=0
    #allocation2 [shape = 'u8[16384]{0}', space=vmem, size = 0x4000, scoped, tag = 'output window, operand 0, single buffered']
    #allocation3 [shape = 's32[1]{0}', space=sflag, size = 0x4, scoped, tag = 'scoped memory for attention_forward.11']
    %8 = vsyncpa [#allocation3], 0
    // Predicated region
    $region2: #{attention_forward.11} parent=1 // pred_check
      _
    $region3: #{attention_forward.11} parent=1 // pred_check_branch
      %10 = sbr.rel (0) target = $region5
    $region4: #{attention_forward.11} parent=1 // pred_region
      _
    $region5: #{attention_forward.11} parent=1 // pred_fallthru
      _
    // Predicated region
    $region6: #{attention_forward.11} parent=1 // pred_check
      _
    $region7: #{attention_forward.11} parent=1 // pred_check_branch
      %12 = sbr.rel (0) target = $region9
    $region8: #{attention_forward.11} parent=1 // pred_region
      _
    $region9: #{attention_forward.11} parent=1 // pred_fallthru
      _
    // Predicated region
    $region10: #{attention_forward.11} parent=1 // pred_check
      _
    $region11: #{attention_forward.11} parent=1 // pred_check_branch
      %14 = sbr.rel (0) target = $region13
    $region12: #{attention_forward.11} parent=1 // pred_region
      _
    $region13: #{attention_forward.11} parent=1 // pred_fallthru
      _
    %v15 = vld [vmem:[%s0] sm:$0xff]
    %v16 = vld [vmem:[%s0 + $0x8] sm:$0xff]
    %v17 = vld [vmem:[%s0 + $0x10] sm:$0xff]
    %v18 = vld [vmem:[%s0 + $0x18] sm:$0xff]
    %v19 = vld [vmem:[%s1] sm:$0xff]
    %v20 = vld [vmem:[%s1 + $0x8] sm:$0xff]
    %v21 = vld [vmem:[%s1 + $0x10] sm:$0xff]
    %v22 = vld [vmem:[%s1 + $0x18] sm:$0xff]
    %v23 = vld [vmem:[%s1 + $0x20] sm:$0xff]
    %v24 = vld [vmem:[%s1 + $0x28] sm:$0xff]
    %v25 = vld [vmem:[%s1 + $0x30] sm:$0xff]
    %v26 = vld [vmem:[%s1 + $0x38] sm:$0xff]
    %v27 = vld [vmem:[%s2] sm:$0x1]
    %v29 = vlaneseq
    %v30 = vshrl.u32 %v29, 7
    %v31 = vsub.s32 0, %v30
    %v32 = vrot.slane %v27, %v31
    %vm34 = vcmask 523264
    %v36 = vsel %vm34, %v15, 0
    %v39 = vsel %vm34, %v16, 0
    %v42 = vsel %vm34, %v17, 0
    %v45 = vsel %vm34, %v18, 0
    %47 = vmatprep.subr.mxu0 0.0
    %48 = vmatpush1.msra.mxu0 %v19
    %49 = vmatprep.subr.mxu0 0.0
    %50 = vmatpush1.msra.mxu0 %v20
    %51 = vmatprep.subr.mxu0 0.0
    %52 = vmatpush1.msra.mxu0 %v21
    %53 = vmatprep.subr.mxu0 0.0
    %54 = vmatpush1.msra.mxu0 %v22
    %55 = vmatprep.subr.mxu0 0.0
    %56 = vmatpush1.msra.mxu0 %v23
    %57 = vmatprep.subr.mxu0 0.0
    %58 = vmatpush1.msra.mxu0 %v24
    %59 = vmatprep.subr.mxu0 0.0
    %60 = vmatpush1.msra.mxu0 %v25
    %61 = vmatprep.subr.mxu0 0.0
    %62 = vmatpush1.msra.mxu0 %v26
    %63 = vmatprep.subr.mxu0 0.0
    %64 = vmatpush1.msra.mxu0 0.0
    %65 = vmatprep.subr.mxu0 0.0
    %66 = vmatpush1.msra.mxu0 0.0
    %67 = vmatprep.subr.mxu0 0.0
    %68 = vmatpush1.msra.mxu0 0.0
    %69 = vmatprep.subr.mxu0 0.0
    %70 = vmatpush1.msra.mxu0 0.0
    %71 = vmatprep.subr.mxu0 0.0
    %72 = vmatpush1.msra.mxu0 0.0
    %73 = vmatprep.subr.mxu0 0.0
    %74 = vmatpush1.msra.mxu0 0.0
    %75 = vmatprep.subr.mxu0 0.0
    %76 = vmatpush1.msra.mxu0 0.0
    %77 = vmatprep.subr.mxu0 0.0
    %78 = vmatpush1.msra.mxu0 0.0
    %79 = vmatprep.subr.mxu0 0.0
    %80 = vmatpush1.msra.mxu0 0.0
    %81 = vmatprep.subr.mxu0 0.0
    %82 = vmatpush1.msra.mxu0 0.0
    %83 = vmatprep.subr.mxu0 0.0
    %84 = vmatpush1.msra.mxu0 0.0
    %85 = vmatprep.subr.mxu0 0.0
    %86 = vmatpush1.msra.mxu0 0.0
    %87 = vmatprep.subr.mxu0 0.0
    %88 = vmatpush1.msra.mxu0 0.0
    %89 = vmatprep.subr.mxu0 0.0
    %90 = vmatpush1.msra.mxu0 0.0
    %91 = vmatprep.subr.mxu0 0.0
    %92 = vmatpush1.msra.mxu0 0.0
    %93 = vmatprep.subr.mxu0 0.0
    %94 = vmatpush1.msra.mxu0 0.0
    %95 = vmatprep.subr.mxu0 0.0
    %96 = vmatpush1.msra.mxu0 0.0
    %97 = vmatprep.subr.mxu0 0.0
    %98 = vmatpush1.msra.mxu0 0.0
    %99 = vmatprep.subr.mxu0 0.0
    %100 = vmatpush1.msra.mxu0 0.0
    %101 = vmatprep.subr.mxu0 0.0
    %102 = vmatpush1.msra.mxu0 0.0
    %103 = vmatprep.subr.mxu0 0.0
    %104 = vmatpush1.msra.mxu0 0.0
    %105 = vmatprep.subr.mxu0 0.0
    %106 = vmatpush1.msra.mxu0 0.0
    %107 = vmatprep.subr.mxu0 0.0
    %108 = vmatpush1.msra.mxu0 0.0
    %109 = vmatprep.subr.mxu0 0.0
    %110 = vmatpush1.msra.mxu0 0.0
    %111 = vmatprep.mubr.f32.mxu0 0.0
    %112 = vmatmul.mubr.f32.gmra.mrb[0].mxu0 %v36
    %v113 = vpop.f32.mrb[0].mxu0
    %v114 = vadd.f32 %v32, %v113
    %v115 = vpop.f32.mrb[0].mxu0
    %116 = vmatprep.mubr.f32.mxu0 0.0
    %117 = vmatmul.mubr.f32.gmra.mrb[0].mxu0 %v39
    %v118 = vpop.f32.mrb[0].mxu0
    %v119 = vadd.f32 %v32, %v118
    %v120 = vpop.f32.mrb[0].mxu0
    %121 = vmatprep.mubr.f32.mxu0 0.0
    %122 = vmatmul.mubr.f32.gmra.mrb[0].mxu0 %v42
    %v123 = vpop.f32.mrb[0].mxu0
    %v124 = vadd.f32 %v32, %v123
    %v125 = vpop.f32.mrb[0].mxu0
    %126 = vmatprep.mubr.f32.mxu0 0.0
    %127 = vmatmul.mubr.f32.gmra.mrb[0].mxu0 %v45
    %v128 = vpop.f32.mrb[0].mxu0
    %v129 = vadd.f32 %v32, %v128
    %v130 = vpop.f32.mrb[0].mxu0
    %131 = vdwg.mxu0
    %132 = vst.msk [vmem:[#allocation2] sm:$0xff] %vm34, %v114
    %133 = vst.msk [vmem:[#allocation2 + $0x8] sm:$0xff] %vm34, %v119
    %134 = vst.msk [vmem:[#allocation2 + $0x10] sm:$0xff] %vm34, %v124
    %135 = vst.msk [vmem:[#allocation2 + $0x18] sm:$0xff] %vm34, %v129
    // Predicated region
    $region14: #{attention_forward.11} parent=1 // pred_check
      _
    $region15: #{attention_forward.11} parent=1 // pred_check_branch
      %137 = sbr.rel (0) target = $region17
    $region16: #{attention_forward.11} parent=1 // pred_region
      %s139 = ssub.s32 512, 512
      %140 = vsyncadd [#allocation3], %s139
      %s141 = sshll.u32 [#allocation2], 4
      %s142 = int_to_ptr.vmem [resolvable:$true] %s141
      %147 = dma.vmem_to_hbm [thread:$0]  %s142, 512, %s3, [#allocation3], 128, 128, 8
    $region17: #{attention_forward.11} parent=1 // pred_fallthru
      _
    // Predicated region
    $region18: #{attention_forward.11} parent=1 // pred_check
      _
    $region19: #{attention_forward.11} parent=1 // pred_check_branch
      %149 = sbr.rel (0) target = $region21
    $region20: #{attention_forward.11} parent=1 // pred_region
      %150 = dma.done [#allocation3], 512
    $region21: #{attention_forward.11} parent=1 // pred_fallthru
      _
    %151 = vsyncpa [#allocation3], 1

// kernel: attention_forward.10
$region0: #{attention_forward.10}
  #allocation0 [shape = 'u32[]', space=smem, size = 0x4, offset = 0x4, fixed_abs, tag = 'smem constant byte address 0x4 - core index']
  #allocation1 [shape = 'u32[144,128]{1,0:T(1,128)}', space=vmem, size = 0x12000, scoped, tag = 'internal scratch']
  %s0 = inlined_call_operand.vmem [shape: f32[4,32,16], index: 0, kind: input, shape index: {}]
  %s1 = inlined_call_operand.vmem [shape: f32[2,4,16,16], index: 1, kind: input, shape index: {}, may-alias: {1,2}]
  %s2 = inlined_call_operand.vmem [shape: f32[2,4,16,16], index: 2, kind: input, shape index: {}, may-alias: {1,2}]
  %s3 = inlined_call_operand.vmem [shape: f32[16,128], index: 3, kind: input, shape index: {}]
  %s4 = inlined_call_operand.vmem [shape: f32[16,16], index: 4, kind: input, shape index: {}]
  %s5 = inlined_call_operand.vmem [shape: f32[1,16], index: 5, kind: input, shape index: {}]
  %s6 = inlined_call_operand.vmem [shape: f32[2,4,32,16], index: 6, kind: output, shape index: {}]
  %s7 = sld [smem:[#allocation0]]
  $region57: #{attention_forward.10} parent=0
    _
  %s9 = ssub.s32 1, %s7
  %s10 = scalar_select 0, %s9, %s7
  loop: start=0, step=1, limit=10
  $region2: #{attention_forward.10} parent=0 // loop_pre_header
    _
  $region3: #{attention_forward.10} parent=0 // loop_header
    %s12 = sphi 0, %s16
    %p13 = scmp.ge.s32.totalorder %s12, 10
    %s19 = sphi 0, %s31
    %s20 = sphi 0, %s27
    %s21 = sphi 0, %s19
    %s22 = sphi 0, %s20
    %s23 = sphi 0, %s21
    %s24 = sphi 0, %s22
    %s34 = sphi 0, %s36
    %s37 = sphi 0, %s34
    %s38 = sphi 0, %s37
    %s54 = sphi 0, %s38
    %s62 = sphi 0, %s64
    %s65 = sphi 0, %s62
    %s66 = sphi 0, %s65
    %s82 = sphi 0, %s66
    %s90 = sphi 0, %s92
    %s93 = sphi 0, %s90
    %s94 = sphi 0, %s93
    %s110 = sphi 0, %s94
    %s114 = sphi 0, %s114
    %s116 = sphi 0, %s114
    %s117 = sphi 0, %s116
    %s131 = sphi 0, %s117
    %s135 = sphi 0, %s135
    %s137 = sphi 0, %s135
    %s138 = sphi 0, %s137
    %s152 = sphi 0, %s138
    %s156 = sphi 0, %s156
    %s158 = sphi 0, %s156
    %s159 = sphi 0, %s158
    %s173 = sphi 0, %s159
    %s181 = sphi 0, %s183
    %s184 = sphi 0, %s181
    %s185 = sphi 0, %s184
    %s201 = sphi 0, %s185
  $region4: #{attention_forward.10} parent=0 // loop_header_branch
    %15 = sbr.rel (%p13) target = $region8
  $region5: #{attention_forward.10} parent=0 // loop_body
    %s17 = ssub.s32 %s12, 1
    %s18 = ssub.s32 %s12, 2
    %s25 = sadd.s32 1, %s20
    %p26 = scmp.ge.s32.totalorder %s25, 4
    %s27 = scalar_select %p26, 0, %s25
    %s28 = sadd.s32 1, %s19
    %s29 = scalar_select %p26, %s28, %s19
    %p30 = scmp.ge.s32.totalorder %s29, 2
    %s31 = scalar_select %p30, 0, %s29
    %s32 = ssub.s32 %s20, %s27
    %p33 = scmp.eq.s32.totalorder %s32, 0
    %s35 = sadd.s32 %s34, 1
    %s36 = scalar_select %p33, %s34, %s35
    %p39 = pneg %p33
    %p40 = scmp.eq.s32.totalorder %s12, 7
    %p41 = por %p39, %p40
    %p42 = scmp.ne.s32.totalorder %s34, %s37
    %p43 = scmp.eq.s32.totalorder %s12, 0
    %p44 = por %p42, %p43
    %p45 = scmp.ne.s32.totalorder %s34, %s37
    %p46 = scmp.eq.s32.totalorder %s17, 7
    %p47 = por %p45, %p46
    %p48 = scmp.ne.s32.totalorder %s37, %s38
    %p49 = scmp.eq.s32.totalorder %s17, 0
    %p50 = por %p48, %p49
    %p51 = scmp.ne.s32.totalorder %s37, %s38
    %p52 = scmp.eq.s32.totalorder %s18, 7
    %p53 = por %p51, %p52
    %p55 = scmp.ne.s32.totalorder %s38, %s54
    %p56 = scmp.eq.s32.totalorder %s18, 0
    %p57 = por %p55, %p56
    %s58 = ssub.s32 %s19, %s31
    %s59 = ssub.s32 %s20, %s27
    %s60 = sor.u32 %s58, %s59
    %p61 = scmp.eq.s32.totalorder %s60, 0
    %s63 = sadd.s32 %s62, 1
    %s64 = scalar_select %p61, %s62, %s63
    %p67 = pneg %p61
    %p68 = scmp.eq.s32.totalorder %s12, 7
    %p69 = por %p67, %p68
    %p70 = scmp.ne.s32.totalorder %s62, %s65
    %p71 = scmp.eq.s32.totalorder %s12, 0
    %p72 = por %p70, %p71
    %p73 = scmp.ne.s32.totalorder %s62, %s65
    %p74 = scmp.eq.s32.totalorder %s17, 7
    %p75 = por %p73, %p74
    %p76 = scmp.ne.s32.totalorder %s65, %s66
    %p77 = scmp.eq.s32.totalorder %s17, 0
    %p78 = por %p76, %p77
    %p79 = scmp.ne.s32.totalorder %s65, %s66
    %p80 = scmp.eq.s32.totalorder %s18, 7
    %p81 = por %p79, %p80
    %p83 = scmp.ne.s32.totalorder %s66, %s82
    %p84 = scmp.eq.s32.totalorder %s18, 0
    %p85 = por %p83, %p84
    %s86 = ssub.s32 %s19, %s31
    %s87 = ssub.s32 %s20, %s27
    %s88 = sor.u32 %s86, %s87
    %p89 = scmp.eq.s32.totalorder %s88, 0
    %s91 = sadd.s32 %s90, 1
    %s92 = scalar_select %p89, %s90, %s91
    %p95 = pneg %p89
    %p96 = scmp.eq.s32.totalorder %s12, 7
    %p97 = por %p95, %p96
    %p98 = scmp.ne.s32.totalorder %s90, %s93
    %p99 = scmp.eq.s32.totalorder %s12, 0
    %p100 = por %p98, %p99
    %p101 = scmp.ne.s32.totalorder %s90, %s93
    %p102 = scmp.eq.s32.totalorder %s17, 7
    %p103 = por %p101, %p102
    %p104 = scmp.ne.s32.totalorder %s93, %s94
    %p105 = scmp.eq.s32.totalorder %s17, 0
    %p106 = por %p104, %p105
    %p107 = scmp.ne.s32.totalorder %s93, %s94
    %p108 = scmp.eq.s32.totalorder %s18, 7
    %p109 = por %p107, %p108
    %p111 = scmp.ne.s32.totalorder %s94, %s110
    %p112 = scmp.eq.s32.totalorder %s18, 0
    %p113 = por %p111, %p112
    %s115 = sadd.s32 %s114, 1
    %p118 = scmp.eq.s32.totalorder %s12, 7
    %p119 = scmp.ne.s32.totalorder %s114, %s116
    %p120 = scmp.eq.s32.totalorder %s12, 0
    %p121 = por %p119, %p120
    %p122 = scmp.ne.s32.totalorder %s114, %s116
    %p123 = scmp.eq.s32.totalorder %s17, 7
    %p124 = por %p122, %p123
    %p125 = scmp.ne.s32.totalorder %s116, %s117
    %p126 = scmp.eq.s32.totalorder %s17, 0
    %p127 = por %p125, %p126
    %p128 = scmp.ne.s32.totalorder %s116, %s117
    %p129 = scmp.eq.s32.totalorder %s18, 7
    %p130 = por %p128, %p129
    %p132 = scmp.ne.s32.totalorder %s117, %s131
    %p133 = scmp.eq.s32.totalorder %s18, 0
    %p134 = por %p132, %p133
    %s136 = sadd.s32 %s135, 1
    %p139 = scmp.eq.s32.totalorder %s12, 7
    %p140 = scmp.ne.s32.totalorder %s135, %s137
    %p141 = scmp.eq.s32.totalorder %s12, 0
    %p142 = por %p140, %p141
    %p143 = scmp.ne.s32.totalorder %s135, %s137
    %p144 = scmp.eq.s32.totalorder %s17, 7
    %p145 = por %p143, %p144
    %p146 = scmp.ne.s32.totalorder %s137, %s138
    %p147 = scmp.eq.s32.totalorder %s17, 0
    %p148 = por %p146, %p147
    %p149 = scmp.ne.s32.totalorder %s137, %s138
    %p150 = scmp.eq.s32.totalorder %s18, 7
    %p151 = por %p149, %p150
    %p153 = scmp.ne.s32.totalorder %s138, %s152
    %p154 = scmp.eq.s32.totalorder %s18, 0
    %p155 = por %p153, %p154
    %s157 = sadd.s32 %s156, 1
    %p160 = scmp.eq.s32.totalorder %s12, 7
    %p161 = scmp.ne.s32.totalorder %s156, %s158
    %p162 = scmp.eq.s32.totalorder %s12, 0
    %p163 = por %p161, %p162
    %p164 = scmp.ne.s32.totalorder %s156, %s158
    %p165 = scmp.eq.s32.totalorder %s17, 7
    %p166 = por %p164, %p165
    %p167 = scmp.ne.s32.totalorder %s158, %s159
    %p168 = scmp.eq.s32.totalorder %s17, 0
    %p169 = por %p167, %p168
    %p170 = scmp.ne.s32.totalorder %s158, %s159
    %p171 = scmp.eq.s32.totalorder %s18, 7
    %p172 = por %p170, %p171
    %p174 = scmp.ne.s32.totalorder %s159, %s173
    %p175 = scmp.eq.s32.totalorder %s18, 0
    %p176 = por %p174, %p175
    %s177 = ssub.s32 %s19, %s31
    %s178 = ssub.s32 %s20, %s27
    %s179 = sor.u32 %s177, %s178
    %p180 = scmp.eq.s32.totalorder %s179, 0
    %s182 = sadd.s32 %s181, 1
    %s183 = scalar_select %p180, %s181, %s182
    %p186 = pneg %p180
    %p187 = scmp.eq.s32.totalorder %s12, 7
    %p188 = por %p186, %p187
    %p189 = scmp.ne.s32.totalorder %s181, %s184
    %p190 = scmp.eq.s32.totalorder %s12, 0
    %p191 = por %p189, %p190
    %p192 = scmp.ne.s32.totalorder %s181, %s184
    %p193 = scmp.eq.s32.totalorder %s17, 7
    %p194 = por %p192, %p193
    %p195 = scmp.ne.s32.totalorder %s184, %s185
    %p196 = scmp.eq.s32.totalorder %s17, 0
    %p197 = por %p195, %p196
    %p198 = scmp.ne.s32.totalorder %s184, %s185
    %p199 = scmp.eq.s32.totalorder %s18, 7
    %p200 = por %p198, %p199
    %p202 = scmp.ne.s32.totalorder %s185, %s201
    %p203 = scmp.eq.s32.totalorder %s18, 0
    %p204 = por %p202, %p203
    %p205 = scmp.le.s32.totalorder 1, %s12
    %p206 = scmp.lt.s32.totalorder %s12, 9
    %p207 = pnand %p205, %p206
    %p208 = pneg %p207
    // Predicated region
    $region9: #{attention_forward.10} parent=5 // pred_check
      _
    $region10: #{attention_forward.10} parent=5 // pred_check_branch
      %210 = sbr.rel (%p207) target = $region12
    $region11: #{attention_forward.10} parent=5 // pred_region
      %s211 = ssub.s32 %s12, 1
      // Predicated region
      $region13: #{attention_forward.10} parent=11 // pred_check
        %p212 = pneg %p127
      $region14: #{attention_forward.10} parent=11 // pred_check_branch
        %214 = sbr.rel (%p212) target = $region16
      $region15: #{attention_forward.10} parent=11 // pred_region
        _
      $region16: #{attention_forward.10} parent=11 // pred_fallthru
        _
      // Predicated region
      $region17: #{attention_forward.10} parent=11 // pred_check
        %p215 = pneg %p148
      $region18: #{attention_forward.10} parent=11 // pred_check_branch
        %217 = sbr.rel (%p215) target = $region20
      $region19: #{attention_forward.10} parent=11 // pred_region
        _
      $region20: #{attention_forward.10} parent=11 // pred_fallthru
        _
      // Predicated region
      $region21: #{attention_forward.10} parent=11 // pred_check
        %p218 = pneg %p169
      $region22: #{attention_forward.10} parent=11 // pred_check_branch
        %220 = sbr.rel (%p218) target = $region24
      $region23: #{attention_forward.10} parent=11 // pred_region
        _
      $region24: #{attention_forward.10} parent=11 // pred_fallthru
        _
    $region12: #{attention_forward.10} parent=5 // pred_fallthru
      _
    %p221 = scmp.lt.s32.totalorder %s12, 8
    // Predicated region
    $region25: #{attention_forward.10} parent=5 // pred_check
      %p222 = pneg %p221
    $region26: #{attention_forward.10} parent=5 // pred_check_branch
      %224 = sbr.rel (%p222) target = $region28
    $region27: #{attention_forward.10} parent=5 // pred_region
      // Predicated region
      $region29: #{attention_forward.10} parent=27 // pred_check
        %p225 = pneg %p44
      $region30: #{attention_forward.10} parent=27 // pred_check_branch
        %227 = sbr.rel (%p225) target = $region32
      $region31: #{attention_forward.10} parent=27 // pred_region
        %p228 = scmp.lt.s32.totalorder %s20, 3
        %s229 = scalar_select %p228, %s20, 3
        %s230 = smul.addr %s229, 4
        %s231 = smul.addr %s230, 8
        %s232 = scalar_lea.vmem %s0, %s231
      $region32: #{attention_forward.10} parent=27 // pred_fallthru
        _
      // Predicated region
      $region33: #{attention_forward.10} parent=27 // pred_check
        %p233 = pneg %p72
      $region34: #{attention_forward.10} parent=27 // pred_check_branch
        %235 = sbr.rel (%p233) target = $region36
      $region35: #{attention_forward.10} parent=27 // pred_region
        %p236 = scmp.lt.s32.totalorder %s19, 1
        %s237 = scalar_select %p236, %s19, 1
        %p238 = scmp.lt.s32.totalorder %s20, 3
        %s239 = scalar_select %p238, %s20, 3
        %s240 = smul.addr %s239, 2
        %s241 = smul.addr %s237, 8
        %s242 = sadd.s32 %s240, %s241
        %s243 = smul.addr %s242, 8
        %s244 = scalar_lea.vmem %s1, %s243
      $region36: #{attention_forward.10} parent=27 // pred_fallthru
        _
      // Predicated region
      $region37: #{attention_forward.10} parent=27 // pred_check
        %p245 = pneg %p100
      $region38: #{attention_forward.10} parent=27 // pred_check_branch
        %247 = sbr.rel (%p245) target = $region40
      $region39: #{attention_forward.10} parent=27 // pred_region
        %p248 = scmp.lt.s32.totalorder %s19, 1
        %s249 = scalar_select %p248, %s19, 1
        %p250 = scmp.lt.s32.totalorder %s20, 3
        %s251 = scalar_select %p250, %s20, 3
        %s252 = smul.addr %s251, 2
        %s253 = smul.addr %s249, 8
        %s254 = sadd.s32 %s252, %s253
        %s255 = smul.addr %s254, 8
        %s256 = scalar_lea.vmem %s2, %s255
      $region40: #{attention_forward.10} parent=27 // pred_fallthru
        _
    $region28: #{attention_forward.10} parent=5 // pred_fallthru
      _
    %p257 = scmp.le.s32.totalorder 1, %s12
    %p258 = scmp.lt.s32.totalorder %s12, 9
    %p259 = pnand %p257, %p258
    %p260 = pneg %p259
    // Predicated region
    $region41: #{attention_forward.10} parent=5 // pred_check
      _
    $region42: #{attention_forward.10} parent=5 // pred_check_branch
      %262 = sbr.rel (%p259) target = $region44
    $region43: #{attention_forward.10} parent=5 // pred_region
      %s263 = ssub.s32 %s12, 1
      %p264 = scmp.lt.s32.totalorder %s22, 3
      %s265 = scalar_select %p264, %s22, 3
      %s266 = smul.addr %s265, 4
      %s267 = smul.addr %s266, 8
      %s268 = scalar_lea.vmem %s0, %s267
      %p269 = pneg %p50
      %p270 = pneg %p47
      %p271 = scmp.lt.s32.totalorder %s21, 1
      %s272 = scalar_select %p271, %s21, 1
      %p273 = scmp.lt.s32.totalorder %s22, 3
      %s274 = scalar_select %p273, %s22, 3
      %s275 = smul.addr %s274, 2
      %s276 = smul.addr %s272, 8
      %s277 = sadd.s32 %s275, %s276
      %s278 = smul.addr %s277, 8
      %s279 = scalar_lea.vmem %s1, %s278
      %p280 = pneg %p78
      %p281 = pneg %p75
      %p282 = scmp.lt.s32.totalorder %s21, 1
      %s283 = scalar_select %p282, %s21, 1
      %p284 = scmp.lt.s32.totalorder %s22, 3
      %s285 = scalar_select %p284, %s22, 3
      %s286 = smul.addr %s285, 2
      %s287 = smul.addr %s283, 8
      %s288 = sadd.s32 %s286, %s287
      %s289 = smul.addr %s288, 8
      %s290 = scalar_lea.vmem %s2, %s289
      %p291 = pneg %p106
      %p292 = pneg %p103
      %p293 = pneg %p127
      %p294 = pneg %p124
      %p295 = pneg %p148
      %p296 = pneg %p145
      %p297 = pneg %p169
      %p298 = pneg %p166
      %p299 = pneg %p197
      %p300 = pneg %p194
      %p301 = scmp.lt.s32.totalorder %s21, 1
      %s302 = scalar_select %p301, %s21, 1
      %p303 = scmp.lt.s32.totalorder %s22, 3
      %s304 = scalar_select %p303, %s22, 3
      %s305 = smul.addr %s304, 4
      %s306 = smul.addr %s302, 16
      %s307 = sadd.s32 %s305, %s306
      %s308 = smul.addr %s307, 8
      %s309 = scalar_lea.vmem %s6, %s308
      %p310 = scmp.lt.s32.totalorder %s22, 3
      %s311 = scalar_select %p310, %s22, 3
      %s312 = smul.addr %s311, 4
      %s313 = smul.addr %s312, 8
      %s314 = scalar_lea.vmem %s0, %s313
      %p315 = scmp.lt.s32.totalorder %s21, 1
      %s316 = scalar_select %p315, %s21, 1
      %p317 = scmp.lt.s32.totalorder %s22, 3
      %s318 = scalar_select %p317, %s22, 3
      %s319 = smul.addr %s318, 2
      %s320 = smul.addr %s316, 8
      %s321 = sadd.s32 %s319, %s320
      %s322 = smul.addr %s321, 8
      %s323 = scalar_lea.vmem %s1, %s322
      %p324 = scmp.lt.s32.totalorder %s21, 1
      %s325 = scalar_select %p324, %s21, 1
      %p326 = scmp.lt.s32.totalorder %s22, 3
      %s327 = scalar_select %p326, %s22, 3
      %s328 = smul.addr %s327, 2
      %s329 = smul.addr %s325, 8
      %s330 = sadd.s32 %s328, %s329
      %s331 = smul.addr %s330, 8
      %s332 = scalar_lea.vmem %s2, %s331
      %p333 = scmp.lt.s32.totalorder %s21, 1
      %s334 = scalar_select %p333, %s21, 1
      %p335 = scmp.lt.s32.totalorder %s22, 3
      %s336 = scalar_select %p335, %s22, 3
      %s337 = smul.addr %s336, 4
      %s338 = smul.addr %s334, 16
      %s339 = sadd.s32 %s337, %s338
      %s340 = smul.addr %s339, 8
      %s341 = scalar_lea.vmem %s6, %s340
      %v342 = vld [vmem:[%s314] sm:$0xff]
      %v343 = vld [vmem:[%s314 + $0x8] sm:$0xff]
      %v344 = vld [vmem:[%s314 + $0x10] sm:$0xff]
      %v345 = vld [vmem:[%s314 + $0x18] sm:$0xff]
      %v346 = vld [vmem:[%s323] sm:$0xff]
      %v347 = vld [vmem:[%s323 + $0x8] sm:$0xff]
      %v348 = vld [vmem:[%s332] sm:$0xff]
      %v349 = vld [vmem:[%s332 + $0x8] sm:$0xff]
      %v350 = vld [vmem:[%s3] sm:$0xff]
      %v351 = vld [vmem:[%s3 + $0x8] sm:$0xff]
      %v352 = vld [vmem:[%s4] sm:$0xff]
      %v353 = vld [vmem:[%s4 + $0x8] sm:$0xff]
      %v354 = vld [vmem:[%s5] sm:$0x1]
      %v356 = vlaneseq
      %v357 = vshrl.u32 %v356, 7
      %v358 = vsub.s32 0, %v357
      %v359 = vrot.slane %v354, %v358
      %vm361 = vcmask 130048
      %v363 = vsel %vm361, %v348, 0
      %v366 = vsel %vm361, %v349, 0
      %368 = vmatprep.subr.mxu0 0.0
      %369 = vmatpush1.msra.mxu0 %v352
      %370 = vmatprep.subr.mxu0 0.0
      %371 = vmatpush1.msra.mxu0 %v353
      %372 = vmatprep.subr.mxu0 0.0
      %373 = vmatpush1.msra.mxu0 0.0
      %374 = vmatprep.subr.mxu0 0.0
      %375 = vmatpush1.msra.mxu0 0.0
      %376 = vmatprep.subr.mxu0 0.0
      %377 = vmatpush1.msra.mxu0 0.0
      %378 = vmatprep.subr.mxu0 0.0
      %379 = vmatpush1.msra.mxu0 0.0
      %380 = vmatprep.subr.mxu0 0.0
      %381 = vmatpush1.msra.mxu0 0.0
      %382 = vmatprep.subr.mxu0 0.0
      %383 = vmatpush1.msra.mxu0 0.0
      %384 = vmatprep.subr.mxu0 0.0
      %385 = vmatpush1.msra.mxu0 0.0
      %386 = vmatprep.subr.mxu0 0.0
      %387 = vmatpush1.msra.mxu0 0.0
      %388 = vmatprep.subr.mxu0 0.0
      %389 = vmatpush1.msra.mxu0 0.0
      %390 = vmatprep.subr.mxu0 0.0
      %391 = vmatpush1.msra.mxu0 0.0
      %392 = vmatprep.subr.mxu0 0.0
      %393 = vmatpush1.msra.mxu0 0.0
      %394 = vmatprep.subr.mxu0 0.0
      %395 = vmatpush1.msra.mxu0 0.0
      %396 = vmatprep.subr.mxu0 0.0
      %397 = vmatpush1.msra.mxu0 0.0
      %398 = vmatprep.subr.mxu0 0.0
      %399 = vmatpush1.msra.mxu0 0.0
      %400 = vmatprep.subr.mxu0 0.0
      %401 = vmatpush1.msra.mxu0 0.0
      %402 = vmatprep.subr.mxu0 0.0
      %403 = vmatpush1.msra.mxu0 0.0
      %404 = vmatprep.subr.mxu0 0.0
      %405 = vmatpush1.msra.mxu0 0.0
      %406 = vmatprep.subr.mxu0 0.0
      %407 = vmatpush1.msra.mxu0 0.0
      %408 = vmatprep.subr.mxu0 0.0
      %409 = vmatpush1.msra.mxu0 0.0
      %410 = vmatprep.subr.mxu0 0.0
      %411 = vmatpush1.msra.mxu0 0.0
      %412 = vmatprep.subr.mxu0 0.0
      %413 = vmatpush1.msra.mxu0 0.0
      %414 = vmatprep.subr.mxu0 0.0
      %415 = vmatpush1.msra.mxu0 0.0
      %416 = vmatprep.subr.mxu0 0.0
      %417 = vmatpush1.msra.mxu0 0.0
      %418 = vmatprep.subr.mxu0 0.0
      %419 = vmatpush1.msra.mxu0 0.0
      %420 = vmatprep.subr.mxu0 0.0
      %421 = vmatpush1.msra.mxu0 0.0
      %422 = vmatprep.subr.mxu0 0.0
      %423 = vmatpush1.msra.mxu0 0.0
      %424 = vmatprep.subr.mxu0 0.0
      %425 = vmatpush1.msra.mxu0 0.0
      %426 = vmatprep.subr.mxu0 0.0
      %427 = vmatpush1.msra.mxu0 0.0
      %428 = vmatprep.subr.mxu0 0.0
      %429 = vmatpush1.msra.mxu0 0.0
      %430 = vmatprep.subr.mxu0 0.0
      %431 = vmatpush1.msra.mxu0 0.0
      %432 = vmatprep.mubr.f32.mxu0 0.0
      %433 = vmatmul.mubr.f32.gmra.mrb[0].mxu0 %v363
      %v434 = vpop.f32.mrb[0].mxu0
      %v435 = vadd.f32 %v359, %v434
      %v436 = vpop.f32.mrb[0].mxu0
      %437 = vmatprep.mubr.f32.mxu0 0.0
      %438 = vmatmul.mubr.f32.gmra.mrb[0].mxu0 %v366
      %v439 = vpop.f32.mrb[0].mxu0
      %v440 = vadd.f32 %v359, %v439
      %v441 = vpop.f32.mrb[0].mxu0
      %442 = vdwg.mxu0
      %v443 = vlaneseq
      %v444 = vand.u32 %v443, 127
      %vm445 = vcmp.lt.s32.totalorder %v444, 44
      %v446 = vmul.f32 %v342, 0.5
      %v447 = vmul.f32 %v343, 0.5
      %v448 = vmul.f32 %v344, 0.5
      %v449 = vmul.f32 %v345, 0.5
      %v451 = vsel %vm361, %v446, 0
      %v454 = vsel %vm361, %v447, 0
      %v457 = vsel %vm361, %v448, 0
      %v460 = vsel %vm361, %v449, 0
      %462 = vmatprep.subr.mxu0 0.0
      %463 = vmatpush1.msra.mxu0 %v350
      %464 = vmatprep.subr.mxu0 0.0
      %465 = vmatpush1.msra.mxu0 %v351
      %466 = vmatprep.subr.mxu0 0.0
      %467 = vmatpush1.msra.mxu0 0.0
      %468 = vmatprep.subr.mxu0 0.0
      %469 = vmatpush1.msra.mxu0 0.0
      %470 = vmatprep.subr.mxu0 0.0
      %471 = vmatpush1.msra.mxu0 0.0
      %472 = vmatprep.subr.mxu0 0.0
      %473 = vmatpush1.msra.mxu0 0.0
      %474 = vmatprep.subr.mxu0 0.0
      %475 = vmatpush1.msra.mxu0 0.0
      %476 = vmatprep.subr.mxu0 0.0
      %477 = vmatpush1.msra.mxu0 0.0
      %478 = vmatprep.subr.mxu0 0.0
      %479 = vmatpush1.msra.mxu0 0.0
      %480 = vmatprep.subr.mxu0 0.0
      %481 = vmatpush1.msra.mxu0 0.0
      %482 = vmatprep.subr.mxu0 0.0
      %483 = vmatpush1.msra.mxu0 0.0
      %484 = vmatprep.subr.mxu0 0.0
      %485 = vmatpush1.msra.mxu0 0.0
      %486 = vmatprep.subr.mxu0 0.0
      %487 = vmatpush1.msra.mxu0 0.0
      %488 = vmatprep.subr.mxu0 0.0
      %489 = vmatpush1.msra.mxu0 0.0
      %490 = vmatprep.subr.mxu0 0.0
      %491 = vmatpush1.msra.mxu0 0.0
      %492 = vmatprep.subr.mxu0 0.0
      %493 = vmatpush1.msra.mxu0 0.0
      %494 = vmatprep.subr.mxu0 0.0
      %495 = vmatpush1.msra.mxu0 0.0
      %496 = vmatprep.subr.mxu0 0.0
      %497 = vmatpush1.msra.mxu0 0.0
      %498 = vmatprep.subr.mxu0 0.0
      %499 = vmatpush1.msra.mxu0 0.0
      %500 = vmatprep.subr.mxu0 0.0
      %501 = vmatpush1.msra.mxu0 0.0
      %502 = vmatprep.subr.mxu0 0.0
      %503 = vmatpush1.msra.mxu0 0.0
      %504 = vmatprep.subr.mxu0 0.0
      %505 = vmatpush1.msra.mxu0 0.0
      %506 = vmatprep.subr.mxu0 0.0
      %507 = vmatpush1.msra.mxu0 0.0
      %508 = vmatprep.subr.mxu0 0.0
      %509 = vmatpush1.msra.mxu0 0.0
      %510 = vmatprep.subr.mxu0 0.0
      %511 = vmatpush1.msra.mxu0 0.0
      %512 = vmatprep.subr.mxu0 0.0
      %513 = vmatpush1.msra.mxu0 0.0
      %514 = vmatprep.subr.mxu0 0.0
      %515 = vmatpush1.msra.mxu0 0.0
      %516 = vmatprep.subr.mxu0 0.0
      %517 = vmatpush1.msra.mxu0 0.0
      %518 = vmatprep.subr.mxu0 0.0
      %519 = vmatpush1.msra.mxu0 0.0
      %520 = vmatprep.subr.mxu0 0.0
      %521 = vmatpush1.msra.mxu0 0.0
      %522 = vmatprep.subr.mxu0 0.0
      %523 = vmatpush1.msra.mxu0 0.0
      %524 = vmatprep.subr.mxu0 0.0
      %525 = vmatpush1.msra.mxu0 0.0
      %526 = vmatprep.mubr.f32.mxu0 0.0
      %527 = vmatmul.mubr.f32.gmra.mrb[0].mxu0 %v451
      %v528 = vpop.f32.mrb[0].mxu0
      %v529 = vadd.f32 0.0, %v528
      %v530 = vpop.f32.mrb[0].mxu0
      %531 = vmatprep.mubr.f32.mxu0 0.0
      %532 = vmatmul.mubr.f32.gmra.mrb[0].mxu0 %v454
      %v533 = vpop.f32.mrb[0].mxu0
      %v534 = vadd.f32 0.0, %v533
      %v535 = vpop.f32.mrb[0].mxu0
      %536 = vmatprep.mubr.f32.mxu0 0.0
      %537 = vmatmul.mubr.f32.gmra.mrb[0].mxu0 %v457
      %v538 = vpop.f32.mrb[0].mxu0
      %v539 = vadd.f32 0.0, %v538
      %v540 = vpop.f32.mrb[0].mxu0
      %541 = vmatprep.mubr.f32.mxu0 0.0
      %542 = vmatmul.mubr.f32.gmra.mrb[0].mxu0 %v460
      %v543 = vpop.f32.mrb[0].mxu0
      %v544 = vadd.f32 0.0, %v543
      %v545 = vpop.f32.mrb[0].mxu0
      %546 = vdwg.mxu0
      %v547 = vmul.f32 %v342, %v342
      %v548 = vmul.f32 %v343, %v343
      %v549 = vmul.f32 %v344, %v344
      %v550 = vmul.f32 %v345, %v345
      %v551 = vsel %vm361, %v547, 0.0
      %552 = vadd.xlane.f32.xlu0 %v551
      %v553 = vpop.xlane.xlu0 %552
      %v554 = vsel %vm361, %v548, 0.0
      %555 = vadd.xlane.f32.xlu0 %v554
      %v556 = vpop.xlane.xlu0 %555
      %v557 = vsel %vm361, %v549, 0.0
      %558 = vadd.xlane.f32.xlu0 %v557
      %v559 = vpop.xlane.xlu0 %558
      %v560 = vsel %vm361, %v550, 0.0
      %561 = vadd.xlane.f32.xlu0 %v560
      %v562 = vpop.xlane.xlu0 %561
      %v563 = vmul.f32 %v553, 0.125
      %v564 = vmul.f32 %v556, 0.125
      %v565 = vmul.f32 %v559, 0.125
      %v566 = vmul.f32 %v562, 0.125
      %v567 = vsel %vm445, 1, 0
      %vm568 = vcmp.eq.s32.totalorder %v567, 1
      %v569 = vsel %vm568, %v529, -inf
      %v570 = vsel %vm568, %v534, -inf
      %v571 = vsel %vm568, %v539, -inf
      %v572 = vsel %vm568, %v544, -inf
      %573 = vmax.xlane.f32.xlu0 %v569
      %v574 = vpop.xlane.xlu0 %573
      %575 = vmax.xlane.f32.xlu0 %v570
      %v576 = vpop.xlane.xlu0 %575
      %577 = vmax.xlane.f32.xlu0 %v571
      %v578 = vpop.xlane.xlu0 %577
      %579 = vmax.xlane.f32.xlu0 %v572
      %v580 = vpop.xlane.xlu0 %579
      %v581 = vsub.f32 %v529, %v563
      %v582 = vsub.f32 %v534, %v564
      %v583 = vsub.f32 %v539, %v565
      %v584 = vsub.f32 %v544, %v566
      %v585 = vsub.f32 %v581, %v574
      %v586 = vsub.f32 %v582, %v576
      %v587 = vsub.f32 %v583, %v578
      %v588 = vsub.f32 %v584, %v580
      %v589 = vmul.f32 %v585, 1.442695
      %v590 = vpow.pop %v589
      %v591 = vmul.f32 %v586, 1.442695
      %v592 = vpow.pop %v591
      %v593 = vmul.f32 %v587, 1.442695
      %v594 = vpow.pop %v593
      %v595 = vmul.f32 %v588, 1.442695
      %v596 = vpow.pop %v595
      %v597 = vadd.f32 %v590, 0.0001
      %v598 = vadd.f32 %v592, 0.0001
      %v599 = vadd.f32 %v594, 0.0001
      %v600 = vadd.f32 %v596, 0.0001
      %v601 = vmul.f32 %v597, 0.15075567
      %v602 = vmul.f32 %v598, 0.15075567
      %v603 = vmul.f32 %v599, 0.15075567
      %v604 = vmul.f32 %v600, 0.15075567
      %v605 = vsel %vm568, %v601, 0.0
      %v606 = vsel %vm568, %v602, 0.0
      %v607 = vsel %vm568, %v603, 0.0
      %v608 = vsel %vm568, %v604, 0.0
      %v609 = vmul.f32 %v346, 0.5
      %v610 = vmul.f32 %v347, 0.5
      %v612 = vsel %vm361, %v609, 0
      %v615 = vsel %vm361, %v610, 0
      %617 = vmatprep.subr.mxu0 0.0
      %618 = vmatpush1.msra.mxu0 %v350
      %619 = vmatprep.subr.mxu0 0.0
      %620 = vmatpush1.msra.mxu0 %v351
      %621 = vmatprep.subr.mxu0 0.0
      %622 = vmatpush1.msra.mxu0 0.0
      %623 = vmatprep.subr.mxu0 0.0
      %624 = vmatpush1.msra.mxu0 0.0
      %625 = vmatprep.subr.mxu0 0.0
      %626 = vmatpush1.msra.mxu0 0.0
      %627 = vmatprep.subr.mxu0 0.0
      %628 = vmatpush1.msra.mxu0 0.0
      %629 = vmatprep.subr.mxu0 0.0
      %630 = vmatpush1.msra.mxu0 0.0
      %631 = vmatprep.subr.mxu0 0.0
      %632 = vmatpush1.msra.mxu0 0.0
      %633 = vmatprep.subr.mxu0 0.0
      %634 = vmatpush1.msra.mxu0 0.0
      %635 = vmatprep.subr.mxu0 0.0
      %636 = vmatpush1.msra.mxu0 0.0
      %637 = vmatprep.subr.mxu0 0.0
      %638 = vmatpush1.msra.mxu0 0.0
      %639 = vmatprep.subr.mxu0 0.0
      %640 = vmatpush1.msra.mxu0 0.0
      %641 = vmatprep.subr.mxu0 0.0
      %642 = vmatpush1.msra.mxu0 0.0
      %643 = vmatprep.subr.mxu0 0.0
      %644 = vmatpush1.msra.mxu0 0.0
      %645 = vmatprep.subr.mxu0 0.0
      %646 = vmatpush1.msra.mxu0 0.0
      %647 = vmatprep.subr.mxu0 0.0
      %648 = vmatpush1.msra.mxu0 0.0
      %649 = vmatprep.subr.mxu0 0.0
      %650 = vmatpush1.msra.mxu0 0.0
      %651 = vmatprep.subr.mxu0 0.0
      %652 = vmatpush1.msra.mxu0 0.0
      %653 = vmatprep.subr.mxu0 0.0
      %654 = vmatpush1.msra.mxu0 0.0
      %655 = vmatprep.subr.mxu0 0.0
      %656 = vmatpush1.msra.mxu0 0.0
      %657 = vmatprep.subr.mxu0 0.0
      %658 = vmatpush1.msra.mxu0 0.0
      %659 = vmatprep.subr.mxu0 0.0
      %660 = vmatpush1.msra.mxu0 0.0
      %661 = vmatprep.subr.mxu0 0.0
      %662 = vmatpush1.msra.mxu0 0.0
      %663 = vmatprep.subr.mxu0 0.0
      %664 = vmatpush1.msra.mxu0 0.0
      %665 = vmatprep.subr.mxu0 0.0
      %666 = vmatpush1.msra.mxu0 0.0
      %667 = vmatprep.subr.mxu0 0.0
      %668 = vmatpush1.msra.mxu0 0.0
      %669 = vmatprep.subr.mxu0 0.0
      %670 = vmatpush1.msra.mxu0 0.0
      %671 = vmatprep.subr.mxu0 0.0
      %672 = vmatpush1.msra.mxu0 0.0
      %673 = vmatprep.subr.mxu0 0.0
      %674 = vmatpush1.msra.mxu0 0.0
      %675 = vmatprep.subr.mxu0 0.0
      %676 = vmatpush1.msra.mxu0 0.0
      %677 = vmatprep.subr.mxu0 0.0
      %678 = vmatpush1.msra.mxu0 0.0
      %679 = vmatprep.subr.mxu0 0.0
      %680 = vmatpush1.msra.mxu0 0.0
      %681 = vmatprep.mubr.f32.mxu0 0.0
      %682 = vmatmul.mubr.f32.gmra.mrb[0].mxu0 %v612
      %v683 = vpop.f32.mrb[0].mxu0
      %v684 = vadd.f32 0.0, %v683
      %v685 = vpop.f32.mrb[0].mxu0
      %686 = vmatprep.mubr.f32.mxu0 0.0
      %687 = vmatmul.mubr.f32.gmra.mrb[0].mxu0 %v615
      %v688 = vpop.f32.mrb[0].mxu0
      %v689 = vadd.f32 0.0, %v688
      %v690 = vpop.f32.mrb[0].mxu0
      %691 = vdwg.mxu0
      %v692 = vmul.f32 %v346, %v346
      %v693 = vmul.f32 %v347, %v347
      %v694 = vsel %vm361, %v692, 0.0
      %695 = vadd.xlane.f32.xlu0 %v694
      %v696 = vpop.xlane.xlu0 %695
      %v697 = vsel %vm361, %v693, 0.0
      %698 = vadd.xlane.f32.xlu0 %v697
      %v699 = vpop.xlane.xlu0 %698
      %v700 = vmul.f32 %v696, 0.125
      %v701 = vmul.f32 %v699, 0.125
      %v702 = vsel %vm568, %v684, -inf
      %v703 = vsel %vm568, %v689, -inf
      %v704 = vmax.f32 %v702, %v703
      %705 = vmax.xlane.f32.xlu0 %v704
      %v706 = vpop.xlane.xlu0 %705
      %v707 = vrot.slane %v706, 4
      %v708 = vmax.f32 %v706, %v707
      %v709 = vrot.slane %v708, 2
      %v710 = vmax.f32 %v708, %v709
      %v711 = vrot.slane %v710, 1
      %v712 = vmax.f32 %v710, %v711
      %s713 = vtos %v712
      %v714 = vsub.f32 %v684, %v700
      %v715 = vsub.f32 %v689, %v701
      %v716 = vstv %s713
      %v717 = vsub.f32 %v714, %v716
      %v718 = vsub.f32 %v715, %v716
      %v719 = vmul.f32 %v717, 1.442695
      %v720 = vpow.pop %v719
      %v721 = vmul.f32 %v718, 1.442695
      %v722 = vpow.pop %v721
      %v723 = vadd.f32 %v720, 0.0001
      %v724 = vadd.f32 %v722, 0.0001
      %v725 = vmul.f32 %v723, 0.15075567
      %v726 = vmul.f32 %v724, 0.15075567
      %v727 = vsel %vm568, %v725, 0.0
      %v728 = vsel %vm568, %v726, 0.0
      %v729 = vadd.f32 %v727, %v728
      %v730 = vrot.slane %v729, 4
      %v731 = vadd.f32 %v729, %v730
      %v732 = vrot.slane %v731, 2
      %v733 = vadd.f32 %v731, %v732
      %v734 = vrot.slane %v733, 1
      %v735 = vadd.f32 %v733, %v734
      %v736 = vmul.f32 %v605, %v735
      %v737 = vmul.f32 %v606, %v735
      %v738 = vmul.f32 %v607, %v735
      %v739 = vmul.f32 %v608, %v735
      %740 = vadd.xlane.f32.xlu0 %v736
      %v741 = vpop.xlane.xlu0 %740
      %742 = vadd.xlane.f32.xlu0 %v737
      %v743 = vpop.xlane.xlu0 %742
      %744 = vadd.xlane.f32.xlu0 %v738
      %v745 = vpop.xlane.xlu0 %744
      %746 = vadd.xlane.f32.xlu0 %v739
      %v747 = vpop.xlane.xlu0 %746
      %v748 = vrcp.pop %v741
      %v749 = vrcp.pop %v743
      %v750 = vrcp.pop %v745
      %v751 = vrcp.pop %v747
      %752 = vxpose.xlu0.b32.start [1/16] %v727, 128
      %753 = vxpose.xlu0.b32.cont [2/16] %v728, 128
      %754 = vxpose.xlu0.b32.cont [3/16] 0.0, 128
      %755 = vxpose.xlu0.b32.cont [4/16] 0.0, 128
      %756 = vxpose.xlu0.b32.cont [5/16] 0.0, 128
      %757 = vxpose.xlu0.b32.cont [6/16] 0.0, 128
      %758 = vxpose.xlu0.b32.cont [7/16] 0.0, 128
      %759 = vxpose.xlu0.b32.cont [8/16] 0.0, 128
      %760 = vxpose.xlu0.b32.cont [9/16] 0.0, 128
      %761 = vxpose.xlu0.b32.cont [10/16] 0.0, 128
      %762 = vxpose.xlu0.b32.cont [11/16] 0.0, 128
      %763 = vxpose.xlu0.b32.cont [12/16] 0.0, 128
      %764 = vxpose.xlu0.b32.cont [13/16] 0.0, 128
      %765 = vxpose.xlu0.b32.cont [14/16] 0.0, 128
      %766 = vxpose.xlu0.b32.cont [15/16] 0.0, 128
      %767 = vxpose.xlu0.b32.end [16/16] 0.0, 128
      %v768 = vpop.trf.xlu0
      %v769 = vpop.trf.xlu0
      %v770 = vpop.trf.xlu0
      %v771 = vpop.trf.xlu0
      %v772 = vpop.trf.xlu0
      %v773 = vpop.trf.xlu0
      %v774 = vpop.trf.xlu0
      %v775 = vpop.trf.xlu0
      %v776 = vpop.trf.xlu0
      %v777 = vpop.trf.xlu0
      %v778 = vpop.trf.xlu0
      %v779 = vpop.trf.xlu0
      %v780 = vpop.trf.xlu0
      %v781 = vpop.trf.xlu0
      %v782 = vpop.trf.xlu0
      %v783 = vpop.trf.xlu0
      %v785 = vsel %vm361, %v768, 0
      %v788 = vsel %vm361, %v769, 0
      %v791 = vsel %vm361, %v770, 0
      %v794 = vsel %vm361, %v771, 0
      %v797 = vsel %vm361, %v772, 0
      %v800 = vsel %vm361, %v773, 0
      %v803 = vsel %vm361, %v774, 0
      %v806 = vsel %vm361, %v775, 0
      %v809 = vsel %vm361, %v776, 0
      %v812 = vsel %vm361, %v777, 0
      %v815 = vsel %vm361, %v778, 0
      %v818 = vsel %vm361, %v779, 0
      %v821 = vsel %vm361, %v780, 0
      %v824 = vsel %vm361, %v781, 0
      %v827 = vsel %vm361, %v782, 0
      %v830 = vsel %vm361, %v783, 0
      %832 = vmatprep.subr.mxu0 0.0
      %833 = vmatpush1.msra.mxu0 %v435
      %834 = vmatprep.subr.mxu0 0.0
      %835 = vmatpush1.msra.mxu0 %v440
      %836 = vmatprep.subr.mxu0 0.0
      %837 = vmatpush1.msra.mxu0 0.0
      %838 = vmatprep.subr.mxu0 0.0
      %839 = vmatpush1.msra.mxu0 0.0
      %840 = vmatprep.subr.mxu0 0.0
      %841 = vmatpush1.msra.mxu0 0.0
      %842 = vmatprep.subr.mxu0 0.0
      %843 = vmatpush1.msra.mxu0 0.0
      %844 = vmatprep.subr.mxu0 0.0
      %845 = vmatpush1.msra.mxu0 0.0
      %846 = vmatprep.subr.mxu0 0.0
      %847 = vmatpush1.msra.mxu0 0.0
      %848 = vmatprep.subr.mxu0 0.0
      %849 = vmatpush1.msra.mxu0 0.0
      %850 = vmatprep.subr.mxu0 0.0
      %851 = vmatpush1.msra.mxu0 0.0
      %852 = vmatprep.subr.mxu0 0.0
      %853 = vmatpush1.msra.mxu0 0.0
      %854 = vmatprep.subr.mxu0 0.0
      %855 = vmatpush1.msra.mxu0 0.0
      %856 = vmatprep.subr.mxu0 0.0
      %857 = vmatpush1.msra.mxu0 0.0
      %858 = vmatprep.subr.mxu0 0.0
      %859 = vmatpush1.msra.mxu0 0.0
      %860 = vmatprep.subr.mxu0 0.0
      %861 = vmatpush1.msra.mxu0 0.0
      %862 = vmatprep.subr.mxu0 0.0
      %863 = vmatpush1.msra.mxu0 0.0
      %864 = vmatprep.subr.mxu0 0.0
      %865 = vmatpush1.msra.mxu0 0.0
      %866 = vmatprep.subr.mxu0 0.0
      %867 = vmatpush1.msra.mxu0 0.0
      %868 = vmatprep.subr.mxu0 0.0
      %869 = vmatpush1.msra.mxu0 0.0
      %870 = vmatprep.subr.mxu0 0.0
      %871 = vmatpush1.msra.mxu0 0.0
      %872 = vmatprep.subr.mxu0 0.0
      %873 = vmatpush1.msra.mxu0 0.0
      %874 = vmatprep.subr.mxu0 0.0
      %875 = vmatpush1.msra.mxu0 0.0
      %876 = vmatprep.subr.mxu0 0.0
      %877 = vmatpush1.msra.mxu0 0.0
      %878 = vmatprep.subr.mxu0 0.0
      %879 = vmatpush1.msra.mxu0 0.0
      %880 = vmatprep.subr.mxu0 0.0
      %881 = vmatpush1.msra.mxu0 0.0
      %882 = vmatprep.subr.mxu0 0.0
      %883 = vmatpush1.msra.mxu0 0.0
      %884 = vmatprep.subr.mxu0 0.0
      %885 = vmatpush1.msra.mxu0 0.0
      %886 = vmatprep.subr.mxu0 0.0
      %887 = vmatpush1.msra.mxu0 0.0
      %888 = vmatprep.subr.mxu0 0.0
      %889 = vmatpush1.msra.mxu0 0.0
      %890 = vmatprep.subr.mxu0 0.0
      %891 = vmatpush1.msra.mxu0 0.0
      %892 = vmatprep.subr.mxu0 0.0
      %893 = vmatpush1.msra.mxu0 0.0
      %894 = vmatprep.subr.mxu0 0.0
      %895 = vmatpush1.msra.mxu0 0.0
      %896 = vmatprep.mubr.f32.mxu0 0.0
      %897 = vmatmul.mubr.f32.gmra.mrb[0].mxu0 %v785
      %v898 = vpop.f32.mrb[0].mxu0
      %v899 = vadd.f32 0.0, %v898
      %v900 = vpop.f32.mrb[0].mxu0
      %901 = vmatprep.mubr.f32.mxu0 0.0
      %902 = vmatmul.mubr.f32.gmra.mrb[0].mxu0 %v788
      %v903 = vpop.f32.mrb[0].mxu0
      %v904 = vadd.f32 0.0, %v903
      %v905 = vpop.f32.mrb[0].mxu0
      %906 = vmatprep.mubr.f32.mxu0 0.0
      %907 = vmatmul.mubr.f32.gmra.mrb[0].mxu0 %v791
      %v908 = vpop.f32.mrb[0].mxu0
      %v909 = vadd.f32 0.0, %v908
      %v910 = vpop.f32.mrb[0].mxu0
      %911 = vmatprep.mubr.f32.mxu0 0.0
      %912 = vmatmul.mubr.f32.gmra.mrb[0].mxu0 %v794
      %v913 = vpop.f32.mrb[0].mxu0
      %v914 = vadd.f32 0.0, %v913
      %v915 = vpop.f32.mrb[0].mxu0
      %916 = vmatprep.mubr.f32.mxu0 0.0
      %917 = vmatmul.mubr.f32.gmra.mrb[0].mxu0 %v797
      %v918 = vpop.f32.mrb[0].mxu0
      %v919 = vadd.f32 0.0, %v918
      %v920 = vpop.f32.mrb[0].mxu0
      %921 = vmatprep.mubr.f32.mxu0 0.0
      %922 = vmatmul.mubr.f32.gmra.mrb[0].mxu0 %v800
      %v923 = vpop.f32.mrb[0].mxu0
      %v924 = vadd.f32 0.0, %v923
      %v925 = vpop.f32.mrb[0].mxu0
      %926 = vmatprep.mubr.f32.mxu0 0.0
      %927 = vmatmul.mubr.f32.gmra.mrb[0].mxu0 %v803
      %v928 = vpop.f32.mrb[0].mxu0
      %v929 = vadd.f32 0.0, %v928
      %v930 = vpop.f32.mrb[0].mxu0
      %931 = vmatprep.mubr.f32.mxu0 0.0
      %932 = vmatmul.mubr.f32.gmra.mrb[0].mxu0 %v806
      %v933 = vpop.f32.mrb[0].mxu0
      %v934 = vadd.f32 0.0, %v933
      %v935 = vpop.f32.mrb[0].mxu0
      %936 = vmatprep.mubr.f32.mxu0 0.0
      %937 = vmatmul.mubr.f32.gmra.mrb[0].mxu0 %v809
      %v938 = vpop.f32.mrb[0].mxu0
      %v939 = vadd.f32 0.0, %v938
      %v940 = vpop.f32.mrb[0].mxu0
      %941 = vmatprep.mubr.f32.mxu0 0.0
      %942 = vmatmul.mubr.f32.gmra.mrb[0].mxu0 %v812
      %v943 = vpop.f32.mrb[0].mxu0
      %v944 = vadd.f32 0.0, %v943
      %v945 = vpop.f32.mrb[0].mxu0
      %946 = vmatprep.mubr.f32.mxu0 0.0
      %947 = vmatmul.mubr.f32.gmra.mrb[0].mxu0 %v815
      %v948 = vpop.f32.mrb[0].mxu0
      %v949 = vadd.f32 0.0, %v948
      %v950 = vpop.f32.mrb[0].mxu0
      %951 = vmatprep.mubr.f32.mxu0 0.0
      %952 = vmatmul.mubr.f32.gmra.mrb[0].mxu0 %v818
      %v953 = vpop.f32.mrb[0].mxu0
      %v954 = vadd.f32 0.0, %v953
      %v955 = vpop.f32.mrb[0].mxu0
      %956 = vmatprep.mubr.f32.mxu0 0.0
      %957 = vmatmul.mubr.f32.gmra.mrb[0].mxu0 %v821
      %v958 = vpop.f32.mrb[0].mxu0
      %v959 = vadd.f32 0.0, %v958
      %v960 = vpop.f32.mrb[0].mxu0
      %961 = vmatprep.mubr.f32.mxu0 0.0
      %962 = vmatmul.mubr.f32.gmra.mrb[0].mxu0 %v824
      %v963 = vpop.f32.mrb[0].mxu0
      %v964 = vadd.f32 0.0, %v963
      %v965 = vpop.f32.mrb[0].mxu0
      %966 = vmatprep.mubr.f32.mxu0 0.0
      %967 = vmatmul.mubr.f32.gmra.mrb[0].mxu0 %v827
      %v968 = vpop.f32.mrb[0].mxu0
      %v969 = vadd.f32 0.0, %v968
      %v970 = vpop.f32.mrb[0].mxu0
      %971 = vmatprep.mubr.f32.mxu0 0.0
      %972 = vmatmul.mubr.f32.gmra.mrb[0].mxu0 %v830
      %v973 = vpop.f32.mrb[0].mxu0
      %v974 = vadd.f32 0.0, %v973
      %v975 = vpop.f32.mrb[0].mxu0
      %976 = vdwg.mxu0
      %977 = vmatprep.subr.mxu0 0.0
      %978 = vmatpush1.msra.mxu0 %v899
      %979 = vmatprep.subr.mxu0 0.0
      %980 = vmatpush1.msra.mxu0 %v904
      %981 = vmatprep.subr.mxu0 0.0
      %982 = vmatpush1.msra.mxu0 %v909
      %983 = vmatprep.subr.mxu0 0.0
      %984 = vmatpush1.msra.mxu0 %v914
      %985 = vmatprep.subr.mxu0 0.0
      %986 = vmatpush1.msra.mxu0 %v919
      %987 = vmatprep.subr.mxu0 0.0
      %988 = vmatpush1.msra.mxu0 %v924
      %989 = vmatprep.subr.mxu0 0.0
      %990 = vmatpush1.msra.mxu0 %v929
      %991 = vmatprep.subr.mxu0 0.0
      %992 = vmatpush1.msra.mxu0 %v934
      %993 = vmatprep.subr.mxu0 0.0
      %994 = vmatpush1.msra.mxu0 %v939
      %995 = vmatprep.subr.mxu0 0.0
      %996 = vmatpush1.msra.mxu0 %v944
      %997 = vmatprep.subr.mxu0 0.0
      %998 = vmatpush1.msra.mxu0 %v949
      %999 = vmatprep.subr.mxu0 0.0
      %1000 = vmatpush1.msra.mxu0 %v954
      %1001 = vmatprep.subr.mxu0 0.0
      %1002 = vmatpush1.msra.mxu0 %v959
      %1003 = vmatprep.subr.mxu0 0.0
      %1004 = vmatpush1.msra.mxu0 %v964
      %1005 = vmatprep.subr.mxu0 0.0
      %1006 = vmatpush1.msra.mxu0 %v969
      %1007 = vmatprep.subr.mxu0 0.0
      %1008 = vmatpush1.msra.mxu0 %v974
      %1009 = vmatprep.subr.mxu0 0.0
      %1010 = vmatpush1.msra.mxu0 0.0
      %1011 = vmatprep.subr.mxu0 0.0
      %1012 = vmatpush1.msra.mxu0 0.0
      %1013 = vmatprep.subr.mxu0 0.0
      %1014 = vmatpush1.msra.mxu0 0.0
      %1015 = vmatprep.subr.mxu0 0.0
      %1016 = vmatpush1.msra.mxu0 0.0
      %1017 = vmatprep.subr.mxu0 0.0
      %1018 = vmatpush1.msra.mxu0 0.0
      %1019 = vmatprep.subr.mxu0 0.0
      %1020 = vmatpush1.msra.mxu0 0.0
      %1021 = vmatprep.subr.mxu0 0.0
      %1022 = vmatpush1.msra.mxu0 0.0
      %1023 = vmatprep.subr.mxu0 0.0
      %1024 = vmatpush1.msra.mxu0 0.0
      %1025 = vmatprep.subr.mxu0 0.0
      %1026 = vmatpush1.msra.mxu0 0.0
      %1027 = vmatprep.subr.mxu0 0.0
      %1028 = vmatpush1.msra.mxu0 0.0
      %1029 = vmatprep.subr.mxu0 0.0
      %1030 = vmatpush1.msra.mxu0 0.0
      %1031 = vmatprep.subr.mxu0 0.0
      %1032 = vmatpush1.msra.mxu0 0.0
      %1033 = vmatprep.subr.mxu0 0.0
      %1034 = vmatpush1.msra.mxu0 0.0
      %1035 = vmatprep.subr.mxu0 0.0
      %1036 = vmatpush1.msra.mxu0 0.0
      %1037 = vmatprep.subr.mxu0 0.0
      %1038 = vmatpush1.msra.mxu0 0.0
      %1039 = vmatprep.subr.mxu0 0.0
      %1040 = vmatpush1.msra.mxu0 0.0
      %1041 = vmatprep.mubr.f32.mxu0 0.0
      %1042 = vmatmul.mubr.f32.gmra.mrb[0].mxu0 %v605
      %v1043 = vpop.f32.mrb[0].mxu0
      %v1044 = vadd.f32 0.0, %v1043
      %v1045 = vpop.f32.mrb[0].mxu0
      %1046 = vmatprep.mubr.f32.mxu0 0.0
      %1047 = vmatmul.mubr.f32.gmra.mrb[0].mxu0 %v606
      %v1048 = vpop.f32.mrb[0].mxu0
      %v1049 = vadd.f32 0.0, %v1048
      %v1050 = vpop.f32.mrb[0].mxu0
      %1051 = vmatprep.mubr.f32.mxu0 0.0
      %1052 = vmatmul.mubr.f32.gmra.mrb[0].mxu0 %v607
      %v1053 = vpop.f32.mrb[0].mxu0
      %v1054 = vadd.f32 0.0, %v1053
      %v1055 = vpop.f32.mrb[0].mxu0
      %1056 = vmatprep.mubr.f32.mxu0 0.0
      %1057 = vmatmul.mubr.f32.gmra.mrb[0].mxu0 %v608
      %v1058 = vpop.f32.mrb[0].mxu0
      %v1059 = vadd.f32 0.0, %v1058
      %v1060 = vpop.f32.mrb[0].mxu0
      %1061 = vdwg.mxu0
      %v1062 = vmul.f32 %v1044, %v748
      %v1063 = vmul.f32 %v1049, %v749
      %v1064 = vmul.f32 %v1054, %v750
      %v1065 = vmul.f32 %v1059, %v751
      %1066 = vst.msk [vmem:[%s341] sm:$0xff] %vm361, %v1062
      %1067 = vst.msk [vmem:[%s341 + $0x8] sm:$0xff] %vm361, %v1063
      %1068 = vst.msk [vmem:[%s341 + $0x10] sm:$0xff] %vm361, %v1064
      %1069 = vst.msk [vmem:[%s341 + $0x18] sm:$0xff] %vm361, %v1065
      %p1070 = scmp.lt.s32.totalorder %s21, 1
      %s1071 = scalar_select %p1070, %s21, 1
      %p1072 = scmp.lt.s32.totalorder %s22, 3
      %s1073 = scalar_select %p1072, %s22, 3
      %s1074 = smul.addr %s1073, 4
      %s1075 = smul.addr %s1071, 16
      %s1076 = sadd.s32 %s1074, %s1075
      %s1077 = smul.addr %s1076, 8
      %s1078 = scalar_lea.vmem %s6, %s1077
      // Predicated region
      $region45: #{attention_forward.10} parent=43 // pred_check
        %p1079 = pneg %p194
      $region46: #{attention_forward.10} parent=43 // pred_check_branch
        %1081 = sbr.rel (%p1079) target = $region48
      $region47: #{attention_forward.10} parent=43 // pred_region
        _
      $region48: #{attention_forward.10} parent=43 // pred_fallthru
        _
    $region44: #{attention_forward.10} parent=5 // pred_fallthru
      _
    %p1082 = scmp.le.s32.totalorder 2, %s12
    // Predicated region
    $region49: #{attention_forward.10} parent=5 // pred_check
      %p1083 = pneg %p1082
    $region50: #{attention_forward.10} parent=5 // pred_check_branch
      %1085 = sbr.rel (%p1083) target = $region52
    $region51: #{attention_forward.10} parent=5 // pred_region
      %s1086 = ssub.s32 %s12, 2
      // Predicated region
      $region53: #{attention_forward.10} parent=51 // pred_check
        %p1087 = pneg %p200
      $region54: #{attention_forward.10} parent=51 // pred_check_branch
        %1089 = sbr.rel (%p1087) target = $region56
      $region55: #{attention_forward.10} parent=51 // pred_region
        %p1090 = scmp.lt.s32.totalorder %s23, 1
        %s1091 = scalar_select %p1090, %s23, 1
        %p1092 = scmp.lt.s32.totalorder %s24, 3
        %s1093 = scalar_select %p1092, %s24, 3
        %s1094 = smul.addr %s1093, 4
        %s1095 = smul.addr %s1091, 16
        %s1096 = sadd.s32 %s1094, %s1095
        %s1097 = smul.addr %s1096, 8
        %s1098 = scalar_lea.vmem %s6, %s1097
      $region56: #{attention_forward.10} parent=51 // pred_fallthru
        _
    $region52: #{attention_forward.10} parent=5 // pred_fallthru
      _
  $region6: #{attention_forward.10} parent=0 // loop_footer
    %s16 = sadd.s32 1, %s12
  $region7: #{attention_forward.10} parent=0 // loop_footer_branch
    %11 = sbr.rel target = $region3
  $region8: #{attention_forward.10} parent=0 // loop_exit
    _

</llo_original>
